<compile_context>
chip_gen: v5e
topology: v5e:2x2
jax: 0.10.0
libtpu: 0.0.40
codegen_flags: <defaults>
</compile_context>

<pallas_src>
import functools

import jax
import jax.numpy as jnp
from jax import lax
from jax.experimental import pallas as pl
from jax.experimental.pallas import tpu as pltpu

NEG_SLOPE = 0.2
BN_EPS = 1e-5
NEG_BIG = -1e30


def _lrelu(v):
    return jnp.where(v > 0, v, NEG_SLOPE * v)


def _round_up(x, m):
    return ((x + m - 1) // m) * m


def _pick_tile(m, target):
    """Largest lane tile <= target that divides m (m must be a multiple of 128).
    Prefers >= 2 grid steps so both v7x TensorCores get work / pipelining kicks in."""
    assert m % 128 == 0
    t = min(max(128, (target // 128) * 128), m)
    while m % t != 0:
        t -= 128
    if t == m and m >= 256 and (m // 2) % 128 == 0:
        t = m // 2
    return t


def _pad_dim(a, axis, size):
    pad = size - a.shape[axis]
    if pad <= 0:
        return a
    widths = [(0, 0)] * a.ndim
    widths[axis] = (0, pad)
    return jnp.pad(a, widths)


# ----------------------------------------------------------------------------
# Kernel 1: 1x1 conv (channel matmul, BN folded into W) + bias + LeakyReLU,
#           tiled over M = B*N.  Output is bf16 (feeds the bf16 gather path).
# ----------------------------------------------------------------------------
def _conv1x1_bn_act_kernel(x_ref, w_ref, b_ref, o_ref):
    y = jnp.dot(w_ref[...], x_ref[...], preferred_element_type=jnp.float32)
    o_ref[...] = _lrelu(y + b_ref[...]).astype(o_ref.dtype)


def conv1x1_bn_act(x_cm, w, b, tile_m):
    cin, m = x_cm.shape
    cout = w.shape[0]
    return pl.pallas_call(
        _conv1x1_bn_act_kernel,
        grid=(m // tile_m,),
        in_specs=[
            pl.BlockSpec((cin, tile_m), lambda i: (0, i)),
            pl.BlockSpec((cout, cin), lambda i: (0, 0)),   # resident weight
            pl.BlockSpec((cout, 1), lambda i: (0, 0)),     # resident bias
        ],
        out_specs=pl.BlockSpec((cout, tile_m), lambda i: (0, i)),
        out_shape=jax.ShapeDtypeStruct((cout, m), jnp.bfloat16),
        compiler_params=pltpu.CompilerParams(dimension_semantics=("parallel",)),
    )(x_cm, w, b)


# ----------------------------------------------------------------------------
# Kernel 2: fused knn.  score[q, j] = 2*x_q.x_j - ||x_j||^2 (the -||x_q||^2 term is
# constant along the neighbour axis so the top-k indices are unchanged).  Row-tiled
# over queries; iterative top-k in-kernel, so neither the (B,N,N) score matrix nor
# an XLA top_k pass ever touches HBM.
# ----------------------------------------------------------------------------
def _knn_topk_kernel(q_ref, a_ref, sq_ref, idx_ref, *, k):
    q = q_ref[0]                                  # (3, TQ) f32, lane axis = queries
    a = a_ref[0]                                  # (3, N)  f32, lane axis = points
    inner = lax.dot_general(q, a, (((0,), (0,)), ((), ())),
                            preferred_element_type=jnp.float32)      # (TQ, N)
    s = 2.0 * inner - sq_ref[0]                                       # (TQ, N)
    n = s.shape[-1]
    ids = lax.broadcasted_iota(jnp.int32, s.shape, 1).astype(jnp.float32)
    kids = lax.broadcasted_iota(jnp.int32, (s.shape[0], k), 1)
    out = jnp.zeros((s.shape[0], k), jnp.int32)
    for j in range(k):                            # k passes of row-max + mask
        m = jnp.max(s, axis=-1, keepdims=True)
        am = jnp.min(jnp.where(s >= m, ids, float(n)), axis=-1, keepdims=True)
        out = jnp.where(kids == j, am.astype(jnp.int32), out)
        s = jnp.where(ids == am, NEG_BIG, s)
    idx_ref[0] = out


def knn_topk(xyz, sq, k, tq):
    B, _, N = xyz.shape
    return pl.pallas_call(
        functools.partial(_knn_topk_kernel, k=k),
        grid=(B, N // tq),
        in_specs=[
            pl.BlockSpec((1, 3, tq), lambda b, i: (b, 0, i)),   # query tile
            pl.BlockSpec((1, 3, N), lambda b, i: (b, 0, 0)),    # all points
            pl.BlockSpec((1, 1, N), lambda b, i: (b, 0, 0)),    # ||x_j||^2
        ],
        out_specs=pl.BlockSpec((1, tq, k), lambda b, i: (b, i, 0)),
        out_shape=jax.ShapeDtypeStruct((B, N, k), jnp.int32),
        compiler_params=pltpu.CompilerParams(
            dimension_semantics=("parallel", "parallel")),
    )(xyz, xyz, sq)


# ----------------------------------------------------------------------------
# Kernel 3: fused LPFA trunk + residual tail, tiled over M = B*N.
# The gathered inputs arrive pre-blocked as (n_tiles, C, k*TM) so every matmul runs
# once over the full k*TM lane extent.  Per tile:
#   base = (Wc - Wd) @ ctr + b_xyz                       (once, not per neighbour)
#   f    = lrelu(fdiff + (Wn + Wd) @ nbr + base)         ~ lrelu(fdiff + Wxyz@pf9 + b)
#   f    = lrelu(W1 @ f + b1) ; f = lrelu(W2 @ f + b2)
#   pooled = mean over k (static 128-aligned lane slices)
#   out  = lrelu(Wc2 @ pooled + bc2  +  Wsc @ x + bsc)
# ----------------------------------------------------------------------------
def _lpfa_fused_kernel(nbr_ref, fdiff_ref, ctr_ref, x_ref,
                       wc_ref, wn_ref, bx_ref,
                       w1_ref, b1_ref, w2_ref, b2_ref,
                       wc2_ref, bc2_ref, wsc_ref, bsc_ref,
                       o_ref, *, k, tile_m):
    nbr = nbr_ref[0]            # (3, k*TM) bf16
    fdiff = fdiff_ref[0]        # (planes, k*TM) bf16

    base = jnp.dot(wc_ref[...], ctr_ref[...],
                   preferred_element_type=jnp.float32) + bx_ref[...]      # (planes, TM)
    base_t = jnp.concatenate([base] * k, axis=-1)                         # (planes, k*TM)
    pf = jnp.dot(wn_ref[...], nbr, preferred_element_type=jnp.float32)    # (planes, k*TM)

    f = _lrelu(fdiff.astype(jnp.float32) + pf + base_t)
    f = _lrelu(jnp.dot(w1_ref[...], f.astype(jnp.bfloat16),
                       preferred_element_type=jnp.float32) + b1_ref[...])
    f = _lrelu(jnp.dot(w2_ref[...], f.astype(jnp.bfloat16),
                       preferred_element_type=jnp.float32) + b2_ref[...])

    # mean over the k neighbours: static 128-aligned lane slices (no relayout).
    acc = f[:, 0:tile_m]
    for j in range(1, k):
        acc = acc + f[:, j * tile_m:(j + 1) * tile_m]
    pooled = (acc * (1.0 / k)).astype(jnp.bfloat16)

    main = jnp.dot(wc2_ref[...], pooled, preferred_element_type=jnp.float32) + bc2_ref[...]
    sc = jnp.dot(wsc_ref[...], x_ref[...], preferred_element_type=jnp.float32) + bsc_ref[...]
    o_ref[...] = _lrelu(main + sc).astype(o_ref.dtype)


def lpfa_fused(nbr_blk, fdiff_blk, ctr, x_cm, params, k, tile_m):
    n_tiles, planes, ktm = fdiff_blk.shape
    cin, m_pad = x_cm.shape
    cout = params['w_conv2'].shape[0]
    const = lambda i: (0, 0)

    # Rough per-step VMEM estimate (double-buffered bf16 inputs + f32 temporaries);
    # set the scoped limit explicitly, capped at 64 MiB so it also fits v7x.
    est = (2 * ((3 + planes) * ktm * 2 + (3 + cin) * tile_m * 2)
           + 2 * cout * tile_m * 4 + 6 * planes * ktm * 4)
    vmem_limit = int(min(64 * 2 ** 20, max(32 * 2 ** 20, 2 * est)))

    return pl.pallas_call(
        functools.partial(_lpfa_fused_kernel, k=k, tile_m=tile_m),
        grid=(n_tiles,),
        in_specs=[
            pl.BlockSpec((1, 3, ktm), lambda i: (i, 0, 0)),        # nbr_xyz (blocked)
            pl.BlockSpec((1, planes, ktm), lambda i: (i, 0, 0)),   # fdiff  (blocked)
            pl.BlockSpec((3, tile_m), lambda i: (0, i)),           # ctr
            pl.BlockSpec((cin, tile_m), lambda i: (0, i)),         # shortcut input
            pl.BlockSpec((planes, 3), const), pl.BlockSpec((planes, 3), const),
            pl.BlockSpec((planes, 1), const),
            pl.BlockSpec((planes, planes), const), pl.BlockSpec((planes, 1), const),
            pl.BlockSpec((planes, planes), const), pl.BlockSpec((planes, 1), const),
            pl.BlockSpec((cout, planes), const), pl.BlockSpec((cout, 1), const),
            pl.BlockSpec((cout, cin), const), pl.BlockSpec((cout, 1), const),
        ],
        out_specs=pl.BlockSpec((cout, tile_m), lambda i: (0, i)),
        out_shape=jax.ShapeDtypeStruct((cout, m_pad), jnp.float32),
        compiler_params=pltpu.CompilerParams(
            dimension_semantics=("parallel",), vmem_limit_bytes=vmem_limit),
    )(nbr_blk, fdiff_blk, ctr, x_cm,
      params['w_xyz_ctr'], params['w_xyz_nbr'], params['b_xyz'],
      params['w_mlp1'], params['b_mlp1'],
      params['w_mlp2'], params['b_mlp2'],
      params['w_conv2'], params['b_conv2'],
      params['w_sc'], params['b_sc'])


# ----------------------------------------------------------------------------
# Deterministic synthetic params; BN scale folded into bf16 conv weights.
# w_xyz is split algebraically: pf9 = [ctr; nbr; nbr-ctr]  =>
#   W_xyz @ pf9 = (Wc - Wd) @ ctr + (Wn + Wd) @ nbr
# ----------------------------------------------------------------------------
def init_params(key, in_channels, out_channels, planes):
    keys = jax.random.split(key, 12)

    def conv_bn(kw, kb, cin, cout):
        w = 0.1 * jax.random.normal(kw, (cout, cin), dtype=jnp.float32)
        b1, b2, b3, b4 = jax.random.split(kb, 4)
        gamma = 1.0 + 0.1 * jax.random.normal(b1, (cout,), dtype=jnp.float32)
        beta = 0.1 * jax.random.normal(b2, (cout,), dtype=jnp.float32)
        mean = 0.1 * jax.random.normal(b3, (cout,), dtype=jnp.float32)
        var = 1.0 + 0.1 * jnp.abs(jax.random.normal(b4, (cout,), dtype=jnp.float32))
        scale = gamma / jnp.sqrt(var + BN_EPS)
        return w * scale[:, None], (beta - mean * scale)[:, None].astype(jnp.float32)

    p = {}
    w, b = conv_bn(keys[0], keys[1], in_channels, planes)
    p['w_conv1'], p['b_conv1'] = w.astype(jnp.bfloat16), b
    wx, bx = conv_bn(keys[2], keys[3], 9, planes)
    p['w_xyz_ctr'] = (wx[:, 0:3] - wx[:, 6:9]).astype(jnp.bfloat16)
    p['w_xyz_nbr'] = (wx[:, 3:6] + wx[:, 6:9]).astype(jnp.bfloat16)
    p['b_xyz'] = bx
    w, b = conv_bn(keys[4], keys[5], planes, planes)
    p['w_mlp1'], p['b_mlp1'] = w.astype(jnp.bfloat16), b
    w, b = conv_bn(keys[6], keys[7], planes, planes)
    p['w_mlp2'], p['b_mlp2'] = w.astype(jnp.bfloat16), b
    w, b = conv_bn(keys[8], keys[9], planes, out_channels)
    p['w_conv2'], p['b_conv2'] = w.astype(jnp.bfloat16), b
    w, b = conv_bn(keys[10], keys[11], in_channels, out_channels)
    p['w_sc'], p['b_sc'] = w.astype(jnp.bfloat16), b
    return p


# ----------------------------------------------------------------------------
# CIC forward (curve_config=None, N == npoint)
# ----------------------------------------------------------------------------
def cic_forward(xyz, x, params, k, tile_m=256):
    # TODO(synk): curve branch (CurveGrouping/CurveAggregation/Walk) skipped — Walk is
    # undefined in the reference and curve_config=None is a valid CIC configuration.
    # TODO(synk): MaskedMaxPool/sample_and_group skipped — input satisfies N == npoint.
    B, Cin, N = x.shape
    planes = params['w_conv1'].shape[0]
    Cout = params['w_conv2'].shape[0]
    M = B * N
    M_pad = _round_up(M, 128)
    TM = _pick_tile(M_pad, tile_m)          # LPFA lane tile (k*TM lanes per matmul)
    TC1 = _pick_tile(M_pad, 2048)           # conv1: pure mem-bound, use a bigger tile
    n_tiles = M_pad // TM

    # knn: fused score + iterative top-k, lane axis = N (no (B,N,N) matrix in HBM).
    sq = jnp.sum(xyz * xyz, axis=1, keepdims=True)                  # (B, 1, N)
    TQ = _pick_tile(N, 256) if N % 128 == 0 else N
    idx = knn_topk(xyz, sq, k, TQ)                                  # (B, N, k) int32

    # conv1: 1x1 conv + BN + LeakyReLU (tiled Pallas, bf16 in/out).
    x_cm = jnp.reshape(jnp.transpose(x, (1, 0, 2)), (Cin, M)).astype(jnp.bfloat16)
    h = conv1x1_bn_act(_pad_dim(x_cm, 1, M_pad),
                       params['w_conv1'], params['b_conv1'], TC1)[:, :M]    # (planes, M)

    # group_feature glue: data-dependent gathers stay in XLA (bf16 end-to-end).
    # TODO(synk): fusing this gather into the LPFA kernel (scalar-prefetched idx +
    # manual DMA from a row-major (M, planes) copy of h) would remove the HBM
    # round-trip of fdiff; kept in XLA glue here.
    h3 = jnp.reshape(h, (planes, B, N))
    nbr_h = jax.vmap(lambda hb, ib: hb[:, ib], in_axes=(1, 0), out_axes=1)(h3, idx)
    fdiff = (nbr_h - h3[..., None]).reshape(planes, M, k)                   # bf16

    nbr_xyz = jax.vmap(lambda xb, ib: xb[:, ib], in_axes=(0, 0), out_axes=1)(xyz, idx)
    nbr_xyz = nbr_xyz.reshape(3, M, k).astype(jnp.bfloat16)
    ctr = jnp.transpose(xyz, (1, 0, 2)).reshape(3, M).astype(jnp.bfloat16)

    # Pre-block to (n_tiles, C, k*TM) with (neighbour, point) lane order so the LPFA
    # kernel sees one lane-dense slab per tile (single MXU stream over all k).
    def to_blocked(a_cmk):
        c = a_cmk.shape[0]
        a = _pad_dim(a_cmk, 1, M_pad).reshape(c, n_tiles, TM, k)
        return jnp.transpose(a, (1, 0, 3, 2)).reshape(n_tiles, c, k * TM)

    fdiff_blk = to_blocked(fdiff)
    nbr_blk = to_blocked(nbr_xyz)

    out_cm = lpfa_fused(nbr_blk, fdiff_blk,
                        _pad_dim(ctr, 1, M_pad), _pad_dim(x_cm, 1, M_pad),
                        params, k, TM)[:, :M]                               # (Cout, M)

    out = jnp.transpose(jnp.reshape(out_cm, (Cout, B, N)), (1, 0, 2))       # (B, Cout, N)
    return xyz, out


if __name__ == "__main__":
    B, N, K = 2, 256, 8
    in_channels, out_channels, bottleneck = 16, 32, 2
    planes = in_channels // bottleneck

    key = jax.random.PRNGKey(0)
    k_xyz, k_x, k_p = jax.random.split(key, 3)
    xyz = jax.random.normal(k_xyz, (B, 3, N), dtype=jnp.float32)
    x = jax.random.normal(k_x, (B, in_channels, N), dtype=jnp.float32)
    params = init_params(k_p, in_channels, out_channels, planes)

    # tile_m=128 at this small size so the M grid has several tiles (exercises the
    # pipelined path); default is 256 for realistic point counts.
    fwd = jax.jit(functools.partial(cic_forward, k=K, tile_m=128))
    xyz_out, y = fwd(xyz, x, params)
    jax.block_until_ready(y)
    assert xyz_out.shape == (B, 3, N)
    assert y.shape == (B, out_channels, N)
    assert bool(jnp.all(jnp.isfinite(y)))
    print("KERNEL_OK")
</pallas_src>

<mosaic_0001>
module attributes {stable_mosaic.version = 11 : i64} {
  func.func @_knn_topk_kernel(%arg0: i32, %arg1: i32, %arg2: memref<1x3x128xf32, #tpu.memory_space<vmem>>, %arg3: memref<1x3x256xf32, #tpu.memory_space<vmem>>, %arg4: memref<1x1x256xf32, #tpu.memory_space<vmem>>, %arg5: memref<1x128x8xi32, #tpu.memory_space<vmem>>) attributes {dimension_semantics = [#tpu.dimension_semantics<parallel>, #tpu.dimension_semantics<parallel>], iteration_bounds = array<i64: 2, 2>, scalar_prefetch = 0 : i64, scratch_operands = 0 : i64, tpu.core_type = #tpu.core_type<tc>, window_params = [{transform_indices = @transform_0, window_bounds = array<i64: 1, 3, 128>}, {transform_indices = @transform_1, window_bounds = array<i64: 1, 3, 256>}, {transform_indices = @transform_2, window_bounds = array<i64: 1, 1, 256>}, {transform_indices = @transform_3, window_bounds = array<i64: 1, 128, 8>}]} {
    %c0 = arith.constant 0 : index
    %c0_0 = arith.constant 0 : index
    %c0_1 = arith.constant 0 : index
    %0 = vector.load %arg2[%c0, %c0_0, %c0_1] : memref<1x3x128xf32, #tpu.memory_space<vmem>>, vector<1x3x128xf32>
    %1 = vector.shape_cast %0 : vector<1x3x128xf32> to vector<3x128xf32>
    %c0_2 = arith.constant 0 : index
    %c0_3 = arith.constant 0 : index
    %c0_4 = arith.constant 0 : index
    %2 = vector.load %arg3[%c0_2, %c0_3, %c0_4] : memref<1x3x256xf32, #tpu.memory_space<vmem>>, vector<1x3x256xf32>
    %3 = vector.shape_cast %2 : vector<1x3x256xf32> to vector<3x256xf32>
    %cst = arith.constant dense<0.000000e+00> : vector<128x256xf32>
    %4 = tpu.matmul %1, %3, %cst {dimension_numbers = #tpu.dot_dimension_numbers<[0], [0], [1], [1], [0, 1, 1, 1], [], []>} : vector<3x128xf32>, vector<3x256xf32>, vector<128x256xf32> -> vector<128x256xf32>
    %cst_5 = arith.constant 2.000000e+00 : f32
    %5 = vector.broadcast %cst_5 : f32 to vector<128x256xf32>
    %6 = arith.mulf %5, %4 : vector<128x256xf32>
    %c0_6 = arith.constant 0 : index
    %c0_7 = arith.constant 0 : index
    %c0_8 = arith.constant 0 : index
    %7 = vector.load %arg4[%c0_6, %c0_7, %c0_8] : memref<1x1x256xf32, #tpu.memory_space<vmem>>, vector<1x1x256xf32>
    %8 = vector.shape_cast %7 : vector<1x1x256xf32> to vector<1x256xf32>
    %9 = vector.broadcast %8 : vector<1x256xf32> to vector<128x256xf32>
    %10 = arith.subf %6, %9 : vector<128x256xf32>
    %11 = tpu.iota {dimensions = array<i32: 1>} : vector<128x256xi32>
    %12 = arith.sitofp %11 : vector<128x256xi32> to vector<128x256xf32>
    %13 = tpu.iota {dimensions = array<i32: 1>} : vector<128x8xi32>
    %c0_i32 = arith.constant 0 : i32
    %14 = vector.broadcast %c0_i32 : i32 to vector<128x8xi32>
    %cst_9 = arith.constant dense<0xFF800000> : vector<128xf32>
    %15 = vector.multi_reduction <maximumf>, %10, %cst_9 [1] : vector<128x256xf32> to vector<128xf32>
    %16 = vector.shape_cast %15 : vector<128xf32> to vector<128x1xf32>
    %17 = vector.broadcast %16 : vector<128x1xf32> to vector<128x256xf32>
    %18 = arith.cmpf oge, %10, %17 : vector<128x256xf32>
    %cst_10 = arith.constant 2.560000e+02 : f32
    %19 = vector.broadcast %cst_10 : f32 to vector<128x256xf32>
    %20 = arith.select %18, %12, %19 : vector<128x256xi1>, vector<128x256xf32>
    %cst_11 = arith.constant dense<0x7F800000> : vector<128xf32>
    %21 = vector.multi_reduction <minimumf>, %20, %cst_11 [1] : vector<128x256xf32> to vector<128xf32>
    %22 = vector.shape_cast %21 : vector<128xf32> to vector<128x1xf32>
    %c0_i32_12 = arith.constant 0 : i32
    %23 = vector.broadcast %c0_i32_12 : i32 to vector<128x8xi32>
    %24 = arith.cmpi eq, %13, %23 : vector<128x8xi32>
    %25 = arith.fptosi %22 : vector<128x1xf32> to vector<128x1xi32>
    %26 = vector.shape_cast %25 : vector<128x1xi32> to vector<128x1xi32>
    %27 = vector.broadcast %26 : vector<128x1xi32> to vector<128x8xi32>
    %28 = arith.select %24, %27, %14 : vector<128x8xi1>, vector<128x8xi32>
    %29 = vector.broadcast %22 : vector<128x1xf32> to vector<128x256xf32>
    %30 = arith.cmpf oeq, %12, %29 : vector<128x256xf32>
    %cst_13 = arith.constant -1.000000e+30 : f32
    %31 = vector.broadcast %cst_13 : f32 to vector<128x256xf32>
    %32 = arith.select %30, %31, %10 : vector<128x256xi1>, vector<128x256xf32>
    %cst_14 = arith.constant dense<0xFF800000> : vector<128xf32>
    %33 = vector.multi_reduction <maximumf>, %32, %cst_14 [1] : vector<128x256xf32> to vector<128xf32>
    %34 = vector.shape_cast %33 : vector<128xf32> to vector<128x1xf32>
    %35 = vector.broadcast %34 : vector<128x1xf32> to vector<128x256xf32>
    %36 = arith.cmpf oge, %32, %35 : vector<128x256xf32>
    %cst_15 = arith.constant 2.560000e+02 : f32
    %37 = vector.broadcast %cst_15 : f32 to vector<128x256xf32>
    %38 = arith.select %36, %12, %37 : vector<128x256xi1>, vector<128x256xf32>
    %cst_16 = arith.constant dense<0x7F800000> : vector<128xf32>
    %39 = vector.multi_reduction <minimumf>, %38, %cst_16 [1] : vector<128x256xf32> to vector<128xf32>
    %40 = vector.shape_cast %39 : vector<128xf32> to vector<128x1xf32>
    %c1_i32 = arith.constant 1 : i32
    %41 = vector.broadcast %c1_i32 : i32 to vector<128x8xi32>
    %42 = arith.cmpi eq, %13, %41 : vector<128x8xi32>
    %43 = arith.fptosi %40 : vector<128x1xf32> to vector<128x1xi32>
    %44 = vector.shape_cast %43 : vector<128x1xi32> to vector<128x1xi32>
    %45 = vector.broadcast %44 : vector<128x1xi32> to vector<128x8xi32>
    %46 = arith.select %42, %45, %28 : vector<128x8xi1>, vector<128x8xi32>
    %47 = vector.broadcast %40 : vector<128x1xf32> to vector<128x256xf32>
    %48 = arith.cmpf oeq, %12, %47 : vector<128x256xf32>
    %cst_17 = arith.constant -1.000000e+30 : f32
    %49 = vector.broadcast %cst_17 : f32 to vector<128x256xf32>
    %50 = arith.select %48, %49, %32 : vector<128x256xi1>, vector<128x256xf32>
    %cst_18 = arith.constant dense<0xFF800000> : vector<128xf32>
    %51 = vector.multi_reduction <maximumf>, %50, %cst_18 [1] : vector<128x256xf32> to vector<128xf32>
    %52 = vector.shape_cast %51 : vector<128xf32> to vector<128x1xf32>
    %53 = vector.broadcast %52 : vector<128x1xf32> to vector<128x256xf32>
    %54 = arith.cmpf oge, %50, %53 : vector<128x256xf32>
    %cst_19 = arith.constant 2.560000e+02 : f32
    %55 = vector.broadcast %cst_19 : f32 to vector<128x256xf32>
    %56 = arith.select %54, %12, %55 : vector<128x256xi1>, vector<128x256xf32>
    %cst_20 = arith.constant dense<0x7F800000> : vector<128xf32>
    %57 = vector.multi_reduction <minimumf>, %56, %cst_20 [1] : vector<128x256xf32> to vector<128xf32>
    %58 = vector.shape_cast %57 : vector<128xf32> to vector<128x1xf32>
    %c2_i32 = arith.constant 2 : i32
    %59 = vector.broadcast %c2_i32 : i32 to vector<128x8xi32>
    %60 = arith.cmpi eq, %13, %59 : vector<128x8xi32>
    %61 = arith.fptosi %58 : vector<128x1xf32> to vector<128x1xi32>
    %62 = vector.shape_cast %61 : vector<128x1xi32> to vector<128x1xi32>
    %63 = vector.broadcast %62 : vector<128x1xi32> to vector<128x8xi32>
    %64 = arith.select %60, %63, %46 : vector<128x8xi1>, vector<128x8xi32>
    %65 = vector.broadcast %58 : vector<128x1xf32> to vector<128x256xf32>
    %66 = arith.cmpf oeq, %12, %65 : vector<128x256xf32>
    %cst_21 = arith.constant -1.000000e+30 : f32
    %67 = vector.broadcast %cst_21 : f32 to vector<128x256xf32>
    %68 = arith.select %66, %67, %50 : vector<128x256xi1>, vector<128x256xf32>
    %cst_22 = arith.constant dense<0xFF800000> : vector<128xf32>
    %69 = vector.multi_reduction <maximumf>, %68, %cst_22 [1] : vector<128x256xf32> to vector<128xf32>
    %70 = vector.shape_cast %69 : vector<128xf32> to vector<128x1xf32>
    %71 = vector.broadcast %70 : vector<128x1xf32> to vector<128x256xf32>
    %72 = arith.cmpf oge, %68, %71 : vector<128x256xf32>
    %cst_23 = arith.constant 2.560000e+02 : f32
    %73 = vector.broadcast %cst_23 : f32 to vector<128x256xf32>
    %74 = arith.select %72, %12, %73 : vector<128x256xi1>, vector<128x256xf32>
    %cst_24 = arith.constant dense<0x7F800000> : vector<128xf32>
    %75 = vector.multi_reduction <minimumf>, %74, %cst_24 [1] : vector<128x256xf32> to vector<128xf32>
    %76 = vector.shape_cast %75 : vector<128xf32> to vector<128x1xf32>
    %c3_i32 = arith.constant 3 : i32
    %77 = vector.broadcast %c3_i32 : i32 to vector<128x8xi32>
    %78 = arith.cmpi eq, %13, %77 : vector<128x8xi32>
    %79 = arith.fptosi %76 : vector<128x1xf32> to vector<128x1xi32>
    %80 = vector.shape_cast %79 : vector<128x1xi32> to vector<128x1xi32>
    %81 = vector.broadcast %80 : vector<128x1xi32> to vector<128x8xi32>
    %82 = arith.select %78, %81, %64 : vector<128x8xi1>, vector<128x8xi32>
    %83 = vector.broadcast %76 : vector<128x1xf32> to vector<128x256xf32>
    %84 = arith.cmpf oeq, %12, %83 : vector<128x256xf32>
    %cst_25 = arith.constant -1.000000e+30 : f32
    %85 = vector.broadcast %cst_25 : f32 to vector<128x256xf32>
    %86 = arith.select %84, %85, %68 : vector<128x256xi1>, vector<128x256xf32>
    %cst_26 = arith.constant dense<0xFF800000> : vector<128xf32>
    %87 = vector.multi_reduction <maximumf>, %86, %cst_26 [1] : vector<128x256xf32> to vector<128xf32>
    %88 = vector.shape_cast %87 : vector<128xf32> to vector<128x1xf32>
    %89 = vector.broadcast %88 : vector<128x1xf32> to vector<128x256xf32>
    %90 = arith.cmpf oge, %86, %89 : vector<128x256xf32>
    %cst_27 = arith.constant 2.560000e+02 : f32
    %91 = vector.broadcast %cst_27 : f32 to vector<128x256xf32>
    %92 = arith.select %90, %12, %91 : vector<128x256xi1>, vector<128x256xf32>
    %cst_28 = arith.constant dense<0x7F800000> : vector<128xf32>
    %93 = vector.multi_reduction <minimumf>, %92, %cst_28 [1] : vector<128x256xf32> to vector<128xf32>
    %94 = vector.shape_cast %93 : vector<128xf32> to vector<128x1xf32>
    %c4_i32 = arith.constant 4 : i32
    %95 = vector.broadcast %c4_i32 : i32 to vector<128x8xi32>
    %96 = arith.cmpi eq, %13, %95 : vector<128x8xi32>
    %97 = arith.fptosi %94 : vector<128x1xf32> to vector<128x1xi32>
    %98 = vector.shape_cast %97 : vector<128x1xi32> to vector<128x1xi32>
    %99 = vector.broadcast %98 : vector<128x1xi32> to vector<128x8xi32>
    %100 = arith.select %96, %99, %82 : vector<128x8xi1>, vector<128x8xi32>
    %101 = vector.broadcast %94 : vector<128x1xf32> to vector<128x256xf32>
    %102 = arith.cmpf oeq, %12, %101 : vector<128x256xf32>
    %cst_29 = arith.constant -1.000000e+30 : f32
    %103 = vector.broadcast %cst_29 : f32 to vector<128x256xf32>
    %104 = arith.select %102, %103, %86 : vector<128x256xi1>, vector<128x256xf32>
    %cst_30 = arith.constant dense<0xFF800000> : vector<128xf32>
    %105 = vector.multi_reduction <maximumf>, %104, %cst_30 [1] : vector<128x256xf32> to vector<128xf32>
    %106 = vector.shape_cast %105 : vector<128xf32> to vector<128x1xf32>
    %107 = vector.broadcast %106 : vector<128x1xf32> to vector<128x256xf32>
    %108 = arith.cmpf oge, %104, %107 : vector<128x256xf32>
    %cst_31 = arith.constant 2.560000e+02 : f32
    %109 = vector.broadcast %cst_31 : f32 to vector<128x256xf32>
    %110 = arith.select %108, %12, %109 : vector<128x256xi1>, vector<128x256xf32>
    %cst_32 = arith.constant dense<0x7F800000> : vector<128xf32>
    %111 = vector.multi_reduction <minimumf>, %110, %cst_32 [1] : vector<128x256xf32> to vector<128xf32>
    %112 = vector.shape_cast %111 : vector<128xf32> to vector<128x1xf32>
    %c5_i32 = arith.constant 5 : i32
    %113 = vector.broadcast %c5_i32 : i32 to vector<128x8xi32>
    %114 = arith.cmpi eq, %13, %113 : vector<128x8xi32>
    %115 = arith.fptosi %112 : vector<128x1xf32> to vector<128x1xi32>
    %116 = vector.shape_cast %115 : vector<128x1xi32> to vector<128x1xi32>
    %117 = vector.broadcast %116 : vector<128x1xi32> to vector<128x8xi32>
    %118 = arith.select %114, %117, %100 : vector<128x8xi1>, vector<128x8xi32>
    %119 = vector.broadcast %112 : vector<128x1xf32> to vector<128x256xf32>
    %120 = arith.cmpf oeq, %12, %119 : vector<128x256xf32>
    %cst_33 = arith.constant -1.000000e+30 : f32
    %121 = vector.broadcast %cst_33 : f32 to vector<128x256xf32>
    %122 = arith.select %120, %121, %104 : vector<128x256xi1>, vector<128x256xf32>
    %cst_34 = arith.constant dense<0xFF800000> : vector<128xf32>
    %123 = vector.multi_reduction <maximumf>, %122, %cst_34 [1] : vector<128x256xf32> to vector<128xf32>
    %124 = vector.shape_cast %123 : vector<128xf32> to vector<128x1xf32>
    %125 = vector.broadcast %124 : vector<128x1xf32> to vector<128x256xf32>
    %126 = arith.cmpf oge, %122, %125 : vector<128x256xf32>
    %cst_35 = arith.constant 2.560000e+02 : f32
    %127 = vector.broadcast %cst_35 : f32 to vector<128x256xf32>
    %128 = arith.select %126, %12, %127 : vector<128x256xi1>, vector<128x256xf32>
    %cst_36 = arith.constant dense<0x7F800000> : vector<128xf32>
    %129 = vector.multi_reduction <minimumf>, %128, %cst_36 [1] : vector<128x256xf32> to vector<128xf32>
    %130 = vector.shape_cast %129 : vector<128xf32> to vector<128x1xf32>
    %c6_i32 = arith.constant 6 : i32
    %131 = vector.broadcast %c6_i32 : i32 to vector<128x8xi32>
    %132 = arith.cmpi eq, %13, %131 : vector<128x8xi32>
    %133 = arith.fptosi %130 : vector<128x1xf32> to vector<128x1xi32>
    %134 = vector.shape_cast %133 : vector<128x1xi32> to vector<128x1xi32>
    %135 = vector.broadcast %134 : vector<128x1xi32> to vector<128x8xi32>
    %136 = arith.select %132, %135, %118 : vector<128x8xi1>, vector<128x8xi32>
    %137 = vector.broadcast %130 : vector<128x1xf32> to vector<128x256xf32>
    %138 = arith.cmpf oeq, %12, %137 : vector<128x256xf32>
    %cst_37 = arith.constant -1.000000e+30 : f32
    %139 = vector.broadcast %cst_37 : f32 to vector<128x256xf32>
    %140 = arith.select %138, %139, %122 : vector<128x256xi1>, vector<128x256xf32>
    %cst_38 = arith.constant dense<0xFF800000> : vector<128xf32>
    %141 = vector.multi_reduction <maximumf>, %140, %cst_38 [1] : vector<128x256xf32> to vector<128xf32>
    %142 = vector.shape_cast %141 : vector<128xf32> to vector<128x1xf32>
    %143 = vector.broadcast %142 : vector<128x1xf32> to vector<128x256xf32>
    %144 = arith.cmpf oge, %140, %143 : vector<128x256xf32>
    %cst_39 = arith.constant 2.560000e+02 : f32
    %145 = vector.broadcast %cst_39 : f32 to vector<128x256xf32>
    %146 = arith.select %144, %12, %145 : vector<128x256xi1>, vector<128x256xf32>
    %cst_40 = arith.constant dense<0x7F800000> : vector<128xf32>
    %147 = vector.multi_reduction <minimumf>, %146, %cst_40 [1] : vector<128x256xf32> to vector<128xf32>
    %148 = vector.shape_cast %147 : vector<128xf32> to vector<128x1xf32>
    %c7_i32 = arith.constant 7 : i32
    %149 = vector.broadcast %c7_i32 : i32 to vector<128x8xi32>
    %150 = arith.cmpi eq, %13, %149 : vector<128x8xi32>
    %151 = arith.fptosi %148 : vector<128x1xf32> to vector<128x1xi32>
    %152 = vector.shape_cast %151 : vector<128x1xi32> to vector<128x1xi32>
    %153 = vector.broadcast %152 : vector<128x1xi32> to vector<128x8xi32>
    %154 = arith.select %150, %153, %136 : vector<128x8xi1>, vector<128x8xi32>
    %c0_41 = arith.constant 0 : index
    %c0_42 = arith.constant 0 : index
    %c0_43 = arith.constant 0 : index
    %155 = vector.load %arg5[%c0_41, %c0_42, %c0_43] : memref<1x128x8xi32, #tpu.memory_space<vmem>>, vector<1x128x8xi32>
    %156 = vector.shape_cast %155 : vector<1x128x8xi32> to vector<128x8xi32>
    %157 = vector.shape_cast %154 : vector<128x8xi32> to vector<1x128x8xi32>
    tpu.vector_store %arg5[%c0_41, %c0_42, %c0_43], %157 {strides = array<i32>} : memref<1x128x8xi32, #tpu.memory_space<vmem>>, vector<1x128x8xi32>,
    return
  }
  func.func @transform_0(%arg0: i32, %arg1: i32) -> (i32, i32, i32) {
    %c0_i32 = arith.constant 0 : i32
    %c0_i32_0 = arith.constant 0 : i32
    return %arg0, %c0_i32, %arg1 : i32, i32, i32
  }
  func.func @transform_1(%arg0: i32, %arg1: i32) -> (i32, i32, i32) {
    %c0_i32 = arith.constant 0 : i32
    %c0_i32_0 = arith.constant 0 : i32
    %c0_i32_1 = arith.constant 0 : i32
    return %arg0, %c0_i32, %c0_i32_0 : i32, i32, i32
  }
  func.func @transform_2(%arg0: i32, %arg1: i32) -> (i32, i32, i32) {
    %c0_i32 = arith.constant 0 : i32
    %c0_i32_0 = arith.constant 0 : i32
    %c0_i32_1 = arith.constant 0 : i32
    return %arg0, %c0_i32, %c0_i32_0 : i32, i32, i32
  }
  func.func @transform_3(%arg0: i32, %arg1: i32) -> (i32, i32, i32) {
    %c0_i32 = arith.constant 0 : i32
    %c0_i32_0 = arith.constant 0 : i32
    return %arg0, %arg1, %c0_i32 : i32, i32, i32
  }
}

module attributes {stable_mosaic.version = 11 : i64} {
  func.func @_conv1x1_bn_act_kernel(%arg0: i32, %arg1: memref<16x256xbf16, #tpu.memory_space<vmem>>, %arg2: memref<8x16xbf16, #tpu.memory_space<vmem>>, %arg3: memref<8x1xf32, #tpu.memory_space<vmem>>, %arg4: memref<8x256xbf16, #tpu.memory_space<vmem>>) attributes {dimension_semantics = [#tpu.dimension_semantics<parallel>], iteration_bounds = array<i64: 2>, scalar_prefetch = 0 : i64, scratch_operands = 0 : i64, tpu.core_type = #tpu.core_type<tc>, window_params = [{transform_indices = @transform_0, window_bounds = array<i64: 16, 256>}, {pipeline_mode = #tpu.pipeline_mode<synchronous>, transform_indices = @transform_1, window_bounds = array<i64: 8, 16>}, {pipeline_mode = #tpu.pipeline_mode<synchronous>, transform_indices = @transform_2, window_bounds = array<i64: 8, 1>}, {transform_indices = @transform_3, window_bounds = array<i64: 8, 256>}]} {
    %c0 = arith.constant 0 : index
    %c0_0 = arith.constant 0 : index
    %0 = vector.load %arg2[%c0, %c0_0] : memref<8x16xbf16, #tpu.memory_space<vmem>>, vector<8x16xbf16>
    %c0_1 = arith.constant 0 : index
    %c0_2 = arith.constant 0 : index
    %1 = vector.load %arg1[%c0_1, %c0_2] : memref<16x256xbf16, #tpu.memory_space<vmem>>, vector<16x256xbf16>
    %cst = arith.constant dense<0.000000e+00> : vector<8x256xf32>
    %2 = tpu.matmul %0, %1, %cst {dimension_numbers = #tpu.dot_dimension_numbers<[1], [0], [0], [1], [0, 0, 1, 1], [], []>} : vector<8x16xbf16>, vector<16x256xbf16>, vector<8x256xf32> -> vector<8x256xf32>
    %c0_3 = arith.constant 0 : index
    %c0_4 = arith.constant 0 : index
    %3 = vector.load %arg3[%c0_3, %c0_4] : memref<8x1xf32, #tpu.memory_space<vmem>>, vector<8x1xf32>
    %4 = vector.broadcast %3 : vector<8x1xf32> to vector<8x256xf32>
    %5 = arith.addf %2, %4 : vector<8x256xf32>
    %cst_5 = arith.constant 0.000000e+00 : f32
    %6 = vector.broadcast %cst_5 : f32 to vector<8x256xf32>
    %7 = arith.cmpf ogt, %5, %6 : vector<8x256xf32>
    %cst_6 = arith.constant 2.000000e-01 : f32
    %8 = vector.broadcast %cst_6 : f32 to vector<8x256xf32>
    %9 = arith.mulf %8, %5 : vector<8x256xf32>
    %10 = arith.select %7, %5, %9 : vector<8x256xi1>, vector<8x256xf32>
    %11 = arith.truncf %10 : vector<8x256xf32> to vector<8x256xbf16>
    %c0_7 = arith.constant 0 : index
    %c0_8 = arith.constant 0 : index
    %12 = vector.load %arg4[%c0_7, %c0_8] : memref<8x256xbf16, #tpu.memory_space<vmem>>, vector<8x256xbf16>
    tpu.vector_store %arg4[%c0_7, %c0_8], %11 {strides = array<i32>} : memref<8x256xbf16, #tpu.memory_space<vmem>>, vector<8x256xbf16>,
    return
  }
  func.func @transform_0(%arg0: i32) -> (i32, i32) {
    %c0_i32 = arith.constant 0 : i32
    %c0_i32_0 = arith.constant 0 : i32
    return %c0_i32, %arg0 : i32, i32
  }
  func.func @transform_1(%arg0: i32) -> (i32, i32) {
    %c0_i32 = arith.constant 0 : i32
    %c0_i32_0 = arith.constant 0 : i32
    %c0_i32_1 = arith.constant 0 : i32
    return %c0_i32, %c0_i32_0 : i32, i32
  }
  func.func @transform_2(%arg0: i32) -> (i32, i32) {
    %c0_i32 = arith.constant 0 : i32
    %c0_i32_0 = arith.constant 0 : i32
    %c0_i32_1 = arith.constant 0 : i32
    return %c0_i32, %c0_i32_0 : i32, i32
  }
  func.func @transform_3(%arg0: i32) -> (i32, i32) {
    %c0_i32 = arith.constant 0 : i32
    %c0_i32_0 = arith.constant 0 : i32
    return %c0_i32, %arg0 : i32, i32
  }
}

module attributes {stable_mosaic.version = 11 : i64} {
  func.func @_lpfa_fused_kernel(%arg0: i32, %arg1: memref<1x3x1024xbf16, #tpu.memory_space<vmem>>, %arg2: memref<1x8x1024xbf16, #tpu.memory_space<vmem>>, %arg3: memref<3x128xbf16, #tpu.memory_space<vmem>>, %arg4: memref<16x128xbf16, #tpu.memory_space<vmem>>, %arg5: memref<8x3xbf16, #tpu.memory_space<vmem>>, %arg6: memref<8x3xbf16, #tpu.memory_space<vmem>>, %arg7: memref<8x1xf32, #tpu.memory_space<vmem>>, %arg8: memref<8x8xbf16, #tpu.memory_space<vmem>>, %arg9: memref<8x1xf32, #tpu.memory_space<vmem>>, %arg10: memref<8x8xbf16, #tpu.memory_space<vmem>>, %arg11: memref<8x1xf32, #tpu.memory_space<vmem>>, %arg12: memref<32x8xbf16, #tpu.memory_space<vmem>>, %arg13: memref<32x1xf32, #tpu.memory_space<vmem>>, %arg14: memref<32x16xbf16, #tpu.memory_space<vmem>>, %arg15: memref<32x1xf32, #tpu.memory_space<vmem>>, %arg16: memref<32x128xf32, #tpu.memory_space<vmem>>) attributes {dimension_semantics = [#tpu.dimension_semantics<parallel>], iteration_bounds = array<i64: 4>, scalar_prefetch = 0 : i64, scratch_operands = 0 : i64, tpu.core_type = #tpu.core_type<tc>, window_params = [{transform_indices = @transform_0, window_bounds = array<i64: 1, 3, 1024>}, {transform_indices = @transform_1, window_bounds = array<i64: 1, 8, 1024>}, {transform_indices = @transform_2, window_bounds = array<i64: 3, 128>}, {transform_indices = @transform_3, window_bounds = array<i64: 16, 128>}, {pipeline_mode = #tpu.pipeline_mode<synchronous>, transform_indices = @transform_4, window_bounds = array<i64: 8, 3>}, {pipeline_mode = #tpu.pipeline_mode<synchronous>, transform_indices = @transform_5, window_bounds = array<i64: 8, 3>}, {pipeline_mode = #tpu.pipeline_mode<synchronous>, transform_indices = @transform_6, window_bounds = array<i64: 8, 1>}, {pipeline_mode = #tpu.pipeline_mode<synchronous>, transform_indices = @transform_7, window_bounds = array<i64: 8, 8>}, {pipeline_mode = #tpu.pipeline_mode<synchronous>, transform_indices = @transform_8, window_bounds = array<i64: 8, 1>}, {pipeline_mode = #tpu.pipeline_mode<synchronous>, transform_indices = @transform_9, window_bounds = array<i64: 8, 8>}, {pipeline_mode = #tpu.pipeline_mode<synchronous>, transform_indices = @transform_10, window_bounds = array<i64: 8, 1>}, {pipeline_mode = #tpu.pipeline_mode<synchronous>, transform_indices = @transform_11, window_bounds = array<i64: 32, 8>}, {pipeline_mode = #tpu.pipeline_mode<synchronous>, transform_indices = @transform_12, window_bounds = array<i64: 32, 1>}, {pipeline_mode = #tpu.pipeline_mode<synchronous>, transform_indices = @transform_13, window_bounds = array<i64: 32, 16>}, {pipeline_mode = #tpu.pipeline_mode<synchronous>, transform_indices = @transform_14, window_bounds = array<i64: 32, 1>}, {transform_indices = @transform_15, window_bounds = array<i64: 32, 128>}]} {
    %c0 = arith.constant 0 : index
    %c0_0 = arith.constant 0 : index
    %c0_1 = arith.constant 0 : index
    %0 = vector.load %arg1[%c0, %c0_0, %c0_1] : memref<1x3x1024xbf16, #tpu.memory_space<vmem>>, vector<1x3x1024xbf16>
    %1 = vector.shape_cast %0 : vector<1x3x1024xbf16> to vector<3x1024xbf16>
    %c0_2 = arith.constant 0 : index
    %c0_3 = arith.constant 0 : index
    %c0_4 = arith.constant 0 : index
    %2 = vector.load %arg2[%c0_2, %c0_3, %c0_4] : memref<1x8x1024xbf16, #tpu.memory_space<vmem>>, vector<1x8x1024xbf16>
    %3 = vector.shape_cast %2 : vector<1x8x1024xbf16> to vector<8x1024xbf16>
    %c0_5 = arith.constant 0 : index
    %c0_6 = arith.constant 0 : index
    %4 = vector.load %arg5[%c0_5, %c0_6] : memref<8x3xbf16, #tpu.memory_space<vmem>>, vector<8x3xbf16>
    %c0_7 = arith.constant 0 : index
    %c0_8 = arith.constant 0 : index
    %5 = vector.load %arg3[%c0_7, %c0_8] : memref<3x128xbf16, #tpu.memory_space<vmem>>, vector<3x128xbf16>
    %cst = arith.constant dense<0.000000e+00> : vector<8x128xf32>
    %6 = tpu.matmul %4, %5, %cst {dimension_numbers = #tpu.dot_dimension_numbers<[1], [0], [0], [1], [0, 0, 1, 1], [], []>} : vector<8x3xbf16>, vector<3x128xbf16>, vector<8x128xf32> -> vector<8x128xf32>
    %c0_9 = arith.constant 0 : index
    %c0_10 = arith.constant 0 : index
    %7 = vector.load %arg7[%c0_9, %c0_10] : memref<8x1xf32, #tpu.memory_space<vmem>>, vector<8x1xf32>
    %8 = vector.broadcast %7 : vector<8x1xf32> to vector<8x128xf32>
    %9 = arith.addf %6, %8 : vector<8x128xf32>
    %10 = tpu.concatenate %9, %9, %9, %9, %9, %9, %9, %9 in 1 : vector<8x128xf32>, vector<8x128xf32>, vector<8x128xf32>, vector<8x128xf32>, vector<8x128xf32>, vector<8x128xf32>, vector<8x128xf32>, vector<8x128xf32> -> vector<8x1024xf32>
    %c0_11 = arith.constant 0 : index
    %c0_12 = arith.constant 0 : index
    %11 = vector.load %arg6[%c0_11, %c0_12] : memref<8x3xbf16, #tpu.memory_space<vmem>>, vector<8x3xbf16>
    %cst_13 = arith.constant dense<0.000000e+00> : vector<8x1024xf32>
    %12 = tpu.matmul %11, %1, %cst_13 {dimension_numbers = #tpu.dot_dimension_numbers<[1], [0], [0], [1], [0, 0, 1, 1], [], []>} : vector<8x3xbf16>, vector<3x1024xbf16>, vector<8x1024xf32> -> vector<8x1024xf32>
    %13 = arith.extf %3 : vector<8x1024xbf16> to vector<8x1024xf32>
    %14 = arith.addf %13, %12 : vector<8x1024xf32>
    %15 = arith.addf %14, %10 : vector<8x1024xf32>
    %cst_14 = arith.constant 0.000000e+00 : f32
    %16 = vector.broadcast %cst_14 : f32 to vector<8x1024xf32>
    %17 = arith.cmpf ogt, %15, %16 : vector<8x1024xf32>
    %cst_15 = arith.constant 2.000000e-01 : f32
    %18 = vector.broadcast %cst_15 : f32 to vector<8x1024xf32>
    %19 = arith.mulf %18, %15 : vector<8x1024xf32>
    %20 = arith.select %17, %15, %19 : vector<8x1024xi1>, vector<8x1024xf32>
    %c0_16 = arith.constant 0 : index
    %c0_17 = arith.constant 0 : index
    %21 = vector.load %arg8[%c0_16, %c0_17] : memref<8x8xbf16, #tpu.memory_space<vmem>>, vector<8x8xbf16>
    %22 = arith.truncf %20 : vector<8x1024xf32> to vector<8x1024xbf16>
    %cst_18 = arith.constant dense<0.000000e+00> : vector<8x1024xf32>
    %23 = tpu.matmul %21, %22, %cst_18 {dimension_numbers = #tpu.dot_dimension_numbers<[1], [0], [0], [1], [0, 0, 1, 1], [], []>} : vector<8x8xbf16>, vector<8x1024xbf16>, vector<8x1024xf32> -> vector<8x1024xf32>
    %c0_19 = arith.constant 0 : index
    %c0_20 = arith.constant 0 : index
    %24 = vector.load %arg9[%c0_19, %c0_20] : memref<8x1xf32, #tpu.memory_space<vmem>>, vector<8x1xf32>
    %25 = vector.broadcast %24 : vector<8x1xf32> to vector<8x1024xf32>
    %26 = arith.addf %23, %25 : vector<8x1024xf32>
    %cst_21 = arith.constant 0.000000e+00 : f32
    %27 = vector.broadcast %cst_21 : f32 to vector<8x1024xf32>
    %28 = arith.cmpf ogt, %26, %27 : vector<8x1024xf32>
    %cst_22 = arith.constant 2.000000e-01 : f32
    %29 = vector.broadcast %cst_22 : f32 to vector<8x1024xf32>
    %30 = arith.mulf %29, %26 : vector<8x1024xf32>
    %31 = arith.select %28, %26, %30 : vector<8x1024xi1>, vector<8x1024xf32>
    %c0_23 = arith.constant 0 : index
    %c0_24 = arith.constant 0 : index
    %32 = vector.load %arg10[%c0_23, %c0_24] : memref<8x8xbf16, #tpu.memory_space<vmem>>, vector<8x8xbf16>
    %33 = arith.truncf %31 : vector<8x1024xf32> to vector<8x1024xbf16>
    %cst_25 = arith.constant dense<0.000000e+00> : vector<8x1024xf32>
    %34 = tpu.matmul %32, %33, %cst_25 {dimension_numbers = #tpu.dot_dimension_numbers<[1], [0], [0], [1], [0, 0, 1, 1], [], []>} : vector<8x8xbf16>, vector<8x1024xbf16>, vector<8x1024xf32> -> vector<8x1024xf32>
    %c0_26 = arith.constant 0 : index
    %c0_27 = arith.constant 0 : index
    %35 = vector.load %arg11[%c0_26, %c0_27] : memref<8x1xf32, #tpu.memory_space<vmem>>, vector<8x1xf32>
    %36 = vector.broadcast %35 : vector<8x1xf32> to vector<8x1024xf32>
    %37 = arith.addf %34, %36 : vector<8x1024xf32>
    %cst_28 = arith.constant 0.000000e+00 : f32
    %38 = vector.broadcast %cst_28 : f32 to vector<8x1024xf32>
    %39 = arith.cmpf ogt, %37, %38 : vector<8x1024xf32>
    %cst_29 = arith.constant 2.000000e-01 : f32
    %40 = vector.broadcast %cst_29 : f32 to vector<8x1024xf32>
    %41 = arith.mulf %40, %37 : vector<8x1024xf32>
    %42 = arith.select %39, %37, %41 : vector<8x1024xi1>, vector<8x1024xf32>
    %43 = vector.extract_strided_slice %42 {offsets = [0, 0], sizes = [8, 128], strides = [1, 1]} : vector<8x1024xf32> to vector<8x128xf32>
    %44 = vector.extract_strided_slice %42 {offsets = [0, 128], sizes = [8, 128], strides = [1, 1]} : vector<8x1024xf32> to vector<8x128xf32>
    %45 = arith.addf %43, %44 : vector<8x128xf32>
    %46 = vector.extract_strided_slice %42 {offsets = [0, 256], sizes = [8, 128], strides = [1, 1]} : vector<8x1024xf32> to vector<8x128xf32>
    %47 = arith.addf %45, %46 : vector<8x128xf32>
    %48 = vector.extract_strided_slice %42 {offsets = [0, 384], sizes = [8, 128], strides = [1, 1]} : vector<8x1024xf32> to vector<8x128xf32>
    %49 = arith.addf %47, %48 : vector<8x128xf32>
    %50 = vector.extract_strided_slice %42 {offsets = [0, 512], sizes = [8, 128], strides = [1, 1]} : vector<8x1024xf32> to vector<8x128xf32>
    %51 = arith.addf %49, %50 : vector<8x128xf32>
    %52 = vector.extract_strided_slice %42 {offsets = [0, 640], sizes = [8, 128], strides = [1, 1]} : vector<8x1024xf32> to vector<8x128xf32>
    %53 = arith.addf %51, %52 : vector<8x128xf32>
    %54 = vector.extract_strided_slice %42 {offsets = [0, 768], sizes = [8, 128], strides = [1, 1]} : vector<8x1024xf32> to vector<8x128xf32>
    %55 = arith.addf %53, %54 : vector<8x128xf32>
    %56 = vector.extract_strided_slice %42 {offsets = [0, 896], sizes = [8, 128], strides = [1, 1]} : vector<8x1024xf32> to vector<8x128xf32>
    %57 = arith.addf %55, %56 : vector<8x128xf32>
    %cst_30 = arith.constant 1.250000e-01 : f32
    %58 = vector.broadcast %cst_30 : f32 to vector<8x128xf32>
    %59 = arith.mulf %57, %58 : vector<8x128xf32>
    %60 = arith.truncf %59 : vector<8x128xf32> to vector<8x128xbf16>
    %c0_31 = arith.constant 0 : index
    %c0_32 = arith.constant 0 : index
    %61 = vector.load %arg12[%c0_31, %c0_32] : memref<32x8xbf16, #tpu.memory_space<vmem>>, vector<32x8xbf16>
    %cst_33 = arith.constant dense<0.000000e+00> : vector<32x128xf32>
    %62 = tpu.matmul %61, %60, %cst_33 {dimension_numbers = #tpu.dot_dimension_numbers<[1], [0], [0], [1], [0, 0, 1, 1], [], []>} : vector<32x8xbf16>, vector<8x128xbf16>, vector<32x128xf32> -> vector<32x128xf32>
    %c0_34 = arith.constant 0 : index
    %c0_35 = arith.constant 0 : index
    %63 = vector.load %arg13[%c0_34, %c0_35] : memref<32x1xf32, #tpu.memory_space<vmem>>, vector<32x1xf32>
    %64 = vector.broadcast %63 : vector<32x1xf32> to vector<32x128xf32>
    %65 = arith.addf %62, %64 : vector<32x128xf32>
    %c0_36 = arith.constant 0 : index
    %c0_37 = arith.constant 0 : index
    %66 = vector.load %arg14[%c0_36, %c0_37] : memref<32x16xbf16, #tpu.memory_space<vmem>>, vector<32x16xbf16>
    %c0_38 = arith.constant 0 : index
    %c0_39 = arith.constant 0 : index
    %67 = vector.load %arg4[%c0_38, %c0_39] : memref<16x128xbf16, #tpu.memory_space<vmem>>, vector<16x128xbf16>
    %cst_40 = arith.constant dense<0.000000e+00> : vector<32x128xf32>
    %68 = tpu.matmul %66, %67, %cst_40 {dimension_numbers = #tpu.dot_dimension_numbers<[1], [0], [0], [1], [0, 0, 1, 1], [], []>} : vector<32x16xbf16>, vector<16x128xbf16>, vector<32x128xf32> -> vector<32x128xf32>
    %c0_41 = arith.constant 0 : index
    %c0_42 = arith.constant 0 : index
    %69 = vector.load %arg15[%c0_41, %c0_42] : memref<32x1xf32, #tpu.memory_space<vmem>>, vector<32x1xf32>
    %70 = vector.broadcast %69 : vector<32x1xf32> to vector<32x128xf32>
    %71 = arith.addf %68, %70 : vector<32x128xf32>
    %72 = arith.addf %65, %71 : vector<32x128xf32>
    %cst_43 = arith.constant 0.000000e+00 : f32
    %73 = vector.broadcast %cst_43 : f32 to vector<32x128xf32>
    %74 = arith.cmpf ogt, %72, %73 : vector<32x128xf32>
    %cst_44 = arith.constant 2.000000e-01 : f32
    %75 = vector.broadcast %cst_44 : f32 to vector<32x128xf32>
    %76 = arith.mulf %75, %72 : vector<32x128xf32>
    %77 = arith.select %74, %72, %76 : vector<32x128xi1>, vector<32x128xf32>
    %c0_45 = arith.constant 0 : index
    %c0_46 = arith.constant 0 : index
    %78 = vector.load %arg16[%c0_45, %c0_46] : memref<32x128xf32, #tpu.memory_space<vmem>>, vector<32x128xf32>
    tpu.vector_store %arg16[%c0_45, %c0_46], %77 {strides = array<i32>} : memref<32x128xf32, #tpu.memory_space<vmem>>, vector<32x128xf32>,
    return
  }
  func.func @transform_0(%arg0: i32) -> (i32, i32, i32) {
    %c0_i32 = arith.constant 0 : i32
    %c0_i32_0 = arith.constant 0 : i32
    %c0_i32_1 = arith.constant 0 : i32
    return %arg0, %c0_i32, %c0_i32_0 : i32, i32, i32
  }
  func.func @transform_1(%arg0: i32) -> (i32, i32, i32) {
    %c0_i32 = arith.constant 0 : i32
    %c0_i32_0 = arith.constant 0 : i32
    %c0_i32_1 = arith.constant 0 : i32
    return %arg0, %c0_i32, %c0_i32_0 : i32, i32, i32
  }
  func.func @transform_2(%arg0: i32) -> (i32, i32) {
    %c0_i32 = arith.constant 0 : i32
    %c0_i32_0 = arith.constant 0 : i32
    return %c0_i32, %arg0 : i32, i32
  }
  func.func @transform_3(%arg0: i32) -> (i32, i32) {
    %c0_i32 = arith.constant 0 : i32
    %c0_i32_0 = arith.constant 0 : i32
    return %c0_i32, %arg0 : i32, i32
  }
  func.func @transform_4(%arg0: i32) -> (i32, i32) {
    %c0_i32 = arith.constant 0 : i32
    %c0_i32_0 = arith.constant 0 : i32
    %c0_i32_1 = arith.constant 0 : i32
    return %c0_i32, %c0_i32_0 : i32, i32
  }
  func.func @transform_5(%arg0: i32) -> (i32, i32) {
    %c0_i32 = arith.constant 0 : i32
    %c0_i32_0 = arith.constant 0 : i32
    %c0_i32_1 = arith.constant 0 : i32
    return %c0_i32, %c0_i32_0 : i32, i32
  }
  func.func @transform_6(%arg0: i32) -> (i32, i32) {
    %c0_i32 = arith.constant 0 : i32
    %c0_i32_0 = arith.constant 0 : i32
    %c0_i32_1 = arith.constant 0 : i32
    return %c0_i32, %c0_i32_0 : i32, i32
  }
  func.func @transform_7(%arg0: i32) -> (i32, i32) {
    %c0_i32 = arith.constant 0 : i32
    %c0_i32_0 = arith.constant 0 : i32
    %c0_i32_1 = arith.constant 0 : i32
    return %c0_i32, %c0_i32_0 : i32, i32
  }
  func.func @transform_8(%arg0: i32) -> (i32, i32) {
    %c0_i32 = arith.constant 0 : i32
    %c0_i32_0 = arith.constant 0 : i32
    %c0_i32_1 = arith.constant 0 : i32
    return %c0_i32, %c0_i32_0 : i32, i32
  }
  func.func @transform_9(%arg0: i32) -> (i32, i32) {
    %c0_i32 = arith.constant 0 : i32
    %c0_i32_0 = arith.constant 0 : i32
    %c0_i32_1 = arith.constant 0 : i32
    return %c0_i32, %c0_i32_0 : i32, i32
  }
  func.func @transform_10(%arg0: i32) -> (i32, i32) {
    %c0_i32 = arith.constant 0 : i32
    %c0_i32_0 = arith.constant 0 : i32
    %c0_i32_1 = arith.constant 0 : i32
    return %c0_i32, %c0_i32_0 : i32, i32
  }
  func.func @transform_11(%arg0: i32) -> (i32, i32) {
    %c0_i32 = arith.constant 0 : i32
    %c0_i32_0 = arith.constant 0 : i32
    %c0_i32_1 = arith.constant 0 : i32
    return %c0_i32, %c0_i32_0 : i32, i32
  }
  func.func @transform_12(%arg0: i32) -> (i32, i32) {
    %c0_i32 = arith.constant 0 : i32
    %c0_i32_0 = arith.constant 0 : i32
    %c0_i32_1 = arith.constant 0 : i32
    return %c0_i32, %c0_i32_0 : i32, i32
  }
  func.func @transform_13(%arg0: i32) -> (i32, i32) {
    %c0_i32 = arith.constant 0 : i32
    %c0_i32_0 = arith.constant 0 : i32
    %c0_i32_1 = arith.constant 0 : i32
    return %c0_i32, %c0_i32_0 : i32, i32
  }
  func.func @transform_14(%arg0: i32) -> (i32, i32) {
    %c0_i32 = arith.constant 0 : i32
    %c0_i32_0 = arith.constant 0 : i32
    %c0_i32_1 = arith.constant 0 : i32
    return %c0_i32, %c0_i32_0 : i32, i32
  }
  func.func @transform_15(%arg0: i32) -> (i32, i32) {
    %c0_i32 = arith.constant 0 : i32
    %c0_i32_0 = arith.constant 0 : i32
    return %c0_i32, %arg0 : i32, i32
  }
}

</mosaic_0001>

<llo_original>
// kernel: cic_forward.4
$region0: #{cic_forward.4}
  #allocation0 [shape = 'u32[]', space=smem, size = 0x4, offset = 0x4, fixed_abs, tag = 'smem constant byte address 0x4 - core index']
  #allocation1 [shape = 'u32[72,128]{1,0:T(1,128)}', space=vmem, size = 0x9000, scoped, tag = 'internal scratch']
  %s0 = inlined_call_operand.vmem [shape: bf16[16,512], index: 0, kind: input, shape index: {}]
  %s1 = inlined_call_operand.vmem [shape: bf16[8,16], index: 1, kind: input, shape index: {}]
  %s2 = inlined_call_operand.vmem [shape: f32[8,1], index: 2, kind: input, shape index: {}]
  %s3 = inlined_call_operand.vmem [shape: bf16[8,512], index: 3, kind: output, shape index: {}]
  %s4 = sld [smem:[#allocation0]]
  $region83: #{cic_forward.4} parent=0
    _
  %s6 = ssub.s32 1, %s4
  %s7 = scalar_select 0, %s6, %s4
  $region1: #{cic_forward.4} parent=0
    #allocation2 [shape = 'u8[16384]{0}', space=vmem, size = 0x4000, scoped, tag = 'input window, operand 0']
    loop: start=0, step=1, limit=4
    $region2: #{cic_forward.4} parent=1 // loop_pre_header
      _
    $region3: #{cic_forward.4} parent=1 // loop_header
      %s9 = sphi 0, %s13
      %p10 = scmp.ge.s32.totalorder %s9, 4
      %s19 = sphi 0, %s21
      %s22 = sphi 0, %s19
      %s23 = sphi 0, %s22
      %s39 = sphi 0, %s23
      %s43 = sphi 0, %s43
      %s45 = sphi 0, %s43
      %s46 = sphi 0, %s45
      %s60 = sphi 0, %s46
      %s64 = sphi 0, %s64
      %s66 = sphi 0, %s64
      %s67 = sphi 0, %s66
      %s81 = sphi 0, %s67
      %s87 = sphi 0, %s89
      %s90 = sphi 0, %s87
      %s91 = sphi 0, %s90
      %s107 = sphi 0, %s91
    $region4: #{cic_forward.4} parent=1 // loop_header_branch
      %12 = sbr.rel (%p10) target = $region8
    $region5: #{cic_forward.4} parent=1 // loop_body
      %s14 = ssub.s32 %s9, 1
      %s15 = ssub.s32 %s9, 2
      %s16 = sadd.s32 %s9, 1
      %s17 = ssub.s32 %s9, %s16
      %p18 = scmp.eq.s32.totalorder %s17, 0
      %s20 = sadd.s32 %s19, 1
      %s21 = scalar_select %p18, %s19, %s20
      %p24 = pneg %p18
      %p25 = scmp.eq.s32.totalorder %s9, 1
      %p26 = por %p24, %p25
      %p27 = scmp.ne.s32.totalorder %s19, %s22
      %p28 = scmp.eq.s32.totalorder %s9, 0
      %p29 = por %p27, %p28
      %p30 = scmp.ne.s32.totalorder %s19, %s22
      %p31 = scmp.eq.s32.totalorder %s14, 1
      %p32 = por %p30, %p31
      %p33 = scmp.ne.s32.totalorder %s22, %s23
      %p34 = scmp.eq.s32.totalorder %s14, 0
      %p35 = por %p33, %p34
      %p36 = scmp.ne.s32.totalorder %s22, %s23
      %p37 = scmp.eq.s32.totalorder %s15, 1
      %p38 = por %p36, %p37
      %p40 = scmp.ne.s32.totalorder %s23, %s39
      %p41 = scmp.eq.s32.totalorder %s15, 0
      %p42 = por %p40, %p41
      %s44 = sadd.s32 %s43, 1
      %p47 = scmp.eq.s32.totalorder %s9, 1
      %p48 = scmp.ne.s32.totalorder %s43, %s45
      %p49 = scmp.eq.s32.totalorder %s9, 0
      %p50 = por %p48, %p49
      %p51 = scmp.ne.s32.totalorder %s43, %s45
      %p52 = scmp.eq.s32.totalorder %s14, 1
      %p53 = por %p51, %p52
      %p54 = scmp.ne.s32.totalorder %s45, %s46
      %p55 = scmp.eq.s32.totalorder %s14, 0
      %p56 = por %p54, %p55
      %p57 = scmp.ne.s32.totalorder %s45, %s46
      %p58 = scmp.eq.s32.totalorder %s15, 1
      %p59 = por %p57, %p58
      %p61 = scmp.ne.s32.totalorder %s46, %s60
      %p62 = scmp.eq.s32.totalorder %s15, 0
      %p63 = por %p61, %p62
      %s65 = sadd.s32 %s64, 1
      %p68 = scmp.eq.s32.totalorder %s9, 1
      %p69 = scmp.ne.s32.totalorder %s64, %s66
      %p70 = scmp.eq.s32.totalorder %s9, 0
      %p71 = por %p69, %p70
      %p72 = scmp.ne.s32.totalorder %s64, %s66
      %p73 = scmp.eq.s32.totalorder %s14, 1
      %p74 = por %p72, %p73
      %p75 = scmp.ne.s32.totalorder %s66, %s67
      %p76 = scmp.eq.s32.totalorder %s14, 0
      %p77 = por %p75, %p76
      %p78 = scmp.ne.s32.totalorder %s66, %s67
      %p79 = scmp.eq.s32.totalorder %s15, 1
      %p80 = por %p78, %p79
      %p82 = scmp.ne.s32.totalorder %s67, %s81
      %p83 = scmp.eq.s32.totalorder %s15, 0
      %p84 = por %p82, %p83
      %s85 = ssub.s32 %s9, %s16
      %p86 = scmp.eq.s32.totalorder %s85, 0
      %s88 = sadd.s32 %s87, 1
      %s89 = scalar_select %p86, %s87, %s88
      %p92 = pneg %p86
      %p93 = scmp.eq.s32.totalorder %s9, 1
      %p94 = por %p92, %p93
      %p95 = scmp.ne.s32.totalorder %s87, %s90
      %p96 = scmp.eq.s32.totalorder %s9, 0
      %p97 = por %p95, %p96
      %p98 = scmp.ne.s32.totalorder %s87, %s90
      %p99 = scmp.eq.s32.totalorder %s14, 1
      %p100 = por %p98, %p99
      %p101 = scmp.ne.s32.totalorder %s90, %s91
      %p102 = scmp.eq.s32.totalorder %s14, 0
      %p103 = por %p101, %p102
      %p104 = scmp.ne.s32.totalorder %s90, %s91
      %p105 = scmp.eq.s32.totalorder %s15, 1
      %p106 = por %p104, %p105
      %p108 = scmp.ne.s32.totalorder %s91, %s107
      %p109 = scmp.eq.s32.totalorder %s15, 0
      %p110 = por %p108, %p109
      %p111 = scmp.le.s32.totalorder 1, %s9
      %p112 = scmp.lt.s32.totalorder %s9, 3
      %p113 = pnand %p111, %p112
      %p114 = pneg %p113
      // Predicated region
      $region9: #{cic_forward.4} parent=5 // pred_check
        _
      $region10: #{cic_forward.4} parent=5 // pred_check_branch
        %116 = sbr.rel (%p113) target = $region12
      $region11: #{cic_forward.4} parent=5 // pred_region
        %s117 = ssub.s32 %s9, 1
        // Predicated region
        $region13: #{cic_forward.4} parent=11 // pred_check
          %p118 = pneg %p56
        $region14: #{cic_forward.4} parent=11 // pred_check_branch
          %120 = sbr.rel (%p118) target = $region16
        $region15: #{cic_forward.4} parent=11 // pred_region
          _
        $region16: #{cic_forward.4} parent=11 // pred_fallthru
          _
        // Predicated region
        $region17: #{cic_forward.4} parent=11 // pred_check
          %p121 = pneg %p77
        $region18: #{cic_forward.4} parent=11 // pred_check_branch
          %123 = sbr.rel (%p121) target = $region20
        $region19: #{cic_forward.4} parent=11 // pred_region
          _
        $region20: #{cic_forward.4} parent=11 // pred_fallthru
          _
      $region12: #{cic_forward.4} parent=5 // pred_fallthru
        _
      %p124 = scmp.lt.s32.totalorder %s9, 2
      // Predicated region
      $region21: #{cic_forward.4} parent=5 // pred_check
        %p125 = pneg %p124
      $region22: #{cic_forward.4} parent=5 // pred_check_branch
        %127 = sbr.rel (%p125) target = $region24
      $region23: #{cic_forward.4} parent=5 // pred_region
        // Predicated region
        $region25: #{cic_forward.4} parent=23 // pred_check
          %p128 = pneg %p29
        $region26: #{cic_forward.4} parent=23 // pred_check_branch
          %130 = sbr.rel (%p128) target = $region28
        $region27: #{cic_forward.4} parent=23 // pred_region
          %s131 = sand.u32 %s19, 1
          %s132 = sand.u32 %s19, 1
          %s133 = smul.addr %s132, 16
          %s134 = scalar_lea.vmem [#allocation2], %s133
          %s135 = smul.u32 2, %s9
          %s136 = smul.addr %s135, 4
          %s137 = scalar_lea.vmem %s0, %s136
          // Predicated region
          $region29: #{cic_forward.4} parent=27 // pred_check
            _
          $region30: #{cic_forward.4} parent=27 // pred_check_branch
            %139 = sbr.rel (0) target = $region32
          $region31: #{cic_forward.4} parent=27 // pred_region
            // Predicated region
            $region33: #{cic_forward.4} parent=31 // pred_check
              _
            $region34: #{cic_forward.4} parent=31 // pred_check_branch
              %141 = sbr.rel (0) target = $region36
            $region35: #{cic_forward.4} parent=31 // pred_region
              // Predicated region
              $region48: #{cic_forward.4} parent=35 // pred_check
                _
              $region49: #{cic_forward.4} parent=35 // pred_check_branch
                %159 = sbr.rel (0) target = $region51
              $region50: #{cic_forward.4} parent=35 // pred_region
                loop: start=0, step=1, limit=1
                $region52: #{cic_forward.4} parent=50 // loop_pre_header
                  _
                $region53: #{cic_forward.4} parent=50 // loop_header
                  %s161 = sphi 0, %s165
                  %p162 = scmp.ge.s32.totalorder %s161, 1
                  %s166 = sphi %s137, %s137
                  %s167 = sphi %s134, %s134
                $region54: #{cic_forward.4} parent=50 // loop_header_branch
                  %164 = sbr.rel (%p162) target = $region58
                $region55: #{cic_forward.4} parent=50 // loop_body
                  %v168 = vld [vmem:[%s166] sm:$0xff]
                  %169 = vst [vmem:[%s167] sm:$0xff] %v168
                  %v170 = vld [vmem:[%s166 + $0x10] sm:$0xff]
                  %171 = vst [vmem:[%s167 + $0x8] sm:$0xff] %v170
                $region56: #{cic_forward.4} parent=50 // loop_footer
                  %s165 = sadd.s32 1, %s161
                $region57: #{cic_forward.4} parent=50 // loop_footer_branch
                  %160 = sbr.rel target = $region53
                $region58: #{cic_forward.4} parent=50 // loop_exit
                  _
              $region51: #{cic_forward.4} parent=35 // pred_fallthru
                _
              // Predicated region
              $region59: #{cic_forward.4} parent=35 // pred_check
                _
              $region60: #{cic_forward.4} parent=35 // pred_check_branch
                %173 = sbr.rel target = $region62
              $region61: #{cic_forward.4} parent=35 // pred_region
                _
              $region62: #{cic_forward.4} parent=35 // pred_fallthru
                _
            $region36: #{cic_forward.4} parent=31 // pred_fallthru
              _
            // Predicated region
            $region37: #{cic_forward.4} parent=31 // pred_check
              _
            $region38: #{cic_forward.4} parent=31 // pred_check_branch
              %143 = sbr.rel target = $region40
            $region39: #{cic_forward.4} parent=31 // pred_region
              %s145 = ssub.s32 256, 1
              loop: start=0, step=1, limit=1
              $region41: #{cic_forward.4} parent=39 // loop_pre_header
                _
              $region42: #{cic_forward.4} parent=39 // loop_header
                %s147 = sphi 0, %s151
                %p148 = scmp.ge.s32.totalorder %s147, 1
                %s152 = sphi %s137, %s137
                %s153 = sphi %s134, %s134
              $region43: #{cic_forward.4} parent=39 // loop_header_branch
                %150 = sbr.rel (%p148) target = $region47
              $region44: #{cic_forward.4} parent=39 // loop_body
                %v154 = vld [vmem:[%s152] sm:%s145]
                %155 = vst [vmem:[%s153] sm:%s145] %v154
                %v156 = vld [vmem:[%s152 + $0x10] sm:%s145]
                %157 = vst [vmem:[%s153 + $0x8] sm:%s145] %v156
              $region45: #{cic_forward.4} parent=39 // loop_footer
                %s151 = sadd.s32 1, %s147
              $region46: #{cic_forward.4} parent=39 // loop_footer_branch
                %146 = sbr.rel target = $region42
              $region47: #{cic_forward.4} parent=39 // loop_exit
                _
            $region40: #{cic_forward.4} parent=31 // pred_fallthru
              _
          $region32: #{cic_forward.4} parent=27 // pred_fallthru
            _
          %174 = vnop
        $region28: #{cic_forward.4} parent=23 // pred_fallthru
          _
      $region24: #{cic_forward.4} parent=5 // pred_fallthru
        _
      %p175 = scmp.le.s32.totalorder 1, %s9
      %p176 = scmp.lt.s32.totalorder %s9, 3
      %p177 = pnand %p175, %p176
      %p178 = pneg %p177
      // Predicated region
      $region63: #{cic_forward.4} parent=5 // pred_check
        _
      $region64: #{cic_forward.4} parent=5 // pred_check_branch
        %180 = sbr.rel (%p177) target = $region66
      $region65: #{cic_forward.4} parent=5 // pred_region
        %s181 = ssub.s32 %s9, 1
        %s182 = sand.u32 %s22, 1
        %s183 = sand.u32 %s22, 1
        %s184 = smul.addr %s183, 16
        %s185 = scalar_lea.vmem [#allocation2], %s184
        // Predicated region
        $region67: #{cic_forward.4} parent=65 // pred_check
          %p186 = pneg %p35
        $region68: #{cic_forward.4} parent=65 // pred_check_branch
          %188 = sbr.rel (%p186) target = $region70
        $region69: #{cic_forward.4} parent=65 // pred_region
          _
        $region70: #{cic_forward.4} parent=65 // pred_fallthru
          _
        %s189 = sand.u32 %s22, 1
        %s190 = sand.u32 %s22, 1
        %s191 = smul.addr %s190, 16
        %s192 = scalar_lea.vmem [#allocation2], %s191
        %p193 = pneg %p35
        %p194 = pneg %p32
        %p195 = pneg %p56
        %p196 = pneg %p53
        %p197 = pneg %p77
        %p198 = pneg %p74
        %p199 = pneg %p103
        %p200 = pneg %p100
        %s201 = smul.u32 2, %s14
        %p202 = scmp.lt.s32.totalorder %s201, 3
        %s203 = scalar_select %p202, %s201, 3
        %s204 = smul.addr %s203, 4
        %s205 = scalar_lea.vmem %s3, %s204
        %s206 = smul.u32 2, %s14
        %s207 = smul.u32 2, %s14
        %p208 = scmp.lt.s32.totalorder %s207, 3
        %s209 = scalar_select %p208, %s207, 3
        %s210 = smul.addr %s209, 4
        %s211 = scalar_lea.vmem %s3, %s210
        %s212 = smul.u32 2, %s14
        %v214 = vld [vmem:[%s1] sm:$0xf]
        %v215 = vld [vmem:[%s185] sm:$0xff]
        %v216 = vld [vmem:[%s185 + $0x8] sm:$0xff]
        %v217 = vld [vmem:[%s2] sm:$0xff]
        %219 = vset.pattern.permute.xlu0 0
        %220 = vperm.xlu0 %219, %v217
        %v221 = vpop.permute.xlu0 %220
        %v225 = vunpack.c.l.b16 %v215
        %v226 = vunpack.c.h.b16 %v215
        %v227 = vunpack.c.l.b16 %v216
        %v228 = vunpack.c.h.b16 %v216
        %v229 = vpack.c.b16 %v227, %v225
        %v230 = vpack.c.b16 %v228, %v226
        %vm233 = vcmask 130048
        %v235 = vsel %vm233, %v214, 0
        %237 = vmatpush.bf16.msra.mxu0 0
        %238 = vmatpush.bf16.msra.mxu0 0
        %239 = vmatpush.bf16.msra.mxu0 0
        %240 = vmatpush.bf16.msra.mxu0 0
        %241 = vmatpush.bf16.msra.mxu0 0
        %242 = vmatpush.bf16.msra.mxu0 0
        %243 = vmatpush.bf16.msra.mxu0 0
        %244 = vmatpush.bf16.msra.mxu0 %v229
        %245 = vmatmul.bf16.gmra.mxu0 %v235
        %v246 = vpop.f32.mrf.mxu0
        %v247 = vadd.f32 %v221, %v246
        %v248 = vpop.f32.mrf.mxu0
        %249 = vdwg.mxu0
        %250 = vmatpush.bf16.msra.mxu0 0
        %251 = vmatpush.bf16.msra.mxu0 0
        %252 = vmatpush.bf16.msra.mxu0 0
        %253 = vmatpush.bf16.msra.mxu0 0
        %254 = vmatpush.bf16.msra.mxu0 0
        %255 = vmatpush.bf16.msra.mxu0 0
        %256 = vmatpush.bf16.msra.mxu0 0
        %257 = vmatpush.bf16.msra.mxu0 %v230
        %258 = vmatmul.bf16.gmra.mxu0 %v235
        %v259 = vpop.f32.mrf.mxu0
        %v260 = vadd.f32 %v221, %v259
        %v261 = vpop.f32.mrf.mxu0
        %262 = vdwg.mxu0
        %vm263 = vcmp.gt.f32.partialorder %v247, 0.0
        %vm264 = vcmp.gt.f32.partialorder %v260, 0.0
        %v265 = vmul.f32 %v247, 0.2
        %v266 = vmul.f32 %v260, 0.2
        %v267 = vsel %vm263, %v247, %v265
        %v268 = vsel %vm264, %v260, %v266
        %v269 = vpack.c.bf16 %v268, %v267
        %270 = vst [vmem:[%s211] sm:$0xff] %v269
        %s271 = smul.u32 2, %s14
        %p272 = scmp.lt.s32.totalorder %s271, 3
        %s273 = scalar_select %p272, %s271, 3
        %s274 = smul.addr %s273, 4
        %s275 = scalar_lea.vmem %s3, %s274
        // Predicated region
        $region71: #{cic_forward.4} parent=65 // pred_check
          %p276 = pneg %p100
        $region72: #{cic_forward.4} parent=65 // pred_check_branch
          %278 = sbr.rel (%p276) target = $region74
        $region73: #{cic_forward.4} parent=65 // pred_region
          %s279 = smul.u32 2, %s14
        $region74: #{cic_forward.4} parent=65 // pred_fallthru
          _
      $region66: #{cic_forward.4} parent=5 // pred_fallthru
        _
      %p280 = scmp.le.s32.totalorder 2, %s9
      // Predicated region
      $region75: #{cic_forward.4} parent=5 // pred_check
        %p281 = pneg %p280
      $region76: #{cic_forward.4} parent=5 // pred_check_branch
        %283 = sbr.rel (%p281) target = $region78
      $region77: #{cic_forward.4} parent=5 // pred_region
        %s284 = ssub.s32 %s9, 2
        // Predicated region
        $region79: #{cic_forward.4} parent=77 // pred_check
          %p285 = pneg %p106
        $region80: #{cic_forward.4} parent=77 // pred_check_branch
          %287 = sbr.rel (%p285) target = $region82
        $region81: #{cic_forward.4} parent=77 // pred_region
          %s288 = smul.u32 2, %s15
          %p289 = scmp.lt.s32.totalorder %s288, 3
          %s290 = scalar_select %p289, %s288, 3
          %s291 = smul.addr %s290, 4
          %s292 = scalar_lea.vmem %s3, %s291
        $region82: #{cic_forward.4} parent=77 // pred_fallthru
          _
      $region78: #{cic_forward.4} parent=5 // pred_fallthru
        _
    $region6: #{cic_forward.4} parent=1 // loop_footer
      %s13 = sadd.s32 1, %s9
    $region7: #{cic_forward.4} parent=1 // loop_footer_branch
      %8 = sbr.rel target = $region3
    $region8: #{cic_forward.4} parent=1 // loop_exit
      _

// kernel: cic_forward.3
$region0: #{cic_forward.3}
  #allocation0 [shape = 'u32[]', space=smem, size = 0x4, offset = 0x4, fixed_abs, tag = 'smem constant byte address 0x4 - core index']
  #allocation1 [shape = 'u32[72,128]{1,0:T(1,128)}', space=vmem, size = 0x9000, scoped, tag = 'internal scratch']
  %s0 = inlined_call_operand.vmem [shape: f32[2,3,256], index: 0, kind: input, shape index: {}, may-alias: {0,1}]
  %s1 = inlined_call_operand.vmem [shape: f32[2,3,256], index: 1, kind: input, shape index: {}, may-alias: {0,1}]
  %s2 = inlined_call_operand.vmem [shape: f32[2,1,256], index: 2, kind: input, shape index: {}]
  %s3 = inlined_call_operand.vmem [shape: s32[2,256,8], index: 3, kind: output, shape index: {}]
  %s4 = sld [smem:[#allocation0]]
  $region45: #{cic_forward.3} parent=0
    _
  %s6 = ssub.s32 1, %s4
  %s7 = scalar_select 0, %s6, %s4
  loop: start=0, step=1, limit=6
  $region2: #{cic_forward.3} parent=0 // loop_pre_header
    _
  $region3: #{cic_forward.3} parent=0 // loop_header
    %s9 = sphi 0, %s13
    %p10 = scmp.ge.s32.totalorder %s9, 6
    %s16 = sphi 0, %s28
    %s17 = sphi 0, %s24
    %s18 = sphi 0, %s16
    %s19 = sphi 0, %s17
    %s20 = sphi 0, %s18
    %s21 = sphi 0, %s19
    %s33 = sphi 0, %s35
    %s36 = sphi 0, %s33
    %s37 = sphi 0, %s36
    %s53 = sphi 0, %s37
    %s59 = sphi 0, %s61
    %s62 = sphi 0, %s59
    %s63 = sphi 0, %s62
    %s79 = sphi 0, %s63
    %s85 = sphi 0, %s87
    %s88 = sphi 0, %s85
    %s89 = sphi 0, %s88
    %s105 = sphi 0, %s89
    %s113 = sphi 0, %s115
    %s116 = sphi 0, %s113
    %s117 = sphi 0, %s116
    %s133 = sphi 0, %s117
  $region4: #{cic_forward.3} parent=0 // loop_header_branch
    %12 = sbr.rel (%p10) target = $region8
  $region5: #{cic_forward.3} parent=0 // loop_body
    %s14 = ssub.s32 %s9, 1
    %s15 = ssub.s32 %s9, 2
    %s22 = sadd.s32 1, %s17
    %p23 = scmp.ge.s32.totalorder %s22, 2
    %s24 = scalar_select %p23, 0, %s22
    %s25 = sadd.s32 1, %s16
    %s26 = scalar_select %p23, %s25, %s16
    %p27 = scmp.ge.s32.totalorder %s26, 2
    %s28 = scalar_select %p27, 0, %s26
    %s29 = ssub.s32 %s16, %s28
    %s30 = ssub.s32 %s17, %s24
    %s31 = sor.u32 %s29, %s30
    %p32 = scmp.eq.s32.totalorder %s31, 0
    %s34 = sadd.s32 %s33, 1
    %s35 = scalar_select %p32, %s33, %s34
    %p38 = pneg %p32
    %p39 = scmp.eq.s32.totalorder %s9, 3
    %p40 = por %p38, %p39
    %p41 = scmp.ne.s32.totalorder %s33, %s36
    %p42 = scmp.eq.s32.totalorder %s9, 0
    %p43 = por %p41, %p42
    %p44 = scmp.ne.s32.totalorder %s33, %s36
    %p45 = scmp.eq.s32.totalorder %s14, 3
    %p46 = por %p44, %p45
    %p47 = scmp.ne.s32.totalorder %s36, %s37
    %p48 = scmp.eq.s32.totalorder %s14, 0
    %p49 = por %p47, %p48
    %p50 = scmp.ne.s32.totalorder %s36, %s37
    %p51 = scmp.eq.s32.totalorder %s15, 3
    %p52 = por %p50, %p51
    %p54 = scmp.ne.s32.totalorder %s37, %s53
    %p55 = scmp.eq.s32.totalorder %s15, 0
    %p56 = por %p54, %p55
    %s57 = ssub.s32 %s16, %s28
    %p58 = scmp.eq.s32.totalorder %s57, 0
    %s60 = sadd.s32 %s59, 1
    %s61 = scalar_select %p58, %s59, %s60
    %p64 = pneg %p58
    %p65 = scmp.eq.s32.totalorder %s9, 3
    %p66 = por %p64, %p65
    %p67 = scmp.ne.s32.totalorder %s59, %s62
    %p68 = scmp.eq.s32.totalorder %s9, 0
    %p69 = por %p67, %p68
    %p70 = scmp.ne.s32.totalorder %s59, %s62
    %p71 = scmp.eq.s32.totalorder %s14, 3
    %p72 = por %p70, %p71
    %p73 = scmp.ne.s32.totalorder %s62, %s63
    %p74 = scmp.eq.s32.totalorder %s14, 0
    %p75 = por %p73, %p74
    %p76 = scmp.ne.s32.totalorder %s62, %s63
    %p77 = scmp.eq.s32.totalorder %s15, 3
    %p78 = por %p76, %p77
    %p80 = scmp.ne.s32.totalorder %s63, %s79
    %p81 = scmp.eq.s32.totalorder %s15, 0
    %p82 = por %p80, %p81
    %s83 = ssub.s32 %s16, %s28
    %p84 = scmp.eq.s32.totalorder %s83, 0
    %s86 = sadd.s32 %s85, 1
    %s87 = scalar_select %p84, %s85, %s86
    %p90 = pneg %p84
    %p91 = scmp.eq.s32.totalorder %s9, 3
    %p92 = por %p90, %p91
    %p93 = scmp.ne.s32.totalorder %s85, %s88
    %p94 = scmp.eq.s32.totalorder %s9, 0
    %p95 = por %p93, %p94
    %p96 = scmp.ne.s32.totalorder %s85, %s88
    %p97 = scmp.eq.s32.totalorder %s14, 3
    %p98 = por %p96, %p97
    %p99 = scmp.ne.s32.totalorder %s88, %s89
    %p100 = scmp.eq.s32.totalorder %s14, 0
    %p101 = por %p99, %p100
    %p102 = scmp.ne.s32.totalorder %s88, %s89
    %p103 = scmp.eq.s32.totalorder %s15, 3
    %p104 = por %p102, %p103
    %p106 = scmp.ne.s32.totalorder %s89, %s105
    %p107 = scmp.eq.s32.totalorder %s15, 0
    %p108 = por %p106, %p107
    %s109 = ssub.s32 %s16, %s28
    %s110 = ssub.s32 %s17, %s24
    %s111 = sor.u32 %s109, %s110
    %p112 = scmp.eq.s32.totalorder %s111, 0
    %s114 = sadd.s32 %s113, 1
    %s115 = scalar_select %p112, %s113, %s114
    %p118 = pneg %p112
    %p119 = scmp.eq.s32.totalorder %s9, 3
    %p120 = por %p118, %p119
    %p121 = scmp.ne.s32.totalorder %s113, %s116
    %p122 = scmp.eq.s32.totalorder %s9, 0
    %p123 = por %p121, %p122
    %p124 = scmp.ne.s32.totalorder %s113, %s116
    %p125 = scmp.eq.s32.totalorder %s14, 3
    %p126 = por %p124, %p125
    %p127 = scmp.ne.s32.totalorder %s116, %s117
    %p128 = scmp.eq.s32.totalorder %s14, 0
    %p129 = por %p127, %p128
    %p130 = scmp.ne.s32.totalorder %s116, %s117
    %p131 = scmp.eq.s32.totalorder %s15, 3
    %p132 = por %p130, %p131
    %p134 = scmp.ne.s32.totalorder %s117, %s133
    %p135 = scmp.eq.s32.totalorder %s15, 0
    %p136 = por %p134, %p135
    %p137 = scmp.le.s32.totalorder 1, %s9
    %p138 = scmp.lt.s32.totalorder %s9, 5
    %p139 = pnand %p137, %p138
    %p140 = pneg %p139
    // Predicated region
    $region9: #{cic_forward.3} parent=5 // pred_check
      _
    $region10: #{cic_forward.3} parent=5 // pred_check_branch
      %142 = sbr.rel (%p139) target = $region12
    $region11: #{cic_forward.3} parent=5 // pred_region
      %s143 = ssub.s32 %s9, 1
    $region12: #{cic_forward.3} parent=5 // pred_fallthru
      _
    %p144 = scmp.lt.s32.totalorder %s9, 4
    // Predicated region
    $region13: #{cic_forward.3} parent=5 // pred_check
      %p145 = pneg %p144
    $region14: #{cic_forward.3} parent=5 // pred_check_branch
      %147 = sbr.rel (%p145) target = $region16
    $region15: #{cic_forward.3} parent=5 // pred_region
      // Predicated region
      $region17: #{cic_forward.3} parent=15 // pred_check
        %p148 = pneg %p43
      $region18: #{cic_forward.3} parent=15 // pred_check_branch
        %150 = sbr.rel (%p148) target = $region20
      $region19: #{cic_forward.3} parent=15 // pred_region
        %p151 = scmp.lt.s32.totalorder %s16, 1
        %s152 = scalar_select %p151, %s16, 1
        %p153 = scmp.lt.s32.totalorder %s17, 1
        %s154 = scalar_select %p153, %s17, 1
        %s155 = smul.addr %s152, 2
        %s156 = sadd.s32 %s154, %s155
        %s157 = smul.addr %s156, 4
        %s158 = scalar_lea.vmem %s0, %s157
      $region20: #{cic_forward.3} parent=15 // pred_fallthru
        _
      // Predicated region
      $region21: #{cic_forward.3} parent=15 // pred_check
        %p159 = pneg %p69
      $region22: #{cic_forward.3} parent=15 // pred_check_branch
        %161 = sbr.rel (%p159) target = $region24
      $region23: #{cic_forward.3} parent=15 // pred_region
        %p162 = scmp.lt.s32.totalorder %s16, 1
        %s163 = scalar_select %p162, %s16, 1
        %s164 = smul.addr %s163, 2
        %s165 = smul.addr %s164, 4
        %s166 = scalar_lea.vmem %s1, %s165
      $region24: #{cic_forward.3} parent=15 // pred_fallthru
        _
      // Predicated region
      $region25: #{cic_forward.3} parent=15 // pred_check
        %p167 = pneg %p95
      $region26: #{cic_forward.3} parent=15 // pred_check_branch
        %169 = sbr.rel (%p167) target = $region28
      $region27: #{cic_forward.3} parent=15 // pred_region
        %p170 = scmp.lt.s32.totalorder %s16, 1
        %s171 = scalar_select %p170, %s16, 1
        %s172 = smul.addr %s171, 2
        %s173 = scalar_lea.vmem %s2, %s172
      $region28: #{cic_forward.3} parent=15 // pred_fallthru
        _
    $region16: #{cic_forward.3} parent=5 // pred_fallthru
      _
    %p174 = scmp.le.s32.totalorder 1, %s9
    %p175 = scmp.lt.s32.totalorder %s9, 5
    %p176 = pnand %p174, %p175
    %p177 = pneg %p176
    // Predicated region
    $region29: #{cic_forward.3} parent=5 // pred_check
      _
    $region30: #{cic_forward.3} parent=5 // pred_check_branch
      %179 = sbr.rel (%p176) target = $region32
    $region31: #{cic_forward.3} parent=5 // pred_region
      %s180 = ssub.s32 %s9, 1
      %p181 = scmp.lt.s32.totalorder %s18, 1
      %s182 = scalar_select %p181, %s18, 1
      %p183 = scmp.lt.s32.totalorder %s19, 1
      %s184 = scalar_select %p183, %s19, 1
      %s185 = smul.addr %s182, 2
      %s186 = sadd.s32 %s184, %s185
      %s187 = smul.addr %s186, 4
      %s188 = scalar_lea.vmem %s0, %s187
      %p189 = pneg %p49
      %p190 = pneg %p46
      %p191 = scmp.lt.s32.totalorder %s18, 1
      %s192 = scalar_select %p191, %s18, 1
      %s193 = smul.addr %s192, 2
      %s194 = smul.addr %s193, 4
      %s195 = scalar_lea.vmem %s1, %s194
      %p196 = pneg %p75
      %p197 = pneg %p72
      %p198 = scmp.lt.s32.totalorder %s18, 1
      %s199 = scalar_select %p198, %s18, 1
      %s200 = smul.addr %s199, 2
      %s201 = scalar_lea.vmem %s2, %s200
      %p202 = pneg %p101
      %p203 = pneg %p98
      %p204 = pneg %p129
      %p205 = pneg %p126
      %s206 = smul.u32 16, %s19
      %p207 = scmp.lt.s32.totalorder %s18, 1
      %s208 = scalar_select %p207, %s18, 1
      %p209 = scmp.lt.s32.totalorder %s206, 31
      %s210 = scalar_select %p209, %s206, 31
      %s211 = smul.addr %s208, 32
      %s212 = sadd.s32 %s210, %s211
      %s213 = smul.addr %s212, 8
      %s214 = scalar_lea.vmem %s3, %s213
      %p215 = scmp.lt.s32.totalorder %s18, 1
      %s216 = scalar_select %p215, %s18, 1
      %p217 = scmp.lt.s32.totalorder %s19, 1
      %s218 = scalar_select %p217, %s19, 1
      %s219 = smul.addr %s216, 2
      %s220 = sadd.s32 %s218, %s219
      %s221 = smul.addr %s220, 4
      %s222 = scalar_lea.vmem %s0, %s221
      %p223 = scmp.lt.s32.totalorder %s18, 1
      %s224 = scalar_select %p223, %s18, 1
      %s225 = smul.addr %s224, 2
      %s226 = smul.addr %s225, 4
      %s227 = scalar_lea.vmem %s1, %s226
      %p228 = scmp.lt.s32.totalorder %s18, 1
      %s229 = scalar_select %p228, %s18, 1
      %s230 = smul.addr %s229, 2
      %s231 = scalar_lea.vmem %s2, %s230
      %s232 = smul.u32 16, %s19
      %p233 = scmp.lt.s32.totalorder %s18, 1
      %s234 = scalar_select %p233, %s18, 1
      %p235 = scmp.lt.s32.totalorder %s232, 31
      %s236 = scalar_select %p235, %s232, 31
      %s237 = smul.addr %s234, 32
      %s238 = sadd.s32 %s236, %s237
      %s239 = smul.addr %s238, 8
      %s240 = scalar_lea.vmem %s3, %s239
      %s241 = smul.u32 16, %s19
      %v242 = vld [vmem:[%s222] sm:$0x7]
      %v243 = vld [vmem:[%s227] sm:$0x77]
      %244 = vxpose.xlu0.b32.start [1/16] %v242, 128
      %245 = vxpose.xlu0.b32.cont [2/16] 0.0, 128
      %246 = vxpose.xlu0.b32.cont [3/16] 0.0, 128
      %247 = vxpose.xlu0.b32.cont [4/16] 0.0, 128
      %248 = vxpose.xlu0.b32.cont [5/16] 0.0, 128
      %249 = vxpose.xlu0.b32.cont [6/16] 0.0, 128
      %250 = vxpose.xlu0.b32.cont [7/16] 0.0, 128
      %251 = vxpose.xlu0.b32.cont [8/16] 0.0, 128
      %252 = vxpose.xlu0.b32.cont [9/16] 0.0, 128
      %253 = vxpose.xlu0.b32.cont [10/16] 0.0, 128
      %254 = vxpose.xlu0.b32.cont [11/16] 0.0, 128
      %255 = vxpose.xlu0.b32.cont [12/16] 0.0, 128
      %256 = vxpose.xlu0.b32.cont [13/16] 0.0, 128
      %257 = vxpose.xlu0.b32.cont [14/16] 0.0, 128
      %258 = vxpose.xlu0.b32.cont [15/16] 0.0, 128
      %259 = vxpose.xlu0.b32.end [16/16] 0.0, 128
      %v260 = vpop.trf.xlu0
      %v261 = vpop.trf.xlu0
      %v262 = vpop.trf.xlu0
      %v263 = vpop.trf.xlu0
      %v264 = vpop.trf.xlu0
      %v265 = vpop.trf.xlu0
      %v266 = vpop.trf.xlu0
      %v267 = vpop.trf.xlu0
      %v268 = vpop.trf.xlu0
      %v269 = vpop.trf.xlu0
      %v270 = vpop.trf.xlu0
      %v271 = vpop.trf.xlu0
      %v272 = vpop.trf.xlu0
      %v273 = vpop.trf.xlu0
      %v274 = vpop.trf.xlu0
      %v275 = vpop.trf.xlu0
      %277 = vst [vmem:[#allocation1] ss:$2 sm:$0xff] %v243
      %v278 = vld.sshfl [vmem:[#allocation1] sm:$0xff pattern:$0x75316420]
      %v279 = vld.sshfl [vmem:[#allocation1 + $0x8] sm:$0xff pattern:$0x75316420]
      %vm280 = vcmask 23552
      %v282 = vsel %vm280, %v260, 0
      %v285 = vsel %vm280, %v261, 0
      %v288 = vsel %vm280, %v262, 0
      %v291 = vsel %vm280, %v263, 0
      %v294 = vsel %vm280, %v264, 0
      %v297 = vsel %vm280, %v265, 0
      %v300 = vsel %vm280, %v266, 0
      %v303 = vsel %vm280, %v267, 0
      %v306 = vsel %vm280, %v268, 0
      %v309 = vsel %vm280, %v269, 0
      %v312 = vsel %vm280, %v270, 0
      %v315 = vsel %vm280, %v271, 0
      %v318 = vsel %vm280, %v272, 0
      %v321 = vsel %vm280, %v273, 0
      %v324 = vsel %vm280, %v274, 0
      %v327 = vsel %vm280, %v275, 0
      %vm329 = vcmask 1042432
      %v330 = vsel %vm329, %v278, 0
      %v332 = vsel %vm329, %v279, 0
      %334 = vmatpush.msra.mxu0 0.0
      %335 = vmatpush.msra.mxu0 0.0
      %336 = vmatpush.msra.mxu0 0.0
      %337 = vmatpush.msra.mxu0 0.0
      %338 = vmatpush.msra.mxu0 0.0
      %339 = vmatpush.msra.mxu0 0.0
      %340 = vmatpush.msra.mxu0 0.0
      %341 = vmatpush.msra.mxu0 0.0
      %342 = vmatpush.msra.mxu0 0.0
      %343 = vmatpush.msra.mxu0 0.0
      %344 = vmatpush.msra.mxu0 0.0
      %345 = vmatpush.msra.mxu0 0.0
      %346 = vmatpush.msra.mxu0 0.0
      %347 = vmatpush.msra.mxu0 0.0
      %348 = vmatpush.msra.mxu0 0.0
      %349 = vmatpush.msra.mxu0 %v330
      %350 = vmatmul.f32.gmra.mxu0 %v282
      %v351 = vpop.f32.mrf.mxu0
      %v352 = vadd.f32 0.0, %v351
      %353 = vmatmul.f32.gmra.mxu0 %v285
      %v354 = vpop.f32.mrf.mxu0
      %v355 = vadd.f32 0.0, %v354
      %356 = vmatmul.f32.gmra.mxu0 %v288
      %v357 = vpop.f32.mrf.mxu0
      %v358 = vadd.f32 0.0, %v357
      %359 = vmatmul.f32.gmra.mxu0 %v291
      %v360 = vpop.f32.mrf.mxu0
      %v361 = vadd.f32 0.0, %v360
      %362 = vmatmul.f32.gmra.mxu0 %v294
      %v363 = vpop.f32.mrf.mxu0
      %v364 = vadd.f32 0.0, %v363
      %365 = vmatmul.f32.gmra.mxu0 %v297
      %v366 = vpop.f32.mrf.mxu0
      %v367 = vadd.f32 0.0, %v366
      %368 = vmatmul.f32.gmra.mxu0 %v300
      %v369 = vpop.f32.mrf.mxu0
      %v370 = vadd.f32 0.0, %v369
      %371 = vmatmul.f32.gmra.mxu0 %v303
      %v372 = vpop.f32.mrf.mxu0
      %v373 = vadd.f32 0.0, %v372
      %374 = vmatmul.f32.gmra.mxu0 %v306
      %v375 = vpop.f32.mrf.mxu0
      %v376 = vadd.f32 0.0, %v375
      %377 = vmatmul.f32.gmra.mxu0 %v309
      %v378 = vpop.f32.mrf.mxu0
      %v379 = vadd.f32 0.0, %v378
      %380 = vmatmul.f32.gmra.mxu0 %v312
      %v381 = vpop.f32.mrf.mxu0
      %v382 = vadd.f32 0.0, %v381
      %383 = vmatmul.f32.gmra.mxu0 %v315
      %v384 = vpop.f32.mrf.mxu0
      %v385 = vadd.f32 0.0, %v384
      %386 = vmatmul.f32.gmra.mxu0 %v318
      %v387 = vpop.f32.mrf.mxu0
      %v388 = vadd.f32 0.0, %v387
      %389 = vmatmul.f32.gmra.mxu0 %v321
      %v390 = vpop.f32.mrf.mxu0
      %v391 = vadd.f32 0.0, %v390
      %392 = vmatmul.f32.gmra.mxu0 %v324
      %v393 = vpop.f32.mrf.mxu0
      %v394 = vadd.f32 0.0, %v393
      %395 = vmatmul.f32.gmra.mxu0 %v327
      %v396 = vpop.f32.mrf.mxu0
      %v397 = vadd.f32 0.0, %v396
      %398 = vdwg.mxu0
      %399 = vmatpush.msra.mxu0 0.0
      %400 = vmatpush.msra.mxu0 0.0
      %401 = vmatpush.msra.mxu0 0.0
      %402 = vmatpush.msra.mxu0 0.0
      %403 = vmatpush.msra.mxu0 0.0
      %404 = vmatpush.msra.mxu0 0.0
      %405 = vmatpush.msra.mxu0 0.0
      %406 = vmatpush.msra.mxu0 0.0
      %407 = vmatpush.msra.mxu0 0.0
      %408 = vmatpush.msra.mxu0 0.0
      %409 = vmatpush.msra.mxu0 0.0
      %410 = vmatpush.msra.mxu0 0.0
      %411 = vmatpush.msra.mxu0 0.0
      %412 = vmatpush.msra.mxu0 0.0
      %413 = vmatpush.msra.mxu0 0.0
      %414 = vmatpush.msra.mxu0 %v332
      %415 = vmatmul.f32.gmra.mxu0 %v282
      %v416 = vpop.f32.mrf.mxu0
      %v417 = vadd.f32 0.0, %v416
      %418 = vmatmul.f32.gmra.mxu0 %v285
      %v419 = vpop.f32.mrf.mxu0
      %v420 = vadd.f32 0.0, %v419
      %421 = vmatmul.f32.gmra.mxu0 %v288
      %v422 = vpop.f32.mrf.mxu0
      %v423 = vadd.f32 0.0, %v422
      %424 = vmatmul.f32.gmra.mxu0 %v291
      %v425 = vpop.f32.mrf.mxu0
      %v426 = vadd.f32 0.0, %v425
      %427 = vmatmul.f32.gmra.mxu0 %v294
      %v428 = vpop.f32.mrf.mxu0
      %v429 = vadd.f32 0.0, %v428
      %430 = vmatmul.f32.gmra.mxu0 %v297
      %v431 = vpop.f32.mrf.mxu0
      %v432 = vadd.f32 0.0, %v431
      %433 = vmatmul.f32.gmra.mxu0 %v300
      %v434 = vpop.f32.mrf.mxu0
      %v435 = vadd.f32 0.0, %v434
      %436 = vmatmul.f32.gmra.mxu0 %v303
      %v437 = vpop.f32.mrf.mxu0
      %v438 = vadd.f32 0.0, %v437
      %439 = vmatmul.f32.gmra.mxu0 %v306
      %v440 = vpop.f32.mrf.mxu0
      %v441 = vadd.f32 0.0, %v440
      %442 = vmatmul.f32.gmra.mxu0 %v309
      %v443 = vpop.f32.mrf.mxu0
      %v444 = vadd.f32 0.0, %v443
      %445 = vmatmul.f32.gmra.mxu0 %v312
      %v446 = vpop.f32.mrf.mxu0
      %v447 = vadd.f32 0.0, %v446
      %448 = vmatmul.f32.gmra.mxu0 %v315
      %v449 = vpop.f32.mrf.mxu0
      %v450 = vadd.f32 0.0, %v449
      %451 = vmatmul.f32.gmra.mxu0 %v318
      %v452 = vpop.f32.mrf.mxu0
      %v453 = vadd.f32 0.0, %v452
      %454 = vmatmul.f32.gmra.mxu0 %v321
      %v455 = vpop.f32.mrf.mxu0
      %v456 = vadd.f32 0.0, %v455
      %457 = vmatmul.f32.gmra.mxu0 %v324
      %v458 = vpop.f32.mrf.mxu0
      %v459 = vadd.f32 0.0, %v458
      %460 = vmatmul.f32.gmra.mxu0 %v327
      %v461 = vpop.f32.mrf.mxu0
      %v462 = vadd.f32 0.0, %v461
      %463 = vdwg.mxu0
      %v464 = vmul.f32 %v352, 2.0
      %v465 = vmul.f32 %v417, 2.0
      %v466 = vmul.f32 %v355, 2.0
      %v467 = vmul.f32 %v420, 2.0
      %v468 = vmul.f32 %v358, 2.0
      %v469 = vmul.f32 %v423, 2.0
      %v470 = vmul.f32 %v361, 2.0
      %v471 = vmul.f32 %v426, 2.0
      %v472 = vmul.f32 %v364, 2.0
      %v473 = vmul.f32 %v429, 2.0
      %v474 = vmul.f32 %v367, 2.0
      %v475 = vmul.f32 %v432, 2.0
      %v476 = vmul.f32 %v370, 2.0
      %v477 = vmul.f32 %v435, 2.0
      %v478 = vmul.f32 %v373, 2.0
      %v479 = vmul.f32 %v438, 2.0
      %v480 = vmul.f32 %v376, 2.0
      %v481 = vmul.f32 %v441, 2.0
      %v482 = vmul.f32 %v379, 2.0
      %v483 = vmul.f32 %v444, 2.0
      %v484 = vmul.f32 %v382, 2.0
      %v485 = vmul.f32 %v447, 2.0
      %v486 = vmul.f32 %v385, 2.0
      %v487 = vmul.f32 %v450, 2.0
      %v488 = vmul.f32 %v388, 2.0
      %v489 = vmul.f32 %v453, 2.0
      %v490 = vmul.f32 %v391, 2.0
      %v491 = vmul.f32 %v456, 2.0
      %v492 = vmul.f32 %v394, 2.0
      %v493 = vmul.f32 %v459, 2.0
      %v494 = vmul.f32 %v397, 2.0
      %v495 = vmul.f32 %v462, 2.0
      %v496 = vld [vmem:[%s231] sm:$0x3]
      %v498 = vperm.slane %v496, 0
      %v499 = vperm.slane %v496, 1
      %v502 = vsub.f32 %v464, %v498
      %v503 = vsub.f32 %v465, %v499
      %v504 = vsub.f32 %v466, %v498
      %v505 = vsub.f32 %v467, %v499
      %v506 = vsub.f32 %v468, %v498
      %v507 = vsub.f32 %v469, %v499
      %v508 = vsub.f32 %v470, %v498
      %v509 = vsub.f32 %v471, %v499
      %v510 = vsub.f32 %v472, %v498
      %v511 = vsub.f32 %v473, %v499
      %v512 = vsub.f32 %v474, %v498
      %v513 = vsub.f32 %v475, %v499
      %v514 = vsub.f32 %v476, %v498
      %v515 = vsub.f32 %v477, %v499
      %v516 = vsub.f32 %v478, %v498
      %v517 = vsub.f32 %v479, %v499
      %v518 = vsub.f32 %v480, %v498
      %v519 = vsub.f32 %v481, %v499
      %v520 = vsub.f32 %v482, %v498
      %v521 = vsub.f32 %v483, %v499
      %v522 = vsub.f32 %v484, %v498
      %v523 = vsub.f32 %v485, %v499
      %v524 = vsub.f32 %v486, %v498
      %v525 = vsub.f32 %v487, %v499
      %v526 = vsub.f32 %v488, %v498
      %v527 = vsub.f32 %v489, %v499
      %v528 = vsub.f32 %v490, %v498
      %v529 = vsub.f32 %v491, %v499
      %v530 = vsub.f32 %v492, %v498
      %v531 = vsub.f32 %v493, %v499
      %v532 = vsub.f32 %v494, %v498
      %v533 = vsub.f32 %v495, %v499
      %v534 = vlaneseq
      %v535 = vand.u32 %v534, 127
      %v536 = vadd.s32 %v535, 128
      %v537 = vcvt.s32.f32 %v535
      %v538 = vcvt.s32.f32 %v536
      %v539 = vmax.f32 %v502, %v503
      %540 = vmax.xlane.f32.xlu0 %v539
      %v541 = vpop.xlane.xlu0 %540
      %v542 = vmax.f32 %v504, %v505
      %543 = vmax.xlane.f32.xlu0 %v542
      %v544 = vpop.xlane.xlu0 %543
      %v545 = vmax.f32 %v506, %v507
      %546 = vmax.xlane.f32.xlu0 %v545
      %v547 = vpop.xlane.xlu0 %546
      %v548 = vmax.f32 %v508, %v509
      %549 = vmax.xlane.f32.xlu0 %v548
      %v550 = vpop.xlane.xlu0 %549
      %v551 = vmax.f32 %v510, %v511
      %552 = vmax.xlane.f32.xlu0 %v551
      %v553 = vpop.xlane.xlu0 %552
      %v554 = vmax.f32 %v512, %v513
      %555 = vmax.xlane.f32.xlu0 %v554
      %v556 = vpop.xlane.xlu0 %555
      %v557 = vmax.f32 %v514, %v515
      %558 = vmax.xlane.f32.xlu0 %v557
      %v559 = vpop.xlane.xlu0 %558
      %v560 = vmax.f32 %v516, %v517
      %561 = vmax.xlane.f32.xlu0 %v560
      %v562 = vpop.xlane.xlu0 %561
      %v563 = vmax.f32 %v518, %v519
      %564 = vmax.xlane.f32.xlu0 %v563
      %v565 = vpop.xlane.xlu0 %564
      %v566 = vmax.f32 %v520, %v521
      %567 = vmax.xlane.f32.xlu0 %v566
      %v568 = vpop.xlane.xlu0 %567
      %v569 = vmax.f32 %v522, %v523
      %570 = vmax.xlane.f32.xlu0 %v569
      %v571 = vpop.xlane.xlu0 %570
      %v572 = vmax.f32 %v524, %v525
      %573 = vmax.xlane.f32.xlu0 %v572
      %v574 = vpop.xlane.xlu0 %573
      %v575 = vmax.f32 %v526, %v527
      %576 = vmax.xlane.f32.xlu0 %v575
      %v577 = vpop.xlane.xlu0 %576
      %v578 = vmax.f32 %v528, %v529
      %579 = vmax.xlane.f32.xlu0 %v578
      %v580 = vpop.xlane.xlu0 %579
      %v581 = vmax.f32 %v530, %v531
      %582 = vmax.xlane.f32.xlu0 %v581
      %v583 = vpop.xlane.xlu0 %582
      %v584 = vmax.f32 %v532, %v533
      %585 = vmax.xlane.f32.xlu0 %v584
      %v586 = vpop.xlane.xlu0 %585
      %vm587 = vcmp.ge.f32.partialorder %v502, %v541
      %vm588 = vcmp.ge.f32.partialorder %v503, %v541
      %vm589 = vcmp.ge.f32.partialorder %v504, %v544
      %vm590 = vcmp.ge.f32.partialorder %v505, %v544
      %vm591 = vcmp.ge.f32.partialorder %v506, %v547
      %vm592 = vcmp.ge.f32.partialorder %v507, %v547
      %vm593 = vcmp.ge.f32.partialorder %v508, %v550
      %vm594 = vcmp.ge.f32.partialorder %v509, %v550
      %vm595 = vcmp.ge.f32.partialorder %v510, %v553
      %vm596 = vcmp.ge.f32.partialorder %v511, %v553
      %vm597 = vcmp.ge.f32.partialorder %v512, %v556
      %vm598 = vcmp.ge.f32.partialorder %v513, %v556
      %vm599 = vcmp.ge.f32.partialorder %v514, %v559
      %vm600 = vcmp.ge.f32.partialorder %v515, %v559
      %vm601 = vcmp.ge.f32.partialorder %v516, %v562
      %vm602 = vcmp.ge.f32.partialorder %v517, %v562
      %vm603 = vcmp.ge.f32.partialorder %v518, %v565
      %vm604 = vcmp.ge.f32.partialorder %v519, %v565
      %vm605 = vcmp.ge.f32.partialorder %v520, %v568
      %vm606 = vcmp.ge.f32.partialorder %v521, %v568
      %vm607 = vcmp.ge.f32.partialorder %v522, %v571
      %vm608 = vcmp.ge.f32.partialorder %v523, %v571
      %vm609 = vcmp.ge.f32.partialorder %v524, %v574
      %vm610 = vcmp.ge.f32.partialorder %v525, %v574
      %vm611 = vcmp.ge.f32.partialorder %v526, %v577
      %vm612 = vcmp.ge.f32.partialorder %v527, %v577
      %vm613 = vcmp.ge.f32.partialorder %v528, %v580
      %vm614 = vcmp.ge.f32.partialorder %v529, %v580
      %vm615 = vcmp.ge.f32.partialorder %v530, %v583
      %vm616 = vcmp.ge.f32.partialorder %v531, %v583
      %vm617 = vcmp.ge.f32.partialorder %v532, %v586
      %vm618 = vcmp.ge.f32.partialorder %v533, %v586
      %v619 = vsel %vm587, %v537, 256.0
      %v620 = vsel %vm588, %v538, 256.0
      %v621 = vsel %vm589, %v537, 256.0
      %v622 = vsel %vm590, %v538, 256.0
      %v623 = vsel %vm591, %v537, 256.0
      %v624 = vsel %vm592, %v538, 256.0
      %v625 = vsel %vm593, %v537, 256.0
      %v626 = vsel %vm594, %v538, 256.0
      %v627 = vsel %vm595, %v537, 256.0
      %v628 = vsel %vm596, %v538, 256.0
      %v629 = vsel %vm597, %v537, 256.0
      %v630 = vsel %vm598, %v538, 256.0
      %v631 = vsel %vm599, %v537, 256.0
      %v632 = vsel %vm600, %v538, 256.0
      %v633 = vsel %vm601, %v537, 256.0
      %v634 = vsel %vm602, %v538, 256.0
      %v635 = vsel %vm603, %v537, 256.0
      %v636 = vsel %vm604, %v538, 256.0
      %v637 = vsel %vm605, %v537, 256.0
      %v638 = vsel %vm606, %v538, 256.0
      %v639 = vsel %vm607, %v537, 256.0
      %v640 = vsel %vm608, %v538, 256.0
      %v641 = vsel %vm609, %v537, 256.0
      %v642 = vsel %vm610, %v538, 256.0
      %v643 = vsel %vm611, %v537, 256.0
      %v644 = vsel %vm612, %v538, 256.0
      %v645 = vsel %vm613, %v537, 256.0
      %v646 = vsel %vm614, %v538, 256.0
      %v647 = vsel %vm615, %v537, 256.0
      %v648 = vsel %vm616, %v538, 256.0
      %v649 = vsel %vm617, %v537, 256.0
      %v650 = vsel %vm618, %v538, 256.0
      %v651 = vmin.f32 %v619, %v620
      %652 = vmin.xlane.f32.xlu0 %v651
      %v653 = vpop.xlane.xlu0 %652
      %v654 = vmin.f32 %v621, %v622
      %655 = vmin.xlane.f32.xlu0 %v654
      %v656 = vpop.xlane.xlu0 %655
      %v657 = vmin.f32 %v623, %v624
      %658 = vmin.xlane.f32.xlu0 %v657
      %v659 = vpop.xlane.xlu0 %658
      %v660 = vmin.f32 %v625, %v626
      %661 = vmin.xlane.f32.xlu0 %v660
      %v662 = vpop.xlane.xlu0 %661
      %v663 = vmin.f32 %v627, %v628
      %664 = vmin.xlane.f32.xlu0 %v663
      %v665 = vpop.xlane.xlu0 %664
      %v666 = vmin.f32 %v629, %v630
      %667 = vmin.xlane.f32.xlu0 %v666
      %v668 = vpop.xlane.xlu0 %667
      %v669 = vmin.f32 %v631, %v632
      %670 = vmin.xlane.f32.xlu0 %v669
      %v671 = vpop.xlane.xlu0 %670
      %v672 = vmin.f32 %v633, %v634
      %673 = vmin.xlane.f32.xlu0 %v672
      %v674 = vpop.xlane.xlu0 %673
      %v675 = vmin.f32 %v635, %v636
      %676 = vmin.xlane.f32.xlu0 %v675
      %v677 = vpop.xlane.xlu0 %676
      %v678 = vmin.f32 %v637, %v638
      %679 = vmin.xlane.f32.xlu0 %v678
      %v680 = vpop.xlane.xlu0 %679
      %v681 = vmin.f32 %v639, %v640
      %682 = vmin.xlane.f32.xlu0 %v681
      %v683 = vpop.xlane.xlu0 %682
      %v684 = vmin.f32 %v641, %v642
      %685 = vmin.xlane.f32.xlu0 %v684
      %v686 = vpop.xlane.xlu0 %685
      %v687 = vmin.f32 %v643, %v644
      %688 = vmin.xlane.f32.xlu0 %v687
      %v689 = vpop.xlane.xlu0 %688
      %v690 = vmin.f32 %v645, %v646
      %691 = vmin.xlane.f32.xlu0 %v690
      %v692 = vpop.xlane.xlu0 %691
      %v693 = vmin.f32 %v647, %v648
      %694 = vmin.xlane.f32.xlu0 %v693
      %v695 = vpop.xlane.xlu0 %694
      %v696 = vmin.f32 %v649, %v650
      %697 = vmin.xlane.f32.xlu0 %v696
      %v698 = vpop.xlane.xlu0 %697
      %vm699 = vcmp.eq.s32.totalorder %v535, 0
      %v700 = vcvt.f32.s32.to.zero.pseudo %v653
      %v701 = vcvt.f32.s32.to.zero.pseudo %v656
      %v702 = vcvt.f32.s32.to.zero.pseudo %v659
      %v703 = vcvt.f32.s32.to.zero.pseudo %v662
      %v704 = vcvt.f32.s32.to.zero.pseudo %v665
      %v705 = vcvt.f32.s32.to.zero.pseudo %v668
      %v706 = vcvt.f32.s32.to.zero.pseudo %v671
      %v707 = vcvt.f32.s32.to.zero.pseudo %v674
      %v708 = vcvt.f32.s32.to.zero.pseudo %v677
      %v709 = vcvt.f32.s32.to.zero.pseudo %v680
      %v710 = vcvt.f32.s32.to.zero.pseudo %v683
      %v711 = vcvt.f32.s32.to.zero.pseudo %v686
      %v712 = vcvt.f32.s32.to.zero.pseudo %v689
      %v713 = vcvt.f32.s32.to.zero.pseudo %v692
      %v714 = vcvt.f32.s32.to.zero.pseudo %v695
      %v715 = vcvt.f32.s32.to.zero.pseudo %v698
      %v716 = vsel %vm699, %v700, 0
      %v717 = vsel %vm699, %v701, 0
      %v718 = vsel %vm699, %v702, 0
      %v719 = vsel %vm699, %v703, 0
      %v720 = vsel %vm699, %v704, 0
      %v721 = vsel %vm699, %v705, 0
      %v722 = vsel %vm699, %v706, 0
      %v723 = vsel %vm699, %v707, 0
      %v724 = vsel %vm699, %v708, 0
      %v725 = vsel %vm699, %v709, 0
      %v726 = vsel %vm699, %v710, 0
      %v727 = vsel %vm699, %v711, 0
      %v728 = vsel %vm699, %v712, 0
      %v729 = vsel %vm699, %v713, 0
      %v730 = vsel %vm699, %v714, 0
      %v731 = vsel %vm699, %v715, 0
      %vm732 = vcmp.eq.f32.partialorder %v537, %v653
      %vm733 = vcmp.eq.f32.partialorder %v538, %v653
      %vm734 = vcmp.eq.f32.partialorder %v537, %v656
      %vm735 = vcmp.eq.f32.partialorder %v538, %v656
      %vm736 = vcmp.eq.f32.partialorder %v537, %v659
      %vm737 = vcmp.eq.f32.partialorder %v538, %v659
      %vm738 = vcmp.eq.f32.partialorder %v537, %v662
      %vm739 = vcmp.eq.f32.partialorder %v538, %v662
      %vm740 = vcmp.eq.f32.partialorder %v537, %v665
      %vm741 = vcmp.eq.f32.partialorder %v538, %v665
      %vm742 = vcmp.eq.f32.partialorder %v537, %v668
      %vm743 = vcmp.eq.f32.partialorder %v538, %v668
      %vm744 = vcmp.eq.f32.partialorder %v537, %v671
      %vm745 = vcmp.eq.f32.partialorder %v538, %v671
      %vm746 = vcmp.eq.f32.partialorder %v537, %v674
      %vm747 = vcmp.eq.f32.partialorder %v538, %v674
      %vm748 = vcmp.eq.f32.partialorder %v537, %v677
      %vm749 = vcmp.eq.f32.partialorder %v538, %v677
      %vm750 = vcmp.eq.f32.partialorder %v537, %v680
      %vm751 = vcmp.eq.f32.partialorder %v538, %v680
      %vm752 = vcmp.eq.f32.partialorder %v537, %v683
      %vm753 = vcmp.eq.f32.partialorder %v538, %v683
      %vm754 = vcmp.eq.f32.partialorder %v537, %v686
      %vm755 = vcmp.eq.f32.partialorder %v538, %v686
      %vm756 = vcmp.eq.f32.partialorder %v537, %v689
      %vm757 = vcmp.eq.f32.partialorder %v538, %v689
      %vm758 = vcmp.eq.f32.partialorder %v537, %v692
      %vm759 = vcmp.eq.f32.partialorder %v538, %v692
      %vm760 = vcmp.eq.f32.partialorder %v537, %v695
      %vm761 = vcmp.eq.f32.partialorder %v538, %v695
      %vm762 = vcmp.eq.f32.partialorder %v537, %v698
      %vm763 = vcmp.eq.f32.partialorder %v538, %v698
      %v764 = vsel %vm732, -1e+30, %v502
      %v765 = vsel %vm733, -1e+30, %v503
      %v766 = vsel %vm734, -1e+30, %v504
      %v767 = vsel %vm735, -1e+30, %v505
      %v768 = vsel %vm736, -1e+30, %v506
      %v769 = vsel %vm737, -1e+30, %v507
      %v770 = vsel %vm738, -1e+30, %v508
      %v771 = vsel %vm739, -1e+30, %v509
      %v772 = vsel %vm740, -1e+30, %v510
      %v773 = vsel %vm741, -1e+30, %v511
      %v774 = vsel %vm742, -1e+30, %v512
      %v775 = vsel %vm743, -1e+30, %v513
      %v776 = vsel %vm744, -1e+30, %v514
      %v777 = vsel %vm745, -1e+30, %v515
      %v778 = vsel %vm746, -1e+30, %v516
      %v779 = vsel %vm747, -1e+30, %v517
      %v780 = vsel %vm748, -1e+30, %v518
      %v781 = vsel %vm749, -1e+30, %v519
      %v782 = vsel %vm750, -1e+30, %v520
      %v783 = vsel %vm751, -1e+30, %v521
      %v784 = vsel %vm752, -1e+30, %v522
      %v785 = vsel %vm753, -1e+30, %v523
      %v786 = vsel %vm754, -1e+30, %v524
      %v787 = vsel %vm755, -1e+30, %v525
      %v788 = vsel %vm756, -1e+30, %v526
      %v789 = vsel %vm757, -1e+30, %v527
      %v790 = vsel %vm758, -1e+30, %v528
      %v791 = vsel %vm759, -1e+30, %v529
      %v792 = vsel %vm760, -1e+30, %v530
      %v793 = vsel %vm761, -1e+30, %v531
      %v794 = vsel %vm762, -1e+30, %v532
      %v795 = vsel %vm763, -1e+30, %v533
      %v796 = vmax.f32 %v764, %v765
      %797 = vmax.xlane.f32.xlu0 %v796
      %v798 = vpop.xlane.xlu0 %797
      %v799 = vmax.f32 %v766, %v767
      %800 = vmax.xlane.f32.xlu0 %v799
      %v801 = vpop.xlane.xlu0 %800
      %v802 = vmax.f32 %v768, %v769
      %803 = vmax.xlane.f32.xlu0 %v802
      %v804 = vpop.xlane.xlu0 %803
      %v805 = vmax.f32 %v770, %v771
      %806 = vmax.xlane.f32.xlu0 %v805
      %v807 = vpop.xlane.xlu0 %806
      %v808 = vmax.f32 %v772, %v773
      %809 = vmax.xlane.f32.xlu0 %v808
      %v810 = vpop.xlane.xlu0 %809
      %v811 = vmax.f32 %v774, %v775
      %812 = vmax.xlane.f32.xlu0 %v811
      %v813 = vpop.xlane.xlu0 %812
      %v814 = vmax.f32 %v776, %v777
      %815 = vmax.xlane.f32.xlu0 %v814
      %v816 = vpop.xlane.xlu0 %815
      %v817 = vmax.f32 %v778, %v779
      %818 = vmax.xlane.f32.xlu0 %v817
      %v819 = vpop.xlane.xlu0 %818
      %v820 = vmax.f32 %v780, %v781
      %821 = vmax.xlane.f32.xlu0 %v820
      %v822 = vpop.xlane.xlu0 %821
      %v823 = vmax.f32 %v782, %v783
      %824 = vmax.xlane.f32.xlu0 %v823
      %v825 = vpop.xlane.xlu0 %824
      %v826 = vmax.f32 %v784, %v785
      %827 = vmax.xlane.f32.xlu0 %v826
      %v828 = vpop.xlane.xlu0 %827
      %v829 = vmax.f32 %v786, %v787
      %830 = vmax.xlane.f32.xlu0 %v829
      %v831 = vpop.xlane.xlu0 %830
      %v832 = vmax.f32 %v788, %v789
      %833 = vmax.xlane.f32.xlu0 %v832
      %v834 = vpop.xlane.xlu0 %833
      %v835 = vmax.f32 %v790, %v791
      %836 = vmax.xlane.f32.xlu0 %v835
      %v837 = vpop.xlane.xlu0 %836
      %v838 = vmax.f32 %v792, %v793
      %839 = vmax.xlane.f32.xlu0 %v838
      %v840 = vpop.xlane.xlu0 %839
      %v841 = vmax.f32 %v794, %v795
      %842 = vmax.xlane.f32.xlu0 %v841
      %v843 = vpop.xlane.xlu0 %842
      %vm844 = vcmp.ge.f32.partialorder %v764, %v798
      %vm845 = vcmp.ge.f32.partialorder %v765, %v798
      %vm846 = vcmp.ge.f32.partialorder %v766, %v801
      %vm847 = vcmp.ge.f32.partialorder %v767, %v801
      %vm848 = vcmp.ge.f32.partialorder %v768, %v804
      %vm849 = vcmp.ge.f32.partialorder %v769, %v804
      %vm850 = vcmp.ge.f32.partialorder %v770, %v807
      %vm851 = vcmp.ge.f32.partialorder %v771, %v807
      %vm852 = vcmp.ge.f32.partialorder %v772, %v810
      %vm853 = vcmp.ge.f32.partialorder %v773, %v810
      %vm854 = vcmp.ge.f32.partialorder %v774, %v813
      %vm855 = vcmp.ge.f32.partialorder %v775, %v813
      %vm856 = vcmp.ge.f32.partialorder %v776, %v816
      %vm857 = vcmp.ge.f32.partialorder %v777, %v816
      %vm858 = vcmp.ge.f32.partialorder %v778, %v819
      %vm859 = vcmp.ge.f32.partialorder %v779, %v819
      %vm860 = vcmp.ge.f32.partialorder %v780, %v822
      %vm861 = vcmp.ge.f32.partialorder %v781, %v822
      %vm862 = vcmp.ge.f32.partialorder %v782, %v825
      %vm863 = vcmp.ge.f32.partialorder %v783, %v825
      %vm864 = vcmp.ge.f32.partialorder %v784, %v828
      %vm865 = vcmp.ge.f32.partialorder %v785, %v828
      %vm866 = vcmp.ge.f32.partialorder %v786, %v831
      %vm867 = vcmp.ge.f32.partialorder %v787, %v831
      %vm868 = vcmp.ge.f32.partialorder %v788, %v834
      %vm869 = vcmp.ge.f32.partialorder %v789, %v834
      %vm870 = vcmp.ge.f32.partialorder %v790, %v837
      %vm871 = vcmp.ge.f32.partialorder %v791, %v837
      %vm872 = vcmp.ge.f32.partialorder %v792, %v840
      %vm873 = vcmp.ge.f32.partialorder %v793, %v840
      %vm874 = vcmp.ge.f32.partialorder %v794, %v843
      %vm875 = vcmp.ge.f32.partialorder %v795, %v843
      %v876 = vsel %vm844, %v537, 256.0
      %v877 = vsel %vm845, %v538, 256.0
      %v878 = vsel %vm846, %v537, 256.0
      %v879 = vsel %vm847, %v538, 256.0
      %v880 = vsel %vm848, %v537, 256.0
      %v881 = vsel %vm849, %v538, 256.0
      %v882 = vsel %vm850, %v537, 256.0
      %v883 = vsel %vm851, %v538, 256.0
      %v884 = vsel %vm852, %v537, 256.0
      %v885 = vsel %vm853, %v538, 256.0
      %v886 = vsel %vm854, %v537, 256.0
      %v887 = vsel %vm855, %v538, 256.0
      %v888 = vsel %vm856, %v537, 256.0
      %v889 = vsel %vm857, %v538, 256.0
      %v890 = vsel %vm858, %v537, 256.0
      %v891 = vsel %vm859, %v538, 256.0
      %v892 = vsel %vm860, %v537, 256.0
      %v893 = vsel %vm861, %v538, 256.0
      %v894 = vsel %vm862, %v537, 256.0
      %v895 = vsel %vm863, %v538, 256.0
      %v896 = vsel %vm864, %v537, 256.0
      %v897 = vsel %vm865, %v538, 256.0
      %v898 = vsel %vm866, %v537, 256.0
      %v899 = vsel %vm867, %v538, 256.0
      %v900 = vsel %vm868, %v537, 256.0
      %v901 = vsel %vm869, %v538, 256.0
      %v902 = vsel %vm870, %v537, 256.0
      %v903 = vsel %vm871, %v538, 256.0
      %v904 = vsel %vm872, %v537, 256.0
      %v905 = vsel %vm873, %v538, 256.0
      %v906 = vsel %vm874, %v537, 256.0
      %v907 = vsel %vm875, %v538, 256.0
      %v908 = vmin.f32 %v876, %v877
      %909 = vmin.xlane.f32.xlu0 %v908
      %v910 = vpop.xlane.xlu0 %909
      %v911 = vmin.f32 %v878, %v879
      %912 = vmin.xlane.f32.xlu0 %v911
      %v913 = vpop.xlane.xlu0 %912
      %v914 = vmin.f32 %v880, %v881
      %915 = vmin.xlane.f32.xlu0 %v914
      %v916 = vpop.xlane.xlu0 %915
      %v917 = vmin.f32 %v882, %v883
      %918 = vmin.xlane.f32.xlu0 %v917
      %v919 = vpop.xlane.xlu0 %918
      %v920 = vmin.f32 %v884, %v885
      %921 = vmin.xlane.f32.xlu0 %v920
      %v922 = vpop.xlane.xlu0 %921
      %v923 = vmin.f32 %v886, %v887
      %924 = vmin.xlane.f32.xlu0 %v923
      %v925 = vpop.xlane.xlu0 %924
      %v926 = vmin.f32 %v888, %v889
      %927 = vmin.xlane.f32.xlu0 %v926
      %v928 = vpop.xlane.xlu0 %927
      %v929 = vmin.f32 %v890, %v891
      %930 = vmin.xlane.f32.xlu0 %v929
      %v931 = vpop.xlane.xlu0 %930
      %v932 = vmin.f32 %v892, %v893
      %933 = vmin.xlane.f32.xlu0 %v932
      %v934 = vpop.xlane.xlu0 %933
      %v935 = vmin.f32 %v894, %v895
      %936 = vmin.xlane.f32.xlu0 %v935
      %v937 = vpop.xlane.xlu0 %936
      %v938 = vmin.f32 %v896, %v897
      %939 = vmin.xlane.f32.xlu0 %v938
      %v940 = vpop.xlane.xlu0 %939
      %v941 = vmin.f32 %v898, %v899
      %942 = vmin.xlane.f32.xlu0 %v941
      %v943 = vpop.xlane.xlu0 %942
      %v944 = vmin.f32 %v900, %v901
      %945 = vmin.xlane.f32.xlu0 %v944
      %v946 = vpop.xlane.xlu0 %945
      %v947 = vmin.f32 %v902, %v903
      %948 = vmin.xlane.f32.xlu0 %v947
      %v949 = vpop.xlane.xlu0 %948
      %v950 = vmin.f32 %v904, %v905
      %951 = vmin.xlane.f32.xlu0 %v950
      %v952 = vpop.xlane.xlu0 %951
      %v953 = vmin.f32 %v906, %v907
      %954 = vmin.xlane.f32.xlu0 %v953
      %v955 = vpop.xlane.xlu0 %954
      %vm956 = vcmp.eq.s32.totalorder %v535, 1
      %v957 = vcvt.f32.s32.to.zero.pseudo %v910
      %v958 = vcvt.f32.s32.to.zero.pseudo %v913
      %v959 = vcvt.f32.s32.to.zero.pseudo %v916
      %v960 = vcvt.f32.s32.to.zero.pseudo %v919
      %v961 = vcvt.f32.s32.to.zero.pseudo %v922
      %v962 = vcvt.f32.s32.to.zero.pseudo %v925
      %v963 = vcvt.f32.s32.to.zero.pseudo %v928
      %v964 = vcvt.f32.s32.to.zero.pseudo %v931
      %v965 = vcvt.f32.s32.to.zero.pseudo %v934
      %v966 = vcvt.f32.s32.to.zero.pseudo %v937
      %v967 = vcvt.f32.s32.to.zero.pseudo %v940
      %v968 = vcvt.f32.s32.to.zero.pseudo %v943
      %v969 = vcvt.f32.s32.to.zero.pseudo %v946
      %v970 = vcvt.f32.s32.to.zero.pseudo %v949
      %v971 = vcvt.f32.s32.to.zero.pseudo %v952
      %v972 = vcvt.f32.s32.to.zero.pseudo %v955
      %v973 = vsel %vm956, %v957, %v716
      %v974 = vsel %vm956, %v958, %v717
      %v975 = vsel %vm956, %v959, %v718
      %v976 = vsel %vm956, %v960, %v719
      %v977 = vsel %vm956, %v961, %v720
      %v978 = vsel %vm956, %v962, %v721
      %v979 = vsel %vm956, %v963, %v722
      %v980 = vsel %vm956, %v964, %v723
      %v981 = vsel %vm956, %v965, %v724
      %v982 = vsel %vm956, %v966, %v725
      %v983 = vsel %vm956, %v967, %v726
      %v984 = vsel %vm956, %v968, %v727
      %v985 = vsel %vm956, %v969, %v728
      %v986 = vsel %vm956, %v970, %v729
      %v987 = vsel %vm956, %v971, %v730
      %v988 = vsel %vm956, %v972, %v731
      %vm989 = vcmp.eq.f32.partialorder %v537, %v910
      %vm990 = vcmp.eq.f32.partialorder %v538, %v910
      %vm991 = vcmp.eq.f32.partialorder %v537, %v913
      %vm992 = vcmp.eq.f32.partialorder %v538, %v913
      %vm993 = vcmp.eq.f32.partialorder %v537, %v916
      %vm994 = vcmp.eq.f32.partialorder %v538, %v916
      %vm995 = vcmp.eq.f32.partialorder %v537, %v919
      %vm996 = vcmp.eq.f32.partialorder %v538, %v919
      %vm997 = vcmp.eq.f32.partialorder %v537, %v922
      %vm998 = vcmp.eq.f32.partialorder %v538, %v922
      %vm999 = vcmp.eq.f32.partialorder %v537, %v925
      %vm1000 = vcmp.eq.f32.partialorder %v538, %v925
      %vm1001 = vcmp.eq.f32.partialorder %v537, %v928
      %vm1002 = vcmp.eq.f32.partialorder %v538, %v928
      %vm1003 = vcmp.eq.f32.partialorder %v537, %v931
      %vm1004 = vcmp.eq.f32.partialorder %v538, %v931
      %vm1005 = vcmp.eq.f32.partialorder %v537, %v934
      %vm1006 = vcmp.eq.f32.partialorder %v538, %v934
      %vm1007 = vcmp.eq.f32.partialorder %v537, %v937
      %vm1008 = vcmp.eq.f32.partialorder %v538, %v937
      %vm1009 = vcmp.eq.f32.partialorder %v537, %v940
      %vm1010 = vcmp.eq.f32.partialorder %v538, %v940
      %vm1011 = vcmp.eq.f32.partialorder %v537, %v943
      %vm1012 = vcmp.eq.f32.partialorder %v538, %v943
      %vm1013 = vcmp.eq.f32.partialorder %v537, %v946
      %vm1014 = vcmp.eq.f32.partialorder %v538, %v946
      %vm1015 = vcmp.eq.f32.partialorder %v537, %v949
      %vm1016 = vcmp.eq.f32.partialorder %v538, %v949
      %vm1017 = vcmp.eq.f32.partialorder %v537, %v952
      %vm1018 = vcmp.eq.f32.partialorder %v538, %v952
      %vm1019 = vcmp.eq.f32.partialorder %v537, %v955
      %vm1020 = vcmp.eq.f32.partialorder %v538, %v955
      %v1021 = vsel %vm989, -1e+30, %v764
      %v1022 = vsel %vm990, -1e+30, %v765
      %v1023 = vsel %vm991, -1e+30, %v766
      %v1024 = vsel %vm992, -1e+30, %v767
      %v1025 = vsel %vm993, -1e+30, %v768
      %v1026 = vsel %vm994, -1e+30, %v769
      %v1027 = vsel %vm995, -1e+30, %v770
      %v1028 = vsel %vm996, -1e+30, %v771
      %v1029 = vsel %vm997, -1e+30, %v772
      %v1030 = vsel %vm998, -1e+30, %v773
      %v1031 = vsel %vm999, -1e+30, %v774
      %v1032 = vsel %vm1000, -1e+30, %v775
      %v1033 = vsel %vm1001, -1e+30, %v776
      %v1034 = vsel %vm1002, -1e+30, %v777
      %v1035 = vsel %vm1003, -1e+30, %v778
      %v1036 = vsel %vm1004, -1e+30, %v779
      %v1037 = vsel %vm1005, -1e+30, %v780
      %v1038 = vsel %vm1006, -1e+30, %v781
      %v1039 = vsel %vm1007, -1e+30, %v782
      %v1040 = vsel %vm1008, -1e+30, %v783
      %v1041 = vsel %vm1009, -1e+30, %v784
      %v1042 = vsel %vm1010, -1e+30, %v785
      %v1043 = vsel %vm1011, -1e+30, %v786
      %v1044 = vsel %vm1012, -1e+30, %v787
      %v1045 = vsel %vm1013, -1e+30, %v788
      %v1046 = vsel %vm1014, -1e+30, %v789
      %v1047 = vsel %vm1015, -1e+30, %v790
      %v1048 = vsel %vm1016, -1e+30, %v791
      %v1049 = vsel %vm1017, -1e+30, %v792
      %v1050 = vsel %vm1018, -1e+30, %v793
      %v1051 = vsel %vm1019, -1e+30, %v794
      %v1052 = vsel %vm1020, -1e+30, %v795
      %v1053 = vmax.f32 %v1021, %v1022
      %1054 = vmax.xlane.f32.xlu0 %v1053
      %v1055 = vpop.xlane.xlu0 %1054
      %v1056 = vmax.f32 %v1023, %v1024
      %1057 = vmax.xlane.f32.xlu0 %v1056
      %v1058 = vpop.xlane.xlu0 %1057
      %v1059 = vmax.f32 %v1025, %v1026
      %1060 = vmax.xlane.f32.xlu0 %v1059
      %v1061 = vpop.xlane.xlu0 %1060
      %v1062 = vmax.f32 %v1027, %v1028
      %1063 = vmax.xlane.f32.xlu0 %v1062
      %v1064 = vpop.xlane.xlu0 %1063
      %v1065 = vmax.f32 %v1029, %v1030
      %1066 = vmax.xlane.f32.xlu0 %v1065
      %v1067 = vpop.xlane.xlu0 %1066
      %v1068 = vmax.f32 %v1031, %v1032
      %1069 = vmax.xlane.f32.xlu0 %v1068
      %v1070 = vpop.xlane.xlu0 %1069
      %v1071 = vmax.f32 %v1033, %v1034
      %1072 = vmax.xlane.f32.xlu0 %v1071
      %v1073 = vpop.xlane.xlu0 %1072
      %v1074 = vmax.f32 %v1035, %v1036
      %1075 = vmax.xlane.f32.xlu0 %v1074
      %v1076 = vpop.xlane.xlu0 %1075
      %v1077 = vmax.f32 %v1037, %v1038
      %1078 = vmax.xlane.f32.xlu0 %v1077
      %v1079 = vpop.xlane.xlu0 %1078
      %v1080 = vmax.f32 %v1039, %v1040
      %1081 = vmax.xlane.f32.xlu0 %v1080
      %v1082 = vpop.xlane.xlu0 %1081
      %v1083 = vmax.f32 %v1041, %v1042
      %1084 = vmax.xlane.f32.xlu0 %v1083
      %v1085 = vpop.xlane.xlu0 %1084
      %v1086 = vmax.f32 %v1043, %v1044
      %1087 = vmax.xlane.f32.xlu0 %v1086
      %v1088 = vpop.xlane.xlu0 %1087
      %v1089 = vmax.f32 %v1045, %v1046
      %1090 = vmax.xlane.f32.xlu0 %v1089
      %v1091 = vpop.xlane.xlu0 %1090
      %v1092 = vmax.f32 %v1047, %v1048
      %1093 = vmax.xlane.f32.xlu0 %v1092
      %v1094 = vpop.xlane.xlu0 %1093
      %v1095 = vmax.f32 %v1049, %v1050
      %1096 = vmax.xlane.f32.xlu0 %v1095
      %v1097 = vpop.xlane.xlu0 %1096
      %v1098 = vmax.f32 %v1051, %v1052
      %1099 = vmax.xlane.f32.xlu0 %v1098
      %v1100 = vpop.xlane.xlu0 %1099
      %vm1101 = vcmp.ge.f32.partialorder %v1021, %v1055
      %vm1102 = vcmp.ge.f32.partialorder %v1022, %v1055
      %vm1103 = vcmp.ge.f32.partialorder %v1023, %v1058
      %vm1104 = vcmp.ge.f32.partialorder %v1024, %v1058
      %vm1105 = vcmp.ge.f32.partialorder %v1025, %v1061
      %vm1106 = vcmp.ge.f32.partialorder %v1026, %v1061
      %vm1107 = vcmp.ge.f32.partialorder %v1027, %v1064
      %vm1108 = vcmp.ge.f32.partialorder %v1028, %v1064
      %vm1109 = vcmp.ge.f32.partialorder %v1029, %v1067
      %vm1110 = vcmp.ge.f32.partialorder %v1030, %v1067
      %vm1111 = vcmp.ge.f32.partialorder %v1031, %v1070
      %vm1112 = vcmp.ge.f32.partialorder %v1032, %v1070
      %vm1113 = vcmp.ge.f32.partialorder %v1033, %v1073
      %vm1114 = vcmp.ge.f32.partialorder %v1034, %v1073
      %vm1115 = vcmp.ge.f32.partialorder %v1035, %v1076
      %vm1116 = vcmp.ge.f32.partialorder %v1036, %v1076
      %vm1117 = vcmp.ge.f32.partialorder %v1037, %v1079
      %vm1118 = vcmp.ge.f32.partialorder %v1038, %v1079
      %vm1119 = vcmp.ge.f32.partialorder %v1039, %v1082
      %vm1120 = vcmp.ge.f32.partialorder %v1040, %v1082
      %vm1121 = vcmp.ge.f32.partialorder %v1041, %v1085
      %vm1122 = vcmp.ge.f32.partialorder %v1042, %v1085
      %vm1123 = vcmp.ge.f32.partialorder %v1043, %v1088
      %vm1124 = vcmp.ge.f32.partialorder %v1044, %v1088
      %vm1125 = vcmp.ge.f32.partialorder %v1045, %v1091
      %vm1126 = vcmp.ge.f32.partialorder %v1046, %v1091
      %vm1127 = vcmp.ge.f32.partialorder %v1047, %v1094
      %vm1128 = vcmp.ge.f32.partialorder %v1048, %v1094
      %vm1129 = vcmp.ge.f32.partialorder %v1049, %v1097
      %vm1130 = vcmp.ge.f32.partialorder %v1050, %v1097
      %vm1131 = vcmp.ge.f32.partialorder %v1051, %v1100
      %vm1132 = vcmp.ge.f32.partialorder %v1052, %v1100
      %v1133 = vsel %vm1101, %v537, 256.0
      %v1134 = vsel %vm1102, %v538, 256.0
      %v1135 = vsel %vm1103, %v537, 256.0
      %v1136 = vsel %vm1104, %v538, 256.0
      %v1137 = vsel %vm1105, %v537, 256.0
      %v1138 = vsel %vm1106, %v538, 256.0
      %v1139 = vsel %vm1107, %v537, 256.0
      %v1140 = vsel %vm1108, %v538, 256.0
      %v1141 = vsel %vm1109, %v537, 256.0
      %v1142 = vsel %vm1110, %v538, 256.0
      %v1143 = vsel %vm1111, %v537, 256.0
      %v1144 = vsel %vm1112, %v538, 256.0
      %v1145 = vsel %vm1113, %v537, 256.0
      %v1146 = vsel %vm1114, %v538, 256.0
      %v1147 = vsel %vm1115, %v537, 256.0
      %v1148 = vsel %vm1116, %v538, 256.0
      %v1149 = vsel %vm1117, %v537, 256.0
      %v1150 = vsel %vm1118, %v538, 256.0
      %v1151 = vsel %vm1119, %v537, 256.0
      %v1152 = vsel %vm1120, %v538, 256.0
      %v1153 = vsel %vm1121, %v537, 256.0
      %v1154 = vsel %vm1122, %v538, 256.0
      %v1155 = vsel %vm1123, %v537, 256.0
      %v1156 = vsel %vm1124, %v538, 256.0
      %v1157 = vsel %vm1125, %v537, 256.0
      %v1158 = vsel %vm1126, %v538, 256.0
      %v1159 = vsel %vm1127, %v537, 256.0
      %v1160 = vsel %vm1128, %v538, 256.0
      %v1161 = vsel %vm1129, %v537, 256.0
      %v1162 = vsel %vm1130, %v538, 256.0
      %v1163 = vsel %vm1131, %v537, 256.0
      %v1164 = vsel %vm1132, %v538, 256.0
      %v1165 = vmin.f32 %v1133, %v1134
      %1166 = vmin.xlane.f32.xlu0 %v1165
      %v1167 = vpop.xlane.xlu0 %1166
      %v1168 = vmin.f32 %v1135, %v1136
      %1169 = vmin.xlane.f32.xlu0 %v1168
      %v1170 = vpop.xlane.xlu0 %1169
      %v1171 = vmin.f32 %v1137, %v1138
      %1172 = vmin.xlane.f32.xlu0 %v1171
      %v1173 = vpop.xlane.xlu0 %1172
      %v1174 = vmin.f32 %v1139, %v1140
      %1175 = vmin.xlane.f32.xlu0 %v1174
      %v1176 = vpop.xlane.xlu0 %1175
      %v1177 = vmin.f32 %v1141, %v1142
      %1178 = vmin.xlane.f32.xlu0 %v1177
      %v1179 = vpop.xlane.xlu0 %1178
      %v1180 = vmin.f32 %v1143, %v1144
      %1181 = vmin.xlane.f32.xlu0 %v1180
      %v1182 = vpop.xlane.xlu0 %1181
      %v1183 = vmin.f32 %v1145, %v1146
      %1184 = vmin.xlane.f32.xlu0 %v1183
      %v1185 = vpop.xlane.xlu0 %1184
      %v1186 = vmin.f32 %v1147, %v1148
      %1187 = vmin.xlane.f32.xlu0 %v1186
      %v1188 = vpop.xlane.xlu0 %1187
      %v1189 = vmin.f32 %v1149, %v1150
      %1190 = vmin.xlane.f32.xlu0 %v1189
      %v1191 = vpop.xlane.xlu0 %1190
      %v1192 = vmin.f32 %v1151, %v1152
      %1193 = vmin.xlane.f32.xlu0 %v1192
      %v1194 = vpop.xlane.xlu0 %1193
      %v1195 = vmin.f32 %v1153, %v1154
      %1196 = vmin.xlane.f32.xlu0 %v1195
      %v1197 = vpop.xlane.xlu0 %1196
      %v1198 = vmin.f32 %v1155, %v1156
      %1199 = vmin.xlane.f32.xlu0 %v1198
      %v1200 = vpop.xlane.xlu0 %1199
      %v1201 = vmin.f32 %v1157, %v1158
      %1202 = vmin.xlane.f32.xlu0 %v1201
      %v1203 = vpop.xlane.xlu0 %1202
      %v1204 = vmin.f32 %v1159, %v1160
      %1205 = vmin.xlane.f32.xlu0 %v1204
      %v1206 = vpop.xlane.xlu0 %1205
      %v1207 = vmin.f32 %v1161, %v1162
      %1208 = vmin.xlane.f32.xlu0 %v1207
      %v1209 = vpop.xlane.xlu0 %1208
      %v1210 = vmin.f32 %v1163, %v1164
      %1211 = vmin.xlane.f32.xlu0 %v1210
      %v1212 = vpop.xlane.xlu0 %1211
      %vm1213 = vcmp.eq.s32.totalorder %v535, 2
      %v1214 = vcvt.f32.s32.to.zero.pseudo %v1167
      %v1215 = vcvt.f32.s32.to.zero.pseudo %v1170
      %v1216 = vcvt.f32.s32.to.zero.pseudo %v1173
      %v1217 = vcvt.f32.s32.to.zero.pseudo %v1176
      %v1218 = vcvt.f32.s32.to.zero.pseudo %v1179
      %v1219 = vcvt.f32.s32.to.zero.pseudo %v1182
      %v1220 = vcvt.f32.s32.to.zero.pseudo %v1185
      %v1221 = vcvt.f32.s32.to.zero.pseudo %v1188
      %v1222 = vcvt.f32.s32.to.zero.pseudo %v1191
      %v1223 = vcvt.f32.s32.to.zero.pseudo %v1194
      %v1224 = vcvt.f32.s32.to.zero.pseudo %v1197
      %v1225 = vcvt.f32.s32.to.zero.pseudo %v1200
      %v1226 = vcvt.f32.s32.to.zero.pseudo %v1203
      %v1227 = vcvt.f32.s32.to.zero.pseudo %v1206
      %v1228 = vcvt.f32.s32.to.zero.pseudo %v1209
      %v1229 = vcvt.f32.s32.to.zero.pseudo %v1212
      %v1230 = vsel %vm1213, %v1214, %v973
      %v1231 = vsel %vm1213, %v1215, %v974
      %v1232 = vsel %vm1213, %v1216, %v975
      %v1233 = vsel %vm1213, %v1217, %v976
      %v1234 = vsel %vm1213, %v1218, %v977
      %v1235 = vsel %vm1213, %v1219, %v978
      %v1236 = vsel %vm1213, %v1220, %v979
      %v1237 = vsel %vm1213, %v1221, %v980
      %v1238 = vsel %vm1213, %v1222, %v981
      %v1239 = vsel %vm1213, %v1223, %v982
      %v1240 = vsel %vm1213, %v1224, %v983
      %v1241 = vsel %vm1213, %v1225, %v984
      %v1242 = vsel %vm1213, %v1226, %v985
      %v1243 = vsel %vm1213, %v1227, %v986
      %v1244 = vsel %vm1213, %v1228, %v987
      %v1245 = vsel %vm1213, %v1229, %v988
      %vm1246 = vcmp.eq.f32.partialorder %v537, %v1167
      %vm1247 = vcmp.eq.f32.partialorder %v538, %v1167
      %vm1248 = vcmp.eq.f32.partialorder %v537, %v1170
      %vm1249 = vcmp.eq.f32.partialorder %v538, %v1170
      %vm1250 = vcmp.eq.f32.partialorder %v537, %v1173
      %vm1251 = vcmp.eq.f32.partialorder %v538, %v1173
      %vm1252 = vcmp.eq.f32.partialorder %v537, %v1176
      %vm1253 = vcmp.eq.f32.partialorder %v538, %v1176
      %vm1254 = vcmp.eq.f32.partialorder %v537, %v1179
      %vm1255 = vcmp.eq.f32.partialorder %v538, %v1179
      %vm1256 = vcmp.eq.f32.partialorder %v537, %v1182
      %vm1257 = vcmp.eq.f32.partialorder %v538, %v1182
      %vm1258 = vcmp.eq.f32.partialorder %v537, %v1185
      %vm1259 = vcmp.eq.f32.partialorder %v538, %v1185
      %vm1260 = vcmp.eq.f32.partialorder %v537, %v1188
      %vm1261 = vcmp.eq.f32.partialorder %v538, %v1188
      %vm1262 = vcmp.eq.f32.partialorder %v537, %v1191
      %vm1263 = vcmp.eq.f32.partialorder %v538, %v1191
      %vm1264 = vcmp.eq.f32.partialorder %v537, %v1194
      %vm1265 = vcmp.eq.f32.partialorder %v538, %v1194
      %vm1266 = vcmp.eq.f32.partialorder %v537, %v1197
      %vm1267 = vcmp.eq.f32.partialorder %v538, %v1197
      %vm1268 = vcmp.eq.f32.partialorder %v537, %v1200
      %vm1269 = vcmp.eq.f32.partialorder %v538, %v1200
      %vm1270 = vcmp.eq.f32.partialorder %v537, %v1203
      %vm1271 = vcmp.eq.f32.partialorder %v538, %v1203
      %vm1272 = vcmp.eq.f32.partialorder %v537, %v1206
      %vm1273 = vcmp.eq.f32.partialorder %v538, %v1206
      %vm1274 = vcmp.eq.f32.partialorder %v537, %v1209
      %vm1275 = vcmp.eq.f32.partialorder %v538, %v1209
      %vm1276 = vcmp.eq.f32.partialorder %v537, %v1212
      %vm1277 = vcmp.eq.f32.partialorder %v538, %v1212
      %v1278 = vsel %vm1246, -1e+30, %v1021
      %v1279 = vsel %vm1247, -1e+30, %v1022
      %v1280 = vsel %vm1248, -1e+30, %v1023
      %v1281 = vsel %vm1249, -1e+30, %v1024
      %v1282 = vsel %vm1250, -1e+30, %v1025
      %v1283 = vsel %vm1251, -1e+30, %v1026
      %v1284 = vsel %vm1252, -1e+30, %v1027
      %v1285 = vsel %vm1253, -1e+30, %v1028
      %v1286 = vsel %vm1254, -1e+30, %v1029
      %v1287 = vsel %vm1255, -1e+30, %v1030
      %v1288 = vsel %vm1256, -1e+30, %v1031
      %v1289 = vsel %vm1257, -1e+30, %v1032
      %v1290 = vsel %vm1258, -1e+30, %v1033
      %v1291 = vsel %vm1259, -1e+30, %v1034
      %v1292 = vsel %vm1260, -1e+30, %v1035
      %v1293 = vsel %vm1261, -1e+30, %v1036
      %v1294 = vsel %vm1262, -1e+30, %v1037
      %v1295 = vsel %vm1263, -1e+30, %v1038
      %v1296 = vsel %vm1264, -1e+30, %v1039
      %v1297 = vsel %vm1265, -1e+30, %v1040
      %v1298 = vsel %vm1266, -1e+30, %v1041
      %v1299 = vsel %vm1267, -1e+30, %v1042
      %v1300 = vsel %vm1268, -1e+30, %v1043
      %v1301 = vsel %vm1269, -1e+30, %v1044
      %v1302 = vsel %vm1270, -1e+30, %v1045
      %v1303 = vsel %vm1271, -1e+30, %v1046
      %v1304 = vsel %vm1272, -1e+30, %v1047
      %v1305 = vsel %vm1273, -1e+30, %v1048
      %v1306 = vsel %vm1274, -1e+30, %v1049
      %v1307 = vsel %vm1275, -1e+30, %v1050
      %v1308 = vsel %vm1276, -1e+30, %v1051
      %v1309 = vsel %vm1277, -1e+30, %v1052
      %v1310 = vmax.f32 %v1278, %v1279
      %1311 = vmax.xlane.f32.xlu0 %v1310
      %v1312 = vpop.xlane.xlu0 %1311
      %v1313 = vmax.f32 %v1280, %v1281
      %1314 = vmax.xlane.f32.xlu0 %v1313
      %v1315 = vpop.xlane.xlu0 %1314
      %v1316 = vmax.f32 %v1282, %v1283
      %1317 = vmax.xlane.f32.xlu0 %v1316
      %v1318 = vpop.xlane.xlu0 %1317
      %v1319 = vmax.f32 %v1284, %v1285
      %1320 = vmax.xlane.f32.xlu0 %v1319
      %v1321 = vpop.xlane.xlu0 %1320
      %v1322 = vmax.f32 %v1286, %v1287
      %1323 = vmax.xlane.f32.xlu0 %v1322
      %v1324 = vpop.xlane.xlu0 %1323
      %v1325 = vmax.f32 %v1288, %v1289
      %1326 = vmax.xlane.f32.xlu0 %v1325
      %v1327 = vpop.xlane.xlu0 %1326
      %v1328 = vmax.f32 %v1290, %v1291
      %1329 = vmax.xlane.f32.xlu0 %v1328
      %v1330 = vpop.xlane.xlu0 %1329
      %v1331 = vmax.f32 %v1292, %v1293
      %1332 = vmax.xlane.f32.xlu0 %v1331
      %v1333 = vpop.xlane.xlu0 %1332
      %v1334 = vmax.f32 %v1294, %v1295
      %1335 = vmax.xlane.f32.xlu0 %v1334
      %v1336 = vpop.xlane.xlu0 %1335
      %v1337 = vmax.f32 %v1296, %v1297
      %1338 = vmax.xlane.f32.xlu0 %v1337
      %v1339 = vpop.xlane.xlu0 %1338
      %v1340 = vmax.f32 %v1298, %v1299
      %1341 = vmax.xlane.f32.xlu0 %v1340
      %v1342 = vpop.xlane.xlu0 %1341
      %v1343 = vmax.f32 %v1300, %v1301
      %1344 = vmax.xlane.f32.xlu0 %v1343
      %v1345 = vpop.xlane.xlu0 %1344
      %v1346 = vmax.f32 %v1302, %v1303
      %1347 = vmax.xlane.f32.xlu0 %v1346
      %v1348 = vpop.xlane.xlu0 %1347
      %v1349 = vmax.f32 %v1304, %v1305
      %1350 = vmax.xlane.f32.xlu0 %v1349
      %v1351 = vpop.xlane.xlu0 %1350
      %v1352 = vmax.f32 %v1306, %v1307
      %1353 = vmax.xlane.f32.xlu0 %v1352
      %v1354 = vpop.xlane.xlu0 %1353
      %v1355 = vmax.f32 %v1308, %v1309
      %1356 = vmax.xlane.f32.xlu0 %v1355
      %v1357 = vpop.xlane.xlu0 %1356
      %vm1358 = vcmp.ge.f32.partialorder %v1278, %v1312
      %vm1359 = vcmp.ge.f32.partialorder %v1279, %v1312
      %vm1360 = vcmp.ge.f32.partialorder %v1280, %v1315
      %vm1361 = vcmp.ge.f32.partialorder %v1281, %v1315
      %vm1362 = vcmp.ge.f32.partialorder %v1282, %v1318
      %vm1363 = vcmp.ge.f32.partialorder %v1283, %v1318
      %vm1364 = vcmp.ge.f32.partialorder %v1284, %v1321
      %vm1365 = vcmp.ge.f32.partialorder %v1285, %v1321
      %vm1366 = vcmp.ge.f32.partialorder %v1286, %v1324
      %vm1367 = vcmp.ge.f32.partialorder %v1287, %v1324
      %vm1368 = vcmp.ge.f32.partialorder %v1288, %v1327
      %vm1369 = vcmp.ge.f32.partialorder %v1289, %v1327
      %vm1370 = vcmp.ge.f32.partialorder %v1290, %v1330
      %vm1371 = vcmp.ge.f32.partialorder %v1291, %v1330
      %vm1372 = vcmp.ge.f32.partialorder %v1292, %v1333
      %vm1373 = vcmp.ge.f32.partialorder %v1293, %v1333
      %vm1374 = vcmp.ge.f32.partialorder %v1294, %v1336
      %vm1375 = vcmp.ge.f32.partialorder %v1295, %v1336
      %vm1376 = vcmp.ge.f32.partialorder %v1296, %v1339
      %vm1377 = vcmp.ge.f32.partialorder %v1297, %v1339
      %vm1378 = vcmp.ge.f32.partialorder %v1298, %v1342
      %vm1379 = vcmp.ge.f32.partialorder %v1299, %v1342
      %vm1380 = vcmp.ge.f32.partialorder %v1300, %v1345
      %vm1381 = vcmp.ge.f32.partialorder %v1301, %v1345
      %vm1382 = vcmp.ge.f32.partialorder %v1302, %v1348
      %vm1383 = vcmp.ge.f32.partialorder %v1303, %v1348
      %vm1384 = vcmp.ge.f32.partialorder %v1304, %v1351
      %vm1385 = vcmp.ge.f32.partialorder %v1305, %v1351
      %vm1386 = vcmp.ge.f32.partialorder %v1306, %v1354
      %vm1387 = vcmp.ge.f32.partialorder %v1307, %v1354
      %vm1388 = vcmp.ge.f32.partialorder %v1308, %v1357
      %vm1389 = vcmp.ge.f32.partialorder %v1309, %v1357
      %v1390 = vsel %vm1358, %v537, 256.0
      %v1391 = vsel %vm1359, %v538, 256.0
      %v1392 = vsel %vm1360, %v537, 256.0
      %v1393 = vsel %vm1361, %v538, 256.0
      %v1394 = vsel %vm1362, %v537, 256.0
      %v1395 = vsel %vm1363, %v538, 256.0
      %v1396 = vsel %vm1364, %v537, 256.0
      %v1397 = vsel %vm1365, %v538, 256.0
      %v1398 = vsel %vm1366, %v537, 256.0
      %v1399 = vsel %vm1367, %v538, 256.0
      %v1400 = vsel %vm1368, %v537, 256.0
      %v1401 = vsel %vm1369, %v538, 256.0
      %v1402 = vsel %vm1370, %v537, 256.0
      %v1403 = vsel %vm1371, %v538, 256.0
      %v1404 = vsel %vm1372, %v537, 256.0
      %v1405 = vsel %vm1373, %v538, 256.0
      %v1406 = vsel %vm1374, %v537, 256.0
      %v1407 = vsel %vm1375, %v538, 256.0
      %v1408 = vsel %vm1376, %v537, 256.0
      %v1409 = vsel %vm1377, %v538, 256.0
      %v1410 = vsel %vm1378, %v537, 256.0
      %v1411 = vsel %vm1379, %v538, 256.0
      %v1412 = vsel %vm1380, %v537, 256.0
      %v1413 = vsel %vm1381, %v538, 256.0
      %v1414 = vsel %vm1382, %v537, 256.0
      %v1415 = vsel %vm1383, %v538, 256.0
      %v1416 = vsel %vm1384, %v537, 256.0
      %v1417 = vsel %vm1385, %v538, 256.0
      %v1418 = vsel %vm1386, %v537, 256.0
      %v1419 = vsel %vm1387, %v538, 256.0
      %v1420 = vsel %vm1388, %v537, 256.0
      %v1421 = vsel %vm1389, %v538, 256.0
      %v1422 = vmin.f32 %v1390, %v1391
      %1423 = vmin.xlane.f32.xlu0 %v1422
      %v1424 = vpop.xlane.xlu0 %1423
      %v1425 = vmin.f32 %v1392, %v1393
      %1426 = vmin.xlane.f32.xlu0 %v1425
      %v1427 = vpop.xlane.xlu0 %1426
      %v1428 = vmin.f32 %v1394, %v1395
      %1429 = vmin.xlane.f32.xlu0 %v1428
      %v1430 = vpop.xlane.xlu0 %1429
      %v1431 = vmin.f32 %v1396, %v1397
      %1432 = vmin.xlane.f32.xlu0 %v1431
      %v1433 = vpop.xlane.xlu0 %1432
      %v1434 = vmin.f32 %v1398, %v1399
      %1435 = vmin.xlane.f32.xlu0 %v1434
      %v1436 = vpop.xlane.xlu0 %1435
      %v1437 = vmin.f32 %v1400, %v1401
      %1438 = vmin.xlane.f32.xlu0 %v1437
      %v1439 = vpop.xlane.xlu0 %1438
      %v1440 = vmin.f32 %v1402, %v1403
      %1441 = vmin.xlane.f32.xlu0 %v1440
      %v1442 = vpop.xlane.xlu0 %1441
      %v1443 = vmin.f32 %v1404, %v1405
      %1444 = vmin.xlane.f32.xlu0 %v1443
      %v1445 = vpop.xlane.xlu0 %1444
      %v1446 = vmin.f32 %v1406, %v1407
      %1447 = vmin.xlane.f32.xlu0 %v1446
      %v1448 = vpop.xlane.xlu0 %1447
      %v1449 = vmin.f32 %v1408, %v1409
      %1450 = vmin.xlane.f32.xlu0 %v1449
      %v1451 = vpop.xlane.xlu0 %1450
      %v1452 = vmin.f32 %v1410, %v1411
      %1453 = vmin.xlane.f32.xlu0 %v1452
      %v1454 = vpop.xlane.xlu0 %1453
      %v1455 = vmin.f32 %v1412, %v1413
      %1456 = vmin.xlane.f32.xlu0 %v1455
      %v1457 = vpop.xlane.xlu0 %1456
      %v1458 = vmin.f32 %v1414, %v1415
      %1459 = vmin.xlane.f32.xlu0 %v1458
      %v1460 = vpop.xlane.xlu0 %1459
      %v1461 = vmin.f32 %v1416, %v1417
      %1462 = vmin.xlane.f32.xlu0 %v1461
      %v1463 = vpop.xlane.xlu0 %1462
      %v1464 = vmin.f32 %v1418, %v1419
      %1465 = vmin.xlane.f32.xlu0 %v1464
      %v1466 = vpop.xlane.xlu0 %1465
      %v1467 = vmin.f32 %v1420, %v1421
      %1468 = vmin.xlane.f32.xlu0 %v1467
      %v1469 = vpop.xlane.xlu0 %1468
      %vm1470 = vcmp.eq.s32.totalorder %v535, 3
      %v1471 = vcvt.f32.s32.to.zero.pseudo %v1424
      %v1472 = vcvt.f32.s32.to.zero.pseudo %v1427
      %v1473 = vcvt.f32.s32.to.zero.pseudo %v1430
      %v1474 = vcvt.f32.s32.to.zero.pseudo %v1433
      %v1475 = vcvt.f32.s32.to.zero.pseudo %v1436
      %v1476 = vcvt.f32.s32.to.zero.pseudo %v1439
      %v1477 = vcvt.f32.s32.to.zero.pseudo %v1442
      %v1478 = vcvt.f32.s32.to.zero.pseudo %v1445
      %v1479 = vcvt.f32.s32.to.zero.pseudo %v1448
      %v1480 = vcvt.f32.s32.to.zero.pseudo %v1451
      %v1481 = vcvt.f32.s32.to.zero.pseudo %v1454
      %v1482 = vcvt.f32.s32.to.zero.pseudo %v1457
      %v1483 = vcvt.f32.s32.to.zero.pseudo %v1460
      %v1484 = vcvt.f32.s32.to.zero.pseudo %v1463
      %v1485 = vcvt.f32.s32.to.zero.pseudo %v1466
      %v1486 = vcvt.f32.s32.to.zero.pseudo %v1469
      %v1487 = vsel %vm1470, %v1471, %v1230
      %v1488 = vsel %vm1470, %v1472, %v1231
      %v1489 = vsel %vm1470, %v1473, %v1232
      %v1490 = vsel %vm1470, %v1474, %v1233
      %v1491 = vsel %vm1470, %v1475, %v1234
      %v1492 = vsel %vm1470, %v1476, %v1235
      %v1493 = vsel %vm1470, %v1477, %v1236
      %v1494 = vsel %vm1470, %v1478, %v1237
      %v1495 = vsel %vm1470, %v1479, %v1238
      %v1496 = vsel %vm1470, %v1480, %v1239
      %v1497 = vsel %vm1470, %v1481, %v1240
      %v1498 = vsel %vm1470, %v1482, %v1241
      %v1499 = vsel %vm1470, %v1483, %v1242
      %v1500 = vsel %vm1470, %v1484, %v1243
      %v1501 = vsel %vm1470, %v1485, %v1244
      %v1502 = vsel %vm1470, %v1486, %v1245
      %vm1503 = vcmp.eq.f32.partialorder %v537, %v1424
      %vm1504 = vcmp.eq.f32.partialorder %v538, %v1424
      %vm1505 = vcmp.eq.f32.partialorder %v537, %v1427
      %vm1506 = vcmp.eq.f32.partialorder %v538, %v1427
      %vm1507 = vcmp.eq.f32.partialorder %v537, %v1430
      %vm1508 = vcmp.eq.f32.partialorder %v538, %v1430
      %vm1509 = vcmp.eq.f32.partialorder %v537, %v1433
      %vm1510 = vcmp.eq.f32.partialorder %v538, %v1433
      %vm1511 = vcmp.eq.f32.partialorder %v537, %v1436
      %vm1512 = vcmp.eq.f32.partialorder %v538, %v1436
      %vm1513 = vcmp.eq.f32.partialorder %v537, %v1439
      %vm1514 = vcmp.eq.f32.partialorder %v538, %v1439
      %vm1515 = vcmp.eq.f32.partialorder %v537, %v1442
      %vm1516 = vcmp.eq.f32.partialorder %v538, %v1442
      %vm1517 = vcmp.eq.f32.partialorder %v537, %v1445
      %vm1518 = vcmp.eq.f32.partialorder %v538, %v1445
      %vm1519 = vcmp.eq.f32.partialorder %v537, %v1448
      %vm1520 = vcmp.eq.f32.partialorder %v538, %v1448
      %vm1521 = vcmp.eq.f32.partialorder %v537, %v1451
      %vm1522 = vcmp.eq.f32.partialorder %v538, %v1451
      %vm1523 = vcmp.eq.f32.partialorder %v537, %v1454
      %vm1524 = vcmp.eq.f32.partialorder %v538, %v1454
      %vm1525 = vcmp.eq.f32.partialorder %v537, %v1457
      %vm1526 = vcmp.eq.f32.partialorder %v538, %v1457
      %vm1527 = vcmp.eq.f32.partialorder %v537, %v1460
      %vm1528 = vcmp.eq.f32.partialorder %v538, %v1460
      %vm1529 = vcmp.eq.f32.partialorder %v537, %v1463
      %vm1530 = vcmp.eq.f32.partialorder %v538, %v1463
      %vm1531 = vcmp.eq.f32.partialorder %v537, %v1466
      %vm1532 = vcmp.eq.f32.partialorder %v538, %v1466
      %vm1533 = vcmp.eq.f32.partialorder %v537, %v1469
      %vm1534 = vcmp.eq.f32.partialorder %v538, %v1469
      %v1535 = vsel %vm1503, -1e+30, %v1278
      %v1536 = vsel %vm1504, -1e+30, %v1279
      %v1537 = vsel %vm1505, -1e+30, %v1280
      %v1538 = vsel %vm1506, -1e+30, %v1281
      %v1539 = vsel %vm1507, -1e+30, %v1282
      %v1540 = vsel %vm1508, -1e+30, %v1283
      %v1541 = vsel %vm1509, -1e+30, %v1284
      %v1542 = vsel %vm1510, -1e+30, %v1285
      %v1543 = vsel %vm1511, -1e+30, %v1286
      %v1544 = vsel %vm1512, -1e+30, %v1287
      %v1545 = vsel %vm1513, -1e+30, %v1288
      %v1546 = vsel %vm1514, -1e+30, %v1289
      %v1547 = vsel %vm1515, -1e+30, %v1290
      %v1548 = vsel %vm1516, -1e+30, %v1291
      %v1549 = vsel %vm1517, -1e+30, %v1292
      %v1550 = vsel %vm1518, -1e+30, %v1293
      %v1551 = vsel %vm1519, -1e+30, %v1294
      %v1552 = vsel %vm1520, -1e+30, %v1295
      %v1553 = vsel %vm1521, -1e+30, %v1296
      %v1554 = vsel %vm1522, -1e+30, %v1297
      %v1555 = vsel %vm1523, -1e+30, %v1298
      %v1556 = vsel %vm1524, -1e+30, %v1299
      %v1557 = vsel %vm1525, -1e+30, %v1300
      %v1558 = vsel %vm1526, -1e+30, %v1301
      %v1559 = vsel %vm1527, -1e+30, %v1302
      %v1560 = vsel %vm1528, -1e+30, %v1303
      %v1561 = vsel %vm1529, -1e+30, %v1304
      %v1562 = vsel %vm1530, -1e+30, %v1305
      %v1563 = vsel %vm1531, -1e+30, %v1306
      %v1564 = vsel %vm1532, -1e+30, %v1307
      %v1565 = vsel %vm1533, -1e+30, %v1308
      %v1566 = vsel %vm1534, -1e+30, %v1309
      %v1567 = vmax.f32 %v1535, %v1536
      %1568 = vmax.xlane.f32.xlu0 %v1567
      %v1569 = vpop.xlane.xlu0 %1568
      %v1570 = vmax.f32 %v1537, %v1538
      %1571 = vmax.xlane.f32.xlu0 %v1570
      %v1572 = vpop.xlane.xlu0 %1571
      %v1573 = vmax.f32 %v1539, %v1540
      %1574 = vmax.xlane.f32.xlu0 %v1573
      %v1575 = vpop.xlane.xlu0 %1574
      %v1576 = vmax.f32 %v1541, %v1542
      %1577 = vmax.xlane.f32.xlu0 %v1576
      %v1578 = vpop.xlane.xlu0 %1577
      %v1579 = vmax.f32 %v1543, %v1544
      %1580 = vmax.xlane.f32.xlu0 %v1579
      %v1581 = vpop.xlane.xlu0 %1580
      %v1582 = vmax.f32 %v1545, %v1546
      %1583 = vmax.xlane.f32.xlu0 %v1582
      %v1584 = vpop.xlane.xlu0 %1583
      %v1585 = vmax.f32 %v1547, %v1548
      %1586 = vmax.xlane.f32.xlu0 %v1585
      %v1587 = vpop.xlane.xlu0 %1586
      %v1588 = vmax.f32 %v1549, %v1550
      %1589 = vmax.xlane.f32.xlu0 %v1588
      %v1590 = vpop.xlane.xlu0 %1589
      %v1591 = vmax.f32 %v1551, %v1552
      %1592 = vmax.xlane.f32.xlu0 %v1591
      %v1593 = vpop.xlane.xlu0 %1592
      %v1594 = vmax.f32 %v1553, %v1554
      %1595 = vmax.xlane.f32.xlu0 %v1594
      %v1596 = vpop.xlane.xlu0 %1595
      %v1597 = vmax.f32 %v1555, %v1556
      %1598 = vmax.xlane.f32.xlu0 %v1597
      %v1599 = vpop.xlane.xlu0 %1598
      %v1600 = vmax.f32 %v1557, %v1558
      %1601 = vmax.xlane.f32.xlu0 %v1600
      %v1602 = vpop.xlane.xlu0 %1601
      %v1603 = vmax.f32 %v1559, %v1560
      %1604 = vmax.xlane.f32.xlu0 %v1603
      %v1605 = vpop.xlane.xlu0 %1604
      %v1606 = vmax.f32 %v1561, %v1562
      %1607 = vmax.xlane.f32.xlu0 %v1606
      %v1608 = vpop.xlane.xlu0 %1607
      %v1609 = vmax.f32 %v1563, %v1564
      %1610 = vmax.xlane.f32.xlu0 %v1609
      %v1611 = vpop.xlane.xlu0 %1610
      %v1612 = vmax.f32 %v1565, %v1566
      %1613 = vmax.xlane.f32.xlu0 %v1612
      %v1614 = vpop.xlane.xlu0 %1613
      %vm1615 = vcmp.ge.f32.partialorder %v1535, %v1569
      %vm1616 = vcmp.ge.f32.partialorder %v1536, %v1569
      %vm1617 = vcmp.ge.f32.partialorder %v1537, %v1572
      %vm1618 = vcmp.ge.f32.partialorder %v1538, %v1572
      %vm1619 = vcmp.ge.f32.partialorder %v1539, %v1575
      %vm1620 = vcmp.ge.f32.partialorder %v1540, %v1575
      %vm1621 = vcmp.ge.f32.partialorder %v1541, %v1578
      %vm1622 = vcmp.ge.f32.partialorder %v1542, %v1578
      %vm1623 = vcmp.ge.f32.partialorder %v1543, %v1581
      %vm1624 = vcmp.ge.f32.partialorder %v1544, %v1581
      %vm1625 = vcmp.ge.f32.partialorder %v1545, %v1584
      %vm1626 = vcmp.ge.f32.partialorder %v1546, %v1584
      %vm1627 = vcmp.ge.f32.partialorder %v1547, %v1587
      %vm1628 = vcmp.ge.f32.partialorder %v1548, %v1587
      %vm1629 = vcmp.ge.f32.partialorder %v1549, %v1590
      %vm1630 = vcmp.ge.f32.partialorder %v1550, %v1590
      %vm1631 = vcmp.ge.f32.partialorder %v1551, %v1593
      %vm1632 = vcmp.ge.f32.partialorder %v1552, %v1593
      %vm1633 = vcmp.ge.f32.partialorder %v1553, %v1596
      %vm1634 = vcmp.ge.f32.partialorder %v1554, %v1596
      %vm1635 = vcmp.ge.f32.partialorder %v1555, %v1599
      %vm1636 = vcmp.ge.f32.partialorder %v1556, %v1599
      %vm1637 = vcmp.ge.f32.partialorder %v1557, %v1602
      %vm1638 = vcmp.ge.f32.partialorder %v1558, %v1602
      %vm1639 = vcmp.ge.f32.partialorder %v1559, %v1605
      %vm1640 = vcmp.ge.f32.partialorder %v1560, %v1605
      %vm1641 = vcmp.ge.f32.partialorder %v1561, %v1608
      %vm1642 = vcmp.ge.f32.partialorder %v1562, %v1608
      %vm1643 = vcmp.ge.f32.partialorder %v1563, %v1611
      %vm1644 = vcmp.ge.f32.partialorder %v1564, %v1611
      %vm1645 = vcmp.ge.f32.partialorder %v1565, %v1614
      %vm1646 = vcmp.ge.f32.partialorder %v1566, %v1614
      %v1647 = vsel %vm1615, %v537, 256.0
      %v1648 = vsel %vm1616, %v538, 256.0
      %v1649 = vsel %vm1617, %v537, 256.0
      %v1650 = vsel %vm1618, %v538, 256.0
      %v1651 = vsel %vm1619, %v537, 256.0
      %v1652 = vsel %vm1620, %v538, 256.0
      %v1653 = vsel %vm1621, %v537, 256.0
      %v1654 = vsel %vm1622, %v538, 256.0
      %v1655 = vsel %vm1623, %v537, 256.0
      %v1656 = vsel %vm1624, %v538, 256.0
      %v1657 = vsel %vm1625, %v537, 256.0
      %v1658 = vsel %vm1626, %v538, 256.0
      %v1659 = vsel %vm1627, %v537, 256.0
      %v1660 = vsel %vm1628, %v538, 256.0
      %v1661 = vsel %vm1629, %v537, 256.0
      %v1662 = vsel %vm1630, %v538, 256.0
      %v1663 = vsel %vm1631, %v537, 256.0
      %v1664 = vsel %vm1632, %v538, 256.0
      %v1665 = vsel %vm1633, %v537, 256.0
      %v1666 = vsel %vm1634, %v538, 256.0
      %v1667 = vsel %vm1635, %v537, 256.0
      %v1668 = vsel %vm1636, %v538, 256.0
      %v1669 = vsel %vm1637, %v537, 256.0
      %v1670 = vsel %vm1638, %v538, 256.0
      %v1671 = vsel %vm1639, %v537, 256.0
      %v1672 = vsel %vm1640, %v538, 256.0
      %v1673 = vsel %vm1641, %v537, 256.0
      %v1674 = vsel %vm1642, %v538, 256.0
      %v1675 = vsel %vm1643, %v537, 256.0
      %v1676 = vsel %vm1644, %v538, 256.0
      %v1677 = vsel %vm1645, %v537, 256.0
      %v1678 = vsel %vm1646, %v538, 256.0
      %v1679 = vmin.f32 %v1647, %v1648
      %1680 = vmin.xlane.f32.xlu0 %v1679
      %v1681 = vpop.xlane.xlu0 %1680
      %v1682 = vmin.f32 %v1649, %v1650
      %1683 = vmin.xlane.f32.xlu0 %v1682
      %v1684 = vpop.xlane.xlu0 %1683
      %v1685 = vmin.f32 %v1651, %v1652
      %1686 = vmin.xlane.f32.xlu0 %v1685
      %v1687 = vpop.xlane.xlu0 %1686
      %v1688 = vmin.f32 %v1653, %v1654
      %1689 = vmin.xlane.f32.xlu0 %v1688
      %v1690 = vpop.xlane.xlu0 %1689
      %v1691 = vmin.f32 %v1655, %v1656
      %1692 = vmin.xlane.f32.xlu0 %v1691
      %v1693 = vpop.xlane.xlu0 %1692
      %v1694 = vmin.f32 %v1657, %v1658
      %1695 = vmin.xlane.f32.xlu0 %v1694
      %v1696 = vpop.xlane.xlu0 %1695
      %v1697 = vmin.f32 %v1659, %v1660
      %1698 = vmin.xlane.f32.xlu0 %v1697
      %v1699 = vpop.xlane.xlu0 %1698
      %v1700 = vmin.f32 %v1661, %v1662
      %1701 = vmin.xlane.f32.xlu0 %v1700
      %v1702 = vpop.xlane.xlu0 %1701
      %v1703 = vmin.f32 %v1663, %v1664
      %1704 = vmin.xlane.f32.xlu0 %v1703
      %v1705 = vpop.xlane.xlu0 %1704
      %v1706 = vmin.f32 %v1665, %v1666
      %1707 = vmin.xlane.f32.xlu0 %v1706
      %v1708 = vpop.xlane.xlu0 %1707
      %v1709 = vmin.f32 %v1667, %v1668
      %1710 = vmin.xlane.f32.xlu0 %v1709
      %v1711 = vpop.xlane.xlu0 %1710
      %v1712 = vmin.f32 %v1669, %v1670
      %1713 = vmin.xlane.f32.xlu0 %v1712
      %v1714 = vpop.xlane.xlu0 %1713
      %v1715 = vmin.f32 %v1671, %v1672
      %1716 = vmin.xlane.f32.xlu0 %v1715
      %v1717 = vpop.xlane.xlu0 %1716
      %v1718 = vmin.f32 %v1673, %v1674
      %1719 = vmin.xlane.f32.xlu0 %v1718
      %v1720 = vpop.xlane.xlu0 %1719
      %v1721 = vmin.f32 %v1675, %v1676
      %1722 = vmin.xlane.f32.xlu0 %v1721
      %v1723 = vpop.xlane.xlu0 %1722
      %v1724 = vmin.f32 %v1677, %v1678
      %1725 = vmin.xlane.f32.xlu0 %v1724
      %v1726 = vpop.xlane.xlu0 %1725
      %vm1727 = vcmp.eq.s32.totalorder %v535, 4
      %v1728 = vcvt.f32.s32.to.zero.pseudo %v1681
      %v1729 = vcvt.f32.s32.to.zero.pseudo %v1684
      %v1730 = vcvt.f32.s32.to.zero.pseudo %v1687
      %v1731 = vcvt.f32.s32.to.zero.pseudo %v1690
      %v1732 = vcvt.f32.s32.to.zero.pseudo %v1693
      %v1733 = vcvt.f32.s32.to.zero.pseudo %v1696
      %v1734 = vcvt.f32.s32.to.zero.pseudo %v1699
      %v1735 = vcvt.f32.s32.to.zero.pseudo %v1702
      %v1736 = vcvt.f32.s32.to.zero.pseudo %v1705
      %v1737 = vcvt.f32.s32.to.zero.pseudo %v1708
      %v1738 = vcvt.f32.s32.to.zero.pseudo %v1711
      %v1739 = vcvt.f32.s32.to.zero.pseudo %v1714
      %v1740 = vcvt.f32.s32.to.zero.pseudo %v1717
      %v1741 = vcvt.f32.s32.to.zero.pseudo %v1720
      %v1742 = vcvt.f32.s32.to.zero.pseudo %v1723
      %v1743 = vcvt.f32.s32.to.zero.pseudo %v1726
      %v1744 = vsel %vm1727, %v1728, %v1487
      %v1745 = vsel %vm1727, %v1729, %v1488
      %v1746 = vsel %vm1727, %v1730, %v1489
      %v1747 = vsel %vm1727, %v1731, %v1490
      %v1748 = vsel %vm1727, %v1732, %v1491
      %v1749 = vsel %vm1727, %v1733, %v1492
      %v1750 = vsel %vm1727, %v1734, %v1493
      %v1751 = vsel %vm1727, %v1735, %v1494
      %v1752 = vsel %vm1727, %v1736, %v1495
      %v1753 = vsel %vm1727, %v1737, %v1496
      %v1754 = vsel %vm1727, %v1738, %v1497
      %v1755 = vsel %vm1727, %v1739, %v1498
      %v1756 = vsel %vm1727, %v1740, %v1499
      %v1757 = vsel %vm1727, %v1741, %v1500
      %v1758 = vsel %vm1727, %v1742, %v1501
      %v1759 = vsel %vm1727, %v1743, %v1502
      %vm1760 = vcmp.eq.f32.partialorder %v537, %v1681
      %vm1761 = vcmp.eq.f32.partialorder %v538, %v1681
      %vm1762 = vcmp.eq.f32.partialorder %v537, %v1684
      %vm1763 = vcmp.eq.f32.partialorder %v538, %v1684
      %vm1764 = vcmp.eq.f32.partialorder %v537, %v1687
      %vm1765 = vcmp.eq.f32.partialorder %v538, %v1687
      %vm1766 = vcmp.eq.f32.partialorder %v537, %v1690
      %vm1767 = vcmp.eq.f32.partialorder %v538, %v1690
      %vm1768 = vcmp.eq.f32.partialorder %v537, %v1693
      %vm1769 = vcmp.eq.f32.partialorder %v538, %v1693
      %vm1770 = vcmp.eq.f32.partialorder %v537, %v1696
      %vm1771 = vcmp.eq.f32.partialorder %v538, %v1696
      %vm1772 = vcmp.eq.f32.partialorder %v537, %v1699
      %vm1773 = vcmp.eq.f32.partialorder %v538, %v1699
      %vm1774 = vcmp.eq.f32.partialorder %v537, %v1702
      %vm1775 = vcmp.eq.f32.partialorder %v538, %v1702
      %vm1776 = vcmp.eq.f32.partialorder %v537, %v1705
      %vm1777 = vcmp.eq.f32.partialorder %v538, %v1705
      %vm1778 = vcmp.eq.f32.partialorder %v537, %v1708
      %vm1779 = vcmp.eq.f32.partialorder %v538, %v1708
      %vm1780 = vcmp.eq.f32.partialorder %v537, %v1711
      %vm1781 = vcmp.eq.f32.partialorder %v538, %v1711
      %vm1782 = vcmp.eq.f32.partialorder %v537, %v1714
      %vm1783 = vcmp.eq.f32.partialorder %v538, %v1714
      %vm1784 = vcmp.eq.f32.partialorder %v537, %v1717
      %vm1785 = vcmp.eq.f32.partialorder %v538, %v1717
      %vm1786 = vcmp.eq.f32.partialorder %v537, %v1720
      %vm1787 = vcmp.eq.f32.partialorder %v538, %v1720
      %vm1788 = vcmp.eq.f32.partialorder %v537, %v1723
      %vm1789 = vcmp.eq.f32.partialorder %v538, %v1723
      %vm1790 = vcmp.eq.f32.partialorder %v537, %v1726
      %vm1791 = vcmp.eq.f32.partialorder %v538, %v1726
      %v1792 = vsel %vm1760, -1e+30, %v1535
      %v1793 = vsel %vm1761, -1e+30, %v1536
      %v1794 = vsel %vm1762, -1e+30, %v1537
      %v1795 = vsel %vm1763, -1e+30, %v1538
      %v1796 = vsel %vm1764, -1e+30, %v1539
      %v1797 = vsel %vm1765, -1e+30, %v1540
      %v1798 = vsel %vm1766, -1e+30, %v1541
      %v1799 = vsel %vm1767, -1e+30, %v1542
      %v1800 = vsel %vm1768, -1e+30, %v1543
      %v1801 = vsel %vm1769, -1e+30, %v1544
      %v1802 = vsel %vm1770, -1e+30, %v1545
      %v1803 = vsel %vm1771, -1e+30, %v1546
      %v1804 = vsel %vm1772, -1e+30, %v1547
      %v1805 = vsel %vm1773, -1e+30, %v1548
      %v1806 = vsel %vm1774, -1e+30, %v1549
      %v1807 = vsel %vm1775, -1e+30, %v1550
      %v1808 = vsel %vm1776, -1e+30, %v1551
      %v1809 = vsel %vm1777, -1e+30, %v1552
      %v1810 = vsel %vm1778, -1e+30, %v1553
      %v1811 = vsel %vm1779, -1e+30, %v1554
      %v1812 = vsel %vm1780, -1e+30, %v1555
      %v1813 = vsel %vm1781, -1e+30, %v1556
      %v1814 = vsel %vm1782, -1e+30, %v1557
      %v1815 = vsel %vm1783, -1e+30, %v1558
      %v1816 = vsel %vm1784, -1e+30, %v1559
      %v1817 = vsel %vm1785, -1e+30, %v1560
      %v1818 = vsel %vm1786, -1e+30, %v1561
      %v1819 = vsel %vm1787, -1e+30, %v1562
      %v1820 = vsel %vm1788, -1e+30, %v1563
      %v1821 = vsel %vm1789, -1e+30, %v1564
      %v1822 = vsel %vm1790, -1e+30, %v1565
      %v1823 = vsel %vm1791, -1e+30, %v1566
      %v1824 = vmax.f32 %v1792, %v1793
      %1825 = vmax.xlane.f32.xlu0 %v1824
      %v1826 = vpop.xlane.xlu0 %1825
      %v1827 = vmax.f32 %v1794, %v1795
      %1828 = vmax.xlane.f32.xlu0 %v1827
      %v1829 = vpop.xlane.xlu0 %1828
      %v1830 = vmax.f32 %v1796, %v1797
      %1831 = vmax.xlane.f32.xlu0 %v1830
      %v1832 = vpop.xlane.xlu0 %1831
      %v1833 = vmax.f32 %v1798, %v1799
      %1834 = vmax.xlane.f32.xlu0 %v1833
      %v1835 = vpop.xlane.xlu0 %1834
      %v1836 = vmax.f32 %v1800, %v1801
      %1837 = vmax.xlane.f32.xlu0 %v1836
      %v1838 = vpop.xlane.xlu0 %1837
      %v1839 = vmax.f32 %v1802, %v1803
      %1840 = vmax.xlane.f32.xlu0 %v1839
      %v1841 = vpop.xlane.xlu0 %1840
      %v1842 = vmax.f32 %v1804, %v1805
      %1843 = vmax.xlane.f32.xlu0 %v1842
      %v1844 = vpop.xlane.xlu0 %1843
      %v1845 = vmax.f32 %v1806, %v1807
      %1846 = vmax.xlane.f32.xlu0 %v1845
      %v1847 = vpop.xlane.xlu0 %1846
      %v1848 = vmax.f32 %v1808, %v1809
      %1849 = vmax.xlane.f32.xlu0 %v1848
      %v1850 = vpop.xlane.xlu0 %1849
      %v1851 = vmax.f32 %v1810, %v1811
      %1852 = vmax.xlane.f32.xlu0 %v1851
      %v1853 = vpop.xlane.xlu0 %1852
      %v1854 = vmax.f32 %v1812, %v1813
      %1855 = vmax.xlane.f32.xlu0 %v1854
      %v1856 = vpop.xlane.xlu0 %1855
      %v1857 = vmax.f32 %v1814, %v1815
      %1858 = vmax.xlane.f32.xlu0 %v1857
      %v1859 = vpop.xlane.xlu0 %1858
      %v1860 = vmax.f32 %v1816, %v1817
      %1861 = vmax.xlane.f32.xlu0 %v1860
      %v1862 = vpop.xlane.xlu0 %1861
      %v1863 = vmax.f32 %v1818, %v1819
      %1864 = vmax.xlane.f32.xlu0 %v1863
      %v1865 = vpop.xlane.xlu0 %1864
      %v1866 = vmax.f32 %v1820, %v1821
      %1867 = vmax.xlane.f32.xlu0 %v1866
      %v1868 = vpop.xlane.xlu0 %1867
      %v1869 = vmax.f32 %v1822, %v1823
      %1870 = vmax.xlane.f32.xlu0 %v1869
      %v1871 = vpop.xlane.xlu0 %1870
      %vm1872 = vcmp.ge.f32.partialorder %v1792, %v1826
      %vm1873 = vcmp.ge.f32.partialorder %v1793, %v1826
      %vm1874 = vcmp.ge.f32.partialorder %v1794, %v1829
      %vm1875 = vcmp.ge.f32.partialorder %v1795, %v1829
      %vm1876 = vcmp.ge.f32.partialorder %v1796, %v1832
      %vm1877 = vcmp.ge.f32.partialorder %v1797, %v1832
      %vm1878 = vcmp.ge.f32.partialorder %v1798, %v1835
      %vm1879 = vcmp.ge.f32.partialorder %v1799, %v1835
      %vm1880 = vcmp.ge.f32.partialorder %v1800, %v1838
      %vm1881 = vcmp.ge.f32.partialorder %v1801, %v1838
      %vm1882 = vcmp.ge.f32.partialorder %v1802, %v1841
      %vm1883 = vcmp.ge.f32.partialorder %v1803, %v1841
      %vm1884 = vcmp.ge.f32.partialorder %v1804, %v1844
      %vm1885 = vcmp.ge.f32.partialorder %v1805, %v1844
      %vm1886 = vcmp.ge.f32.partialorder %v1806, %v1847
      %vm1887 = vcmp.ge.f32.partialorder %v1807, %v1847
      %vm1888 = vcmp.ge.f32.partialorder %v1808, %v1850
      %vm1889 = vcmp.ge.f32.partialorder %v1809, %v1850
      %vm1890 = vcmp.ge.f32.partialorder %v1810, %v1853
      %vm1891 = vcmp.ge.f32.partialorder %v1811, %v1853
      %vm1892 = vcmp.ge.f32.partialorder %v1812, %v1856
      %vm1893 = vcmp.ge.f32.partialorder %v1813, %v1856
      %vm1894 = vcmp.ge.f32.partialorder %v1814, %v1859
      %vm1895 = vcmp.ge.f32.partialorder %v1815, %v1859
      %vm1896 = vcmp.ge.f32.partialorder %v1816, %v1862
      %vm1897 = vcmp.ge.f32.partialorder %v1817, %v1862
      %vm1898 = vcmp.ge.f32.partialorder %v1818, %v1865
      %vm1899 = vcmp.ge.f32.partialorder %v1819, %v1865
      %vm1900 = vcmp.ge.f32.partialorder %v1820, %v1868
      %vm1901 = vcmp.ge.f32.partialorder %v1821, %v1868
      %vm1902 = vcmp.ge.f32.partialorder %v1822, %v1871
      %vm1903 = vcmp.ge.f32.partialorder %v1823, %v1871
      %v1904 = vsel %vm1872, %v537, 256.0
      %v1905 = vsel %vm1873, %v538, 256.0
      %v1906 = vsel %vm1874, %v537, 256.0
      %v1907 = vsel %vm1875, %v538, 256.0
      %v1908 = vsel %vm1876, %v537, 256.0
      %v1909 = vsel %vm1877, %v538, 256.0
      %v1910 = vsel %vm1878, %v537, 256.0
      %v1911 = vsel %vm1879, %v538, 256.0
      %v1912 = vsel %vm1880, %v537, 256.0
      %v1913 = vsel %vm1881, %v538, 256.0
      %v1914 = vsel %vm1882, %v537, 256.0
      %v1915 = vsel %vm1883, %v538, 256.0
      %v1916 = vsel %vm1884, %v537, 256.0
      %v1917 = vsel %vm1885, %v538, 256.0
      %v1918 = vsel %vm1886, %v537, 256.0
      %v1919 = vsel %vm1887, %v538, 256.0
      %v1920 = vsel %vm1888, %v537, 256.0
      %v1921 = vsel %vm1889, %v538, 256.0
      %v1922 = vsel %vm1890, %v537, 256.0
      %v1923 = vsel %vm1891, %v538, 256.0
      %v1924 = vsel %vm1892, %v537, 256.0
      %v1925 = vsel %vm1893, %v538, 256.0
      %v1926 = vsel %vm1894, %v537, 256.0
      %v1927 = vsel %vm1895, %v538, 256.0
      %v1928 = vsel %vm1896, %v537, 256.0
      %v1929 = vsel %vm1897, %v538, 256.0
      %v1930 = vsel %vm1898, %v537, 256.0
      %v1931 = vsel %vm1899, %v538, 256.0
      %v1932 = vsel %vm1900, %v537, 256.0
      %v1933 = vsel %vm1901, %v538, 256.0
      %v1934 = vsel %vm1902, %v537, 256.0
      %v1935 = vsel %vm1903, %v538, 256.0
      %v1936 = vmin.f32 %v1904, %v1905
      %1937 = vmin.xlane.f32.xlu0 %v1936
      %v1938 = vpop.xlane.xlu0 %1937
      %v1939 = vmin.f32 %v1906, %v1907
      %1940 = vmin.xlane.f32.xlu0 %v1939
      %v1941 = vpop.xlane.xlu0 %1940
      %v1942 = vmin.f32 %v1908, %v1909
      %1943 = vmin.xlane.f32.xlu0 %v1942
      %v1944 = vpop.xlane.xlu0 %1943
      %v1945 = vmin.f32 %v1910, %v1911
      %1946 = vmin.xlane.f32.xlu0 %v1945
      %v1947 = vpop.xlane.xlu0 %1946
      %v1948 = vmin.f32 %v1912, %v1913
      %1949 = vmin.xlane.f32.xlu0 %v1948
      %v1950 = vpop.xlane.xlu0 %1949
      %v1951 = vmin.f32 %v1914, %v1915
      %1952 = vmin.xlane.f32.xlu0 %v1951
      %v1953 = vpop.xlane.xlu0 %1952
      %v1954 = vmin.f32 %v1916, %v1917
      %1955 = vmin.xlane.f32.xlu0 %v1954
      %v1956 = vpop.xlane.xlu0 %1955
      %v1957 = vmin.f32 %v1918, %v1919
      %1958 = vmin.xlane.f32.xlu0 %v1957
      %v1959 = vpop.xlane.xlu0 %1958
      %v1960 = vmin.f32 %v1920, %v1921
      %1961 = vmin.xlane.f32.xlu0 %v1960
      %v1962 = vpop.xlane.xlu0 %1961
      %v1963 = vmin.f32 %v1922, %v1923
      %1964 = vmin.xlane.f32.xlu0 %v1963
      %v1965 = vpop.xlane.xlu0 %1964
      %v1966 = vmin.f32 %v1924, %v1925
      %1967 = vmin.xlane.f32.xlu0 %v1966
      %v1968 = vpop.xlane.xlu0 %1967
      %v1969 = vmin.f32 %v1926, %v1927
      %1970 = vmin.xlane.f32.xlu0 %v1969
      %v1971 = vpop.xlane.xlu0 %1970
      %v1972 = vmin.f32 %v1928, %v1929
      %1973 = vmin.xlane.f32.xlu0 %v1972
      %v1974 = vpop.xlane.xlu0 %1973
      %v1975 = vmin.f32 %v1930, %v1931
      %1976 = vmin.xlane.f32.xlu0 %v1975
      %v1977 = vpop.xlane.xlu0 %1976
      %v1978 = vmin.f32 %v1932, %v1933
      %1979 = vmin.xlane.f32.xlu0 %v1978
      %v1980 = vpop.xlane.xlu0 %1979
      %v1981 = vmin.f32 %v1934, %v1935
      %1982 = vmin.xlane.f32.xlu0 %v1981
      %v1983 = vpop.xlane.xlu0 %1982
      %vm1984 = vcmp.eq.s32.totalorder %v535, 5
      %v1985 = vcvt.f32.s32.to.zero.pseudo %v1938
      %v1986 = vcvt.f32.s32.to.zero.pseudo %v1941
      %v1987 = vcvt.f32.s32.to.zero.pseudo %v1944
      %v1988 = vcvt.f32.s32.to.zero.pseudo %v1947
      %v1989 = vcvt.f32.s32.to.zero.pseudo %v1950
      %v1990 = vcvt.f32.s32.to.zero.pseudo %v1953
      %v1991 = vcvt.f32.s32.to.zero.pseudo %v1956
      %v1992 = vcvt.f32.s32.to.zero.pseudo %v1959
      %v1993 = vcvt.f32.s32.to.zero.pseudo %v1962
      %v1994 = vcvt.f32.s32.to.zero.pseudo %v1965
      %v1995 = vcvt.f32.s32.to.zero.pseudo %v1968
      %v1996 = vcvt.f32.s32.to.zero.pseudo %v1971
      %v1997 = vcvt.f32.s32.to.zero.pseudo %v1974
      %v1998 = vcvt.f32.s32.to.zero.pseudo %v1977
      %v1999 = vcvt.f32.s32.to.zero.pseudo %v1980
      %v2000 = vcvt.f32.s32.to.zero.pseudo %v1983
      %v2001 = vsel %vm1984, %v1985, %v1744
      %v2002 = vsel %vm1984, %v1986, %v1745
      %v2003 = vsel %vm1984, %v1987, %v1746
      %v2004 = vsel %vm1984, %v1988, %v1747
      %v2005 = vsel %vm1984, %v1989, %v1748
      %v2006 = vsel %vm1984, %v1990, %v1749
      %v2007 = vsel %vm1984, %v1991, %v1750
      %v2008 = vsel %vm1984, %v1992, %v1751
      %v2009 = vsel %vm1984, %v1993, %v1752
      %v2010 = vsel %vm1984, %v1994, %v1753
      %v2011 = vsel %vm1984, %v1995, %v1754
      %v2012 = vsel %vm1984, %v1996, %v1755
      %v2013 = vsel %vm1984, %v1997, %v1756
      %v2014 = vsel %vm1984, %v1998, %v1757
      %v2015 = vsel %vm1984, %v1999, %v1758
      %v2016 = vsel %vm1984, %v2000, %v1759
      %vm2017 = vcmp.eq.f32.partialorder %v537, %v1938
      %vm2018 = vcmp.eq.f32.partialorder %v538, %v1938
      %vm2019 = vcmp.eq.f32.partialorder %v537, %v1941
      %vm2020 = vcmp.eq.f32.partialorder %v538, %v1941
      %vm2021 = vcmp.eq.f32.partialorder %v537, %v1944
      %vm2022 = vcmp.eq.f32.partialorder %v538, %v1944
      %vm2023 = vcmp.eq.f32.partialorder %v537, %v1947
      %vm2024 = vcmp.eq.f32.partialorder %v538, %v1947
      %vm2025 = vcmp.eq.f32.partialorder %v537, %v1950
      %vm2026 = vcmp.eq.f32.partialorder %v538, %v1950
      %vm2027 = vcmp.eq.f32.partialorder %v537, %v1953
      %vm2028 = vcmp.eq.f32.partialorder %v538, %v1953
      %vm2029 = vcmp.eq.f32.partialorder %v537, %v1956
      %vm2030 = vcmp.eq.f32.partialorder %v538, %v1956
      %vm2031 = vcmp.eq.f32.partialorder %v537, %v1959
      %vm2032 = vcmp.eq.f32.partialorder %v538, %v1959
      %vm2033 = vcmp.eq.f32.partialorder %v537, %v1962
      %vm2034 = vcmp.eq.f32.partialorder %v538, %v1962
      %vm2035 = vcmp.eq.f32.partialorder %v537, %v1965
      %vm2036 = vcmp.eq.f32.partialorder %v538, %v1965
      %vm2037 = vcmp.eq.f32.partialorder %v537, %v1968
      %vm2038 = vcmp.eq.f32.partialorder %v538, %v1968
      %vm2039 = vcmp.eq.f32.partialorder %v537, %v1971
      %vm2040 = vcmp.eq.f32.partialorder %v538, %v1971
      %vm2041 = vcmp.eq.f32.partialorder %v537, %v1974
      %vm2042 = vcmp.eq.f32.partialorder %v538, %v1974
      %vm2043 = vcmp.eq.f32.partialorder %v537, %v1977
      %vm2044 = vcmp.eq.f32.partialorder %v538, %v1977
      %vm2045 = vcmp.eq.f32.partialorder %v537, %v1980
      %vm2046 = vcmp.eq.f32.partialorder %v538, %v1980
      %vm2047 = vcmp.eq.f32.partialorder %v537, %v1983
      %vm2048 = vcmp.eq.f32.partialorder %v538, %v1983
      %v2049 = vsel %vm2017, -1e+30, %v1792
      %v2050 = vsel %vm2018, -1e+30, %v1793
      %v2051 = vsel %vm2019, -1e+30, %v1794
      %v2052 = vsel %vm2020, -1e+30, %v1795
      %v2053 = vsel %vm2021, -1e+30, %v1796
      %v2054 = vsel %vm2022, -1e+30, %v1797
      %v2055 = vsel %vm2023, -1e+30, %v1798
      %v2056 = vsel %vm2024, -1e+30, %v1799
      %v2057 = vsel %vm2025, -1e+30, %v1800
      %v2058 = vsel %vm2026, -1e+30, %v1801
      %v2059 = vsel %vm2027, -1e+30, %v1802
      %v2060 = vsel %vm2028, -1e+30, %v1803
      %v2061 = vsel %vm2029, -1e+30, %v1804
      %v2062 = vsel %vm2030, -1e+30, %v1805
      %v2063 = vsel %vm2031, -1e+30, %v1806
      %v2064 = vsel %vm2032, -1e+30, %v1807
      %v2065 = vsel %vm2033, -1e+30, %v1808
      %v2066 = vsel %vm2034, -1e+30, %v1809
      %v2067 = vsel %vm2035, -1e+30, %v1810
      %v2068 = vsel %vm2036, -1e+30, %v1811
      %v2069 = vsel %vm2037, -1e+30, %v1812
      %v2070 = vsel %vm2038, -1e+30, %v1813
      %v2071 = vsel %vm2039, -1e+30, %v1814
      %v2072 = vsel %vm2040, -1e+30, %v1815
      %v2073 = vsel %vm2041, -1e+30, %v1816
      %v2074 = vsel %vm2042, -1e+30, %v1817
      %v2075 = vsel %vm2043, -1e+30, %v1818
      %v2076 = vsel %vm2044, -1e+30, %v1819
      %v2077 = vsel %vm2045, -1e+30, %v1820
      %v2078 = vsel %vm2046, -1e+30, %v1821
      %v2079 = vsel %vm2047, -1e+30, %v1822
      %v2080 = vsel %vm2048, -1e+30, %v1823
      %v2081 = vmax.f32 %v2049, %v2050
      %2082 = vmax.xlane.f32.xlu0 %v2081
      %v2083 = vpop.xlane.xlu0 %2082
      %v2084 = vmax.f32 %v2051, %v2052
      %2085 = vmax.xlane.f32.xlu0 %v2084
      %v2086 = vpop.xlane.xlu0 %2085
      %v2087 = vmax.f32 %v2053, %v2054
      %2088 = vmax.xlane.f32.xlu0 %v2087
      %v2089 = vpop.xlane.xlu0 %2088
      %v2090 = vmax.f32 %v2055, %v2056
      %2091 = vmax.xlane.f32.xlu0 %v2090
      %v2092 = vpop.xlane.xlu0 %2091
      %v2093 = vmax.f32 %v2057, %v2058
      %2094 = vmax.xlane.f32.xlu0 %v2093
      %v2095 = vpop.xlane.xlu0 %2094
      %v2096 = vmax.f32 %v2059, %v2060
      %2097 = vmax.xlane.f32.xlu0 %v2096
      %v2098 = vpop.xlane.xlu0 %2097
      %v2099 = vmax.f32 %v2061, %v2062
      %2100 = vmax.xlane.f32.xlu0 %v2099
      %v2101 = vpop.xlane.xlu0 %2100
      %v2102 = vmax.f32 %v2063, %v2064
      %2103 = vmax.xlane.f32.xlu0 %v2102
      %v2104 = vpop.xlane.xlu0 %2103
      %v2105 = vmax.f32 %v2065, %v2066
      %2106 = vmax.xlane.f32.xlu0 %v2105
      %v2107 = vpop.xlane.xlu0 %2106
      %v2108 = vmax.f32 %v2067, %v2068
      %2109 = vmax.xlane.f32.xlu0 %v2108
      %v2110 = vpop.xlane.xlu0 %2109
      %v2111 = vmax.f32 %v2069, %v2070
      %2112 = vmax.xlane.f32.xlu0 %v2111
      %v2113 = vpop.xlane.xlu0 %2112
      %v2114 = vmax.f32 %v2071, %v2072
      %2115 = vmax.xlane.f32.xlu0 %v2114
      %v2116 = vpop.xlane.xlu0 %2115
      %v2117 = vmax.f32 %v2073, %v2074
      %2118 = vmax.xlane.f32.xlu0 %v2117
      %v2119 = vpop.xlane.xlu0 %2118
      %v2120 = vmax.f32 %v2075, %v2076
      %2121 = vmax.xlane.f32.xlu0 %v2120
      %v2122 = vpop.xlane.xlu0 %2121
      %v2123 = vmax.f32 %v2077, %v2078
      %2124 = vmax.xlane.f32.xlu0 %v2123
      %v2125 = vpop.xlane.xlu0 %2124
      %v2126 = vmax.f32 %v2079, %v2080
      %2127 = vmax.xlane.f32.xlu0 %v2126
      %v2128 = vpop.xlane.xlu0 %2127
      %vm2129 = vcmp.ge.f32.partialorder %v2049, %v2083
      %vm2130 = vcmp.ge.f32.partialorder %v2050, %v2083
      %vm2131 = vcmp.ge.f32.partialorder %v2051, %v2086
      %vm2132 = vcmp.ge.f32.partialorder %v2052, %v2086
      %vm2133 = vcmp.ge.f32.partialorder %v2053, %v2089
      %vm2134 = vcmp.ge.f32.partialorder %v2054, %v2089
      %vm2135 = vcmp.ge.f32.partialorder %v2055, %v2092
      %vm2136 = vcmp.ge.f32.partialorder %v2056, %v2092
      %vm2137 = vcmp.ge.f32.partialorder %v2057, %v2095
      %vm2138 = vcmp.ge.f32.partialorder %v2058, %v2095
      %vm2139 = vcmp.ge.f32.partialorder %v2059, %v2098
      %vm2140 = vcmp.ge.f32.partialorder %v2060, %v2098
      %vm2141 = vcmp.ge.f32.partialorder %v2061, %v2101
      %vm2142 = vcmp.ge.f32.partialorder %v2062, %v2101
      %vm2143 = vcmp.ge.f32.partialorder %v2063, %v2104
      %vm2144 = vcmp.ge.f32.partialorder %v2064, %v2104
      %vm2145 = vcmp.ge.f32.partialorder %v2065, %v2107
      %vm2146 = vcmp.ge.f32.partialorder %v2066, %v2107
      %vm2147 = vcmp.ge.f32.partialorder %v2067, %v2110
      %vm2148 = vcmp.ge.f32.partialorder %v2068, %v2110
      %vm2149 = vcmp.ge.f32.partialorder %v2069, %v2113
      %vm2150 = vcmp.ge.f32.partialorder %v2070, %v2113
      %vm2151 = vcmp.ge.f32.partialorder %v2071, %v2116
      %vm2152 = vcmp.ge.f32.partialorder %v2072, %v2116
      %vm2153 = vcmp.ge.f32.partialorder %v2073, %v2119
      %vm2154 = vcmp.ge.f32.partialorder %v2074, %v2119
      %vm2155 = vcmp.ge.f32.partialorder %v2075, %v2122
      %vm2156 = vcmp.ge.f32.partialorder %v2076, %v2122
      %vm2157 = vcmp.ge.f32.partialorder %v2077, %v2125
      %vm2158 = vcmp.ge.f32.partialorder %v2078, %v2125
      %vm2159 = vcmp.ge.f32.partialorder %v2079, %v2128
      %vm2160 = vcmp.ge.f32.partialorder %v2080, %v2128
      %v2161 = vsel %vm2129, %v537, 256.0
      %v2162 = vsel %vm2130, %v538, 256.0
      %v2163 = vsel %vm2131, %v537, 256.0
      %v2164 = vsel %vm2132, %v538, 256.0
      %v2165 = vsel %vm2133, %v537, 256.0
      %v2166 = vsel %vm2134, %v538, 256.0
      %v2167 = vsel %vm2135, %v537, 256.0
      %v2168 = vsel %vm2136, %v538, 256.0
      %v2169 = vsel %vm2137, %v537, 256.0
      %v2170 = vsel %vm2138, %v538, 256.0
      %v2171 = vsel %vm2139, %v537, 256.0
      %v2172 = vsel %vm2140, %v538, 256.0
      %v2173 = vsel %vm2141, %v537, 256.0
      %v2174 = vsel %vm2142, %v538, 256.0
      %v2175 = vsel %vm2143, %v537, 256.0
      %v2176 = vsel %vm2144, %v538, 256.0
      %v2177 = vsel %vm2145, %v537, 256.0
      %v2178 = vsel %vm2146, %v538, 256.0
      %v2179 = vsel %vm2147, %v537, 256.0
      %v2180 = vsel %vm2148, %v538, 256.0
      %v2181 = vsel %vm2149, %v537, 256.0
      %v2182 = vsel %vm2150, %v538, 256.0
      %v2183 = vsel %vm2151, %v537, 256.0
      %v2184 = vsel %vm2152, %v538, 256.0
      %v2185 = vsel %vm2153, %v537, 256.0
      %v2186 = vsel %vm2154, %v538, 256.0
      %v2187 = vsel %vm2155, %v537, 256.0
      %v2188 = vsel %vm2156, %v538, 256.0
      %v2189 = vsel %vm2157, %v537, 256.0
      %v2190 = vsel %vm2158, %v538, 256.0
      %v2191 = vsel %vm2159, %v537, 256.0
      %v2192 = vsel %vm2160, %v538, 256.0
      %v2193 = vmin.f32 %v2161, %v2162
      %2194 = vmin.xlane.f32.xlu0 %v2193
      %v2195 = vpop.xlane.xlu0 %2194
      %v2196 = vmin.f32 %v2163, %v2164
      %2197 = vmin.xlane.f32.xlu0 %v2196
      %v2198 = vpop.xlane.xlu0 %2197
      %v2199 = vmin.f32 %v2165, %v2166
      %2200 = vmin.xlane.f32.xlu0 %v2199
      %v2201 = vpop.xlane.xlu0 %2200
      %v2202 = vmin.f32 %v2167, %v2168
      %2203 = vmin.xlane.f32.xlu0 %v2202
      %v2204 = vpop.xlane.xlu0 %2203
      %v2205 = vmin.f32 %v2169, %v2170
      %2206 = vmin.xlane.f32.xlu0 %v2205
      %v2207 = vpop.xlane.xlu0 %2206
      %v2208 = vmin.f32 %v2171, %v2172
      %2209 = vmin.xlane.f32.xlu0 %v2208
      %v2210 = vpop.xlane.xlu0 %2209
      %v2211 = vmin.f32 %v2173, %v2174
      %2212 = vmin.xlane.f32.xlu0 %v2211
      %v2213 = vpop.xlane.xlu0 %2212
      %v2214 = vmin.f32 %v2175, %v2176
      %2215 = vmin.xlane.f32.xlu0 %v2214
      %v2216 = vpop.xlane.xlu0 %2215
      %v2217 = vmin.f32 %v2177, %v2178
      %2218 = vmin.xlane.f32.xlu0 %v2217
      %v2219 = vpop.xlane.xlu0 %2218
      %v2220 = vmin.f32 %v2179, %v2180
      %2221 = vmin.xlane.f32.xlu0 %v2220
      %v2222 = vpop.xlane.xlu0 %2221
      %v2223 = vmin.f32 %v2181, %v2182
      %2224 = vmin.xlane.f32.xlu0 %v2223
      %v2225 = vpop.xlane.xlu0 %2224
      %v2226 = vmin.f32 %v2183, %v2184
      %2227 = vmin.xlane.f32.xlu0 %v2226
      %v2228 = vpop.xlane.xlu0 %2227
      %v2229 = vmin.f32 %v2185, %v2186
      %2230 = vmin.xlane.f32.xlu0 %v2229
      %v2231 = vpop.xlane.xlu0 %2230
      %v2232 = vmin.f32 %v2187, %v2188
      %2233 = vmin.xlane.f32.xlu0 %v2232
      %v2234 = vpop.xlane.xlu0 %2233
      %v2235 = vmin.f32 %v2189, %v2190
      %2236 = vmin.xlane.f32.xlu0 %v2235
      %v2237 = vpop.xlane.xlu0 %2236
      %v2238 = vmin.f32 %v2191, %v2192
      %2239 = vmin.xlane.f32.xlu0 %v2238
      %v2240 = vpop.xlane.xlu0 %2239
      %vm2241 = vcmp.eq.s32.totalorder %v535, 6
      %v2242 = vcvt.f32.s32.to.zero.pseudo %v2195
      %v2243 = vcvt.f32.s32.to.zero.pseudo %v2198
      %v2244 = vcvt.f32.s32.to.zero.pseudo %v2201
      %v2245 = vcvt.f32.s32.to.zero.pseudo %v2204
      %v2246 = vcvt.f32.s32.to.zero.pseudo %v2207
      %v2247 = vcvt.f32.s32.to.zero.pseudo %v2210
      %v2248 = vcvt.f32.s32.to.zero.pseudo %v2213
      %v2249 = vcvt.f32.s32.to.zero.pseudo %v2216
      %v2250 = vcvt.f32.s32.to.zero.pseudo %v2219
      %v2251 = vcvt.f32.s32.to.zero.pseudo %v2222
      %v2252 = vcvt.f32.s32.to.zero.pseudo %v2225
      %v2253 = vcvt.f32.s32.to.zero.pseudo %v2228
      %v2254 = vcvt.f32.s32.to.zero.pseudo %v2231
      %v2255 = vcvt.f32.s32.to.zero.pseudo %v2234
      %v2256 = vcvt.f32.s32.to.zero.pseudo %v2237
      %v2257 = vcvt.f32.s32.to.zero.pseudo %v2240
      %v2258 = vsel %vm2241, %v2242, %v2001
      %v2259 = vsel %vm2241, %v2243, %v2002
      %v2260 = vsel %vm2241, %v2244, %v2003
      %v2261 = vsel %vm2241, %v2245, %v2004
      %v2262 = vsel %vm2241, %v2246, %v2005
      %v2263 = vsel %vm2241, %v2247, %v2006
      %v2264 = vsel %vm2241, %v2248, %v2007
      %v2265 = vsel %vm2241, %v2249, %v2008
      %v2266 = vsel %vm2241, %v2250, %v2009
      %v2267 = vsel %vm2241, %v2251, %v2010
      %v2268 = vsel %vm2241, %v2252, %v2011
      %v2269 = vsel %vm2241, %v2253, %v2012
      %v2270 = vsel %vm2241, %v2254, %v2013
      %v2271 = vsel %vm2241, %v2255, %v2014
      %v2272 = vsel %vm2241, %v2256, %v2015
      %v2273 = vsel %vm2241, %v2257, %v2016
      %vm2274 = vcmp.eq.f32.partialorder %v537, %v2195
      %vm2275 = vcmp.eq.f32.partialorder %v538, %v2195
      %vm2276 = vcmp.eq.f32.partialorder %v537, %v2198
      %vm2277 = vcmp.eq.f32.partialorder %v538, %v2198
      %vm2278 = vcmp.eq.f32.partialorder %v537, %v2201
      %vm2279 = vcmp.eq.f32.partialorder %v538, %v2201
      %vm2280 = vcmp.eq.f32.partialorder %v537, %v2204
      %vm2281 = vcmp.eq.f32.partialorder %v538, %v2204
      %vm2282 = vcmp.eq.f32.partialorder %v537, %v2207
      %vm2283 = vcmp.eq.f32.partialorder %v538, %v2207
      %vm2284 = vcmp.eq.f32.partialorder %v537, %v2210
      %vm2285 = vcmp.eq.f32.partialorder %v538, %v2210
      %vm2286 = vcmp.eq.f32.partialorder %v537, %v2213
      %vm2287 = vcmp.eq.f32.partialorder %v538, %v2213
      %vm2288 = vcmp.eq.f32.partialorder %v537, %v2216
      %vm2289 = vcmp.eq.f32.partialorder %v538, %v2216
      %vm2290 = vcmp.eq.f32.partialorder %v537, %v2219
      %vm2291 = vcmp.eq.f32.partialorder %v538, %v2219
      %vm2292 = vcmp.eq.f32.partialorder %v537, %v2222
      %vm2293 = vcmp.eq.f32.partialorder %v538, %v2222
      %vm2294 = vcmp.eq.f32.partialorder %v537, %v2225
      %vm2295 = vcmp.eq.f32.partialorder %v538, %v2225
      %vm2296 = vcmp.eq.f32.partialorder %v537, %v2228
      %vm2297 = vcmp.eq.f32.partialorder %v538, %v2228
      %vm2298 = vcmp.eq.f32.partialorder %v537, %v2231
      %vm2299 = vcmp.eq.f32.partialorder %v538, %v2231
      %vm2300 = vcmp.eq.f32.partialorder %v537, %v2234
      %vm2301 = vcmp.eq.f32.partialorder %v538, %v2234
      %vm2302 = vcmp.eq.f32.partialorder %v537, %v2237
      %vm2303 = vcmp.eq.f32.partialorder %v538, %v2237
      %vm2304 = vcmp.eq.f32.partialorder %v537, %v2240
      %vm2305 = vcmp.eq.f32.partialorder %v538, %v2240
      %v2306 = vsel %vm2274, -1e+30, %v2049
      %v2307 = vsel %vm2275, -1e+30, %v2050
      %v2308 = vsel %vm2276, -1e+30, %v2051
      %v2309 = vsel %vm2277, -1e+30, %v2052
      %v2310 = vsel %vm2278, -1e+30, %v2053
      %v2311 = vsel %vm2279, -1e+30, %v2054
      %v2312 = vsel %vm2280, -1e+30, %v2055
      %v2313 = vsel %vm2281, -1e+30, %v2056
      %v2314 = vsel %vm2282, -1e+30, %v2057
      %v2315 = vsel %vm2283, -1e+30, %v2058
      %v2316 = vsel %vm2284, -1e+30, %v2059
      %v2317 = vsel %vm2285, -1e+30, %v2060
      %v2318 = vsel %vm2286, -1e+30, %v2061
      %v2319 = vsel %vm2287, -1e+30, %v2062
      %v2320 = vsel %vm2288, -1e+30, %v2063
      %v2321 = vsel %vm2289, -1e+30, %v2064
      %v2322 = vsel %vm2290, -1e+30, %v2065
      %v2323 = vsel %vm2291, -1e+30, %v2066
      %v2324 = vsel %vm2292, -1e+30, %v2067
      %v2325 = vsel %vm2293, -1e+30, %v2068
      %v2326 = vsel %vm2294, -1e+30, %v2069
      %v2327 = vsel %vm2295, -1e+30, %v2070
      %v2328 = vsel %vm2296, -1e+30, %v2071
      %v2329 = vsel %vm2297, -1e+30, %v2072
      %v2330 = vsel %vm2298, -1e+30, %v2073
      %v2331 = vsel %vm2299, -1e+30, %v2074
      %v2332 = vsel %vm2300, -1e+30, %v2075
      %v2333 = vsel %vm2301, -1e+30, %v2076
      %v2334 = vsel %vm2302, -1e+30, %v2077
      %v2335 = vsel %vm2303, -1e+30, %v2078
      %v2336 = vsel %vm2304, -1e+30, %v2079
      %v2337 = vsel %vm2305, -1e+30, %v2080
      %v2338 = vmax.f32 %v2306, %v2307
      %2339 = vmax.xlane.f32.xlu0 %v2338
      %v2340 = vpop.xlane.xlu0 %2339
      %v2341 = vmax.f32 %v2308, %v2309
      %2342 = vmax.xlane.f32.xlu0 %v2341
      %v2343 = vpop.xlane.xlu0 %2342
      %v2344 = vmax.f32 %v2310, %v2311
      %2345 = vmax.xlane.f32.xlu0 %v2344
      %v2346 = vpop.xlane.xlu0 %2345
      %v2347 = vmax.f32 %v2312, %v2313
      %2348 = vmax.xlane.f32.xlu0 %v2347
      %v2349 = vpop.xlane.xlu0 %2348
      %v2350 = vmax.f32 %v2314, %v2315
      %2351 = vmax.xlane.f32.xlu0 %v2350
      %v2352 = vpop.xlane.xlu0 %2351
      %v2353 = vmax.f32 %v2316, %v2317
      %2354 = vmax.xlane.f32.xlu0 %v2353
      %v2355 = vpop.xlane.xlu0 %2354
      %v2356 = vmax.f32 %v2318, %v2319
      %2357 = vmax.xlane.f32.xlu0 %v2356
      %v2358 = vpop.xlane.xlu0 %2357
      %v2359 = vmax.f32 %v2320, %v2321
      %2360 = vmax.xlane.f32.xlu0 %v2359
      %v2361 = vpop.xlane.xlu0 %2360
      %v2362 = vmax.f32 %v2322, %v2323
      %2363 = vmax.xlane.f32.xlu0 %v2362
      %v2364 = vpop.xlane.xlu0 %2363
      %v2365 = vmax.f32 %v2324, %v2325
      %2366 = vmax.xlane.f32.xlu0 %v2365
      %v2367 = vpop.xlane.xlu0 %2366
      %v2368 = vmax.f32 %v2326, %v2327
      %2369 = vmax.xlane.f32.xlu0 %v2368
      %v2370 = vpop.xlane.xlu0 %2369
      %v2371 = vmax.f32 %v2328, %v2329
      %2372 = vmax.xlane.f32.xlu0 %v2371
      %v2373 = vpop.xlane.xlu0 %2372
      %v2374 = vmax.f32 %v2330, %v2331
      %2375 = vmax.xlane.f32.xlu0 %v2374
      %v2376 = vpop.xlane.xlu0 %2375
      %v2377 = vmax.f32 %v2332, %v2333
      %2378 = vmax.xlane.f32.xlu0 %v2377
      %v2379 = vpop.xlane.xlu0 %2378
      %v2380 = vmax.f32 %v2334, %v2335
      %2381 = vmax.xlane.f32.xlu0 %v2380
      %v2382 = vpop.xlane.xlu0 %2381
      %v2383 = vmax.f32 %v2336, %v2337
      %2384 = vmax.xlane.f32.xlu0 %v2383
      %v2385 = vpop.xlane.xlu0 %2384
      %vm2386 = vcmp.ge.f32.partialorder %v2306, %v2340
      %vm2387 = vcmp.ge.f32.partialorder %v2307, %v2340
      %vm2388 = vcmp.ge.f32.partialorder %v2308, %v2343
      %vm2389 = vcmp.ge.f32.partialorder %v2309, %v2343
      %vm2390 = vcmp.ge.f32.partialorder %v2310, %v2346
      %vm2391 = vcmp.ge.f32.partialorder %v2311, %v2346
      %vm2392 = vcmp.ge.f32.partialorder %v2312, %v2349
      %vm2393 = vcmp.ge.f32.partialorder %v2313, %v2349
      %vm2394 = vcmp.ge.f32.partialorder %v2314, %v2352
      %vm2395 = vcmp.ge.f32.partialorder %v2315, %v2352
      %vm2396 = vcmp.ge.f32.partialorder %v2316, %v2355
      %vm2397 = vcmp.ge.f32.partialorder %v2317, %v2355
      %vm2398 = vcmp.ge.f32.partialorder %v2318, %v2358
      %vm2399 = vcmp.ge.f32.partialorder %v2319, %v2358
      %vm2400 = vcmp.ge.f32.partialorder %v2320, %v2361
      %vm2401 = vcmp.ge.f32.partialorder %v2321, %v2361
      %vm2402 = vcmp.ge.f32.partialorder %v2322, %v2364
      %vm2403 = vcmp.ge.f32.partialorder %v2323, %v2364
      %vm2404 = vcmp.ge.f32.partialorder %v2324, %v2367
      %vm2405 = vcmp.ge.f32.partialorder %v2325, %v2367
      %vm2406 = vcmp.ge.f32.partialorder %v2326, %v2370
      %vm2407 = vcmp.ge.f32.partialorder %v2327, %v2370
      %vm2408 = vcmp.ge.f32.partialorder %v2328, %v2373
      %vm2409 = vcmp.ge.f32.partialorder %v2329, %v2373
      %vm2410 = vcmp.ge.f32.partialorder %v2330, %v2376
      %vm2411 = vcmp.ge.f32.partialorder %v2331, %v2376
      %vm2412 = vcmp.ge.f32.partialorder %v2332, %v2379
      %vm2413 = vcmp.ge.f32.partialorder %v2333, %v2379
      %vm2414 = vcmp.ge.f32.partialorder %v2334, %v2382
      %vm2415 = vcmp.ge.f32.partialorder %v2335, %v2382
      %vm2416 = vcmp.ge.f32.partialorder %v2336, %v2385
      %vm2417 = vcmp.ge.f32.partialorder %v2337, %v2385
      %v2418 = vsel %vm2386, %v537, 256.0
      %v2419 = vsel %vm2387, %v538, 256.0
      %v2420 = vsel %vm2388, %v537, 256.0
      %v2421 = vsel %vm2389, %v538, 256.0
      %v2422 = vsel %vm2390, %v537, 256.0
      %v2423 = vsel %vm2391, %v538, 256.0
      %v2424 = vsel %vm2392, %v537, 256.0
      %v2425 = vsel %vm2393, %v538, 256.0
      %v2426 = vsel %vm2394, %v537, 256.0
      %v2427 = vsel %vm2395, %v538, 256.0
      %v2428 = vsel %vm2396, %v537, 256.0
      %v2429 = vsel %vm2397, %v538, 256.0
      %v2430 = vsel %vm2398, %v537, 256.0
      %v2431 = vsel %vm2399, %v538, 256.0
      %v2432 = vsel %vm2400, %v537, 256.0
      %v2433 = vsel %vm2401, %v538, 256.0
      %v2434 = vsel %vm2402, %v537, 256.0
      %v2435 = vsel %vm2403, %v538, 256.0
      %v2436 = vsel %vm2404, %v537, 256.0
      %v2437 = vsel %vm2405, %v538, 256.0
      %v2438 = vsel %vm2406, %v537, 256.0
      %v2439 = vsel %vm2407, %v538, 256.0
      %v2440 = vsel %vm2408, %v537, 256.0
      %v2441 = vsel %vm2409, %v538, 256.0
      %v2442 = vsel %vm2410, %v537, 256.0
      %v2443 = vsel %vm2411, %v538, 256.0
      %v2444 = vsel %vm2412, %v537, 256.0
      %v2445 = vsel %vm2413, %v538, 256.0
      %v2446 = vsel %vm2414, %v537, 256.0
      %v2447 = vsel %vm2415, %v538, 256.0
      %v2448 = vsel %vm2416, %v537, 256.0
      %v2449 = vsel %vm2417, %v538, 256.0
      %v2450 = vmin.f32 %v2418, %v2419
      %2451 = vmin.xlane.f32.xlu0 %v2450
      %v2452 = vpop.xlane.xlu0 %2451
      %v2453 = vmin.f32 %v2420, %v2421
      %2454 = vmin.xlane.f32.xlu0 %v2453
      %v2455 = vpop.xlane.xlu0 %2454
      %v2456 = vmin.f32 %v2422, %v2423
      %2457 = vmin.xlane.f32.xlu0 %v2456
      %v2458 = vpop.xlane.xlu0 %2457
      %v2459 = vmin.f32 %v2424, %v2425
      %2460 = vmin.xlane.f32.xlu0 %v2459
      %v2461 = vpop.xlane.xlu0 %2460
      %v2462 = vmin.f32 %v2426, %v2427
      %2463 = vmin.xlane.f32.xlu0 %v2462
      %v2464 = vpop.xlane.xlu0 %2463
      %v2465 = vmin.f32 %v2428, %v2429
      %2466 = vmin.xlane.f32.xlu0 %v2465
      %v2467 = vpop.xlane.xlu0 %2466
      %v2468 = vmin.f32 %v2430, %v2431
      %2469 = vmin.xlane.f32.xlu0 %v2468
      %v2470 = vpop.xlane.xlu0 %2469
      %v2471 = vmin.f32 %v2432, %v2433
      %2472 = vmin.xlane.f32.xlu0 %v2471
      %v2473 = vpop.xlane.xlu0 %2472
      %v2474 = vmin.f32 %v2434, %v2435
      %2475 = vmin.xlane.f32.xlu0 %v2474
      %v2476 = vpop.xlane.xlu0 %2475
      %v2477 = vmin.f32 %v2436, %v2437
      %2478 = vmin.xlane.f32.xlu0 %v2477
      %v2479 = vpop.xlane.xlu0 %2478
      %v2480 = vmin.f32 %v2438, %v2439
      %2481 = vmin.xlane.f32.xlu0 %v2480
      %v2482 = vpop.xlane.xlu0 %2481
      %v2483 = vmin.f32 %v2440, %v2441
      %2484 = vmin.xlane.f32.xlu0 %v2483
      %v2485 = vpop.xlane.xlu0 %2484
      %v2486 = vmin.f32 %v2442, %v2443
      %2487 = vmin.xlane.f32.xlu0 %v2486
      %v2488 = vpop.xlane.xlu0 %2487
      %v2489 = vmin.f32 %v2444, %v2445
      %2490 = vmin.xlane.f32.xlu0 %v2489
      %v2491 = vpop.xlane.xlu0 %2490
      %v2492 = vmin.f32 %v2446, %v2447
      %2493 = vmin.xlane.f32.xlu0 %v2492
      %v2494 = vpop.xlane.xlu0 %2493
      %v2495 = vmin.f32 %v2448, %v2449
      %2496 = vmin.xlane.f32.xlu0 %v2495
      %v2497 = vpop.xlane.xlu0 %2496
      %vm2498 = vcmp.eq.s32.totalorder %v535, 7
      %v2499 = vcvt.f32.s32.to.zero.pseudo %v2452
      %v2500 = vcvt.f32.s32.to.zero.pseudo %v2455
      %v2501 = vcvt.f32.s32.to.zero.pseudo %v2458
      %v2502 = vcvt.f32.s32.to.zero.pseudo %v2461
      %v2503 = vcvt.f32.s32.to.zero.pseudo %v2464
      %v2504 = vcvt.f32.s32.to.zero.pseudo %v2467
      %v2505 = vcvt.f32.s32.to.zero.pseudo %v2470
      %v2506 = vcvt.f32.s32.to.zero.pseudo %v2473
      %v2507 = vcvt.f32.s32.to.zero.pseudo %v2476
      %v2508 = vcvt.f32.s32.to.zero.pseudo %v2479
      %v2509 = vcvt.f32.s32.to.zero.pseudo %v2482
      %v2510 = vcvt.f32.s32.to.zero.pseudo %v2485
      %v2511 = vcvt.f32.s32.to.zero.pseudo %v2488
      %v2512 = vcvt.f32.s32.to.zero.pseudo %v2491
      %v2513 = vcvt.f32.s32.to.zero.pseudo %v2494
      %v2514 = vcvt.f32.s32.to.zero.pseudo %v2497
      %v2515 = vsel %vm2498, %v2499, %v2258
      %v2516 = vsel %vm2498, %v2500, %v2259
      %v2517 = vsel %vm2498, %v2501, %v2260
      %v2518 = vsel %vm2498, %v2502, %v2261
      %v2519 = vsel %vm2498, %v2503, %v2262
      %v2520 = vsel %vm2498, %v2504, %v2263
      %v2521 = vsel %vm2498, %v2505, %v2264
      %v2522 = vsel %vm2498, %v2506, %v2265
      %v2523 = vsel %vm2498, %v2507, %v2266
      %v2524 = vsel %vm2498, %v2508, %v2267
      %v2525 = vsel %vm2498, %v2509, %v2268
      %v2526 = vsel %vm2498, %v2510, %v2269
      %v2527 = vsel %vm2498, %v2511, %v2270
      %v2528 = vsel %vm2498, %v2512, %v2271
      %v2529 = vsel %vm2498, %v2513, %v2272
      %v2530 = vsel %vm2498, %v2514, %v2273
      %vm2531 = vcmask 64512
      %2532 = vst.msk [vmem:[%s240] sm:$0xff] %vm2531, %v2515
      %2533 = vst.msk [vmem:[%s240 + $0x8] sm:$0xff] %vm2531, %v2516
      %2534 = vst.msk [vmem:[%s240 + $0x10] sm:$0xff] %vm2531, %v2517
      %2535 = vst.msk [vmem:[%s240 + $0x18] sm:$0xff] %vm2531, %v2518
      %2536 = vst.msk [vmem:[%s240 + $0x20] sm:$0xff] %vm2531, %v2519
      %2537 = vst.msk [vmem:[%s240 + $0x28] sm:$0xff] %vm2531, %v2520
      %2538 = vst.msk [vmem:[%s240 + $0x30] sm:$0xff] %vm2531, %v2521
      %2539 = vst.msk [vmem:[%s240 + $0x38] sm:$0xff] %vm2531, %v2522
      %2540 = vst.msk [vmem:[%s240 + $0x40] sm:$0xff] %vm2531, %v2523
      %2541 = vst.msk [vmem:[%s240 + $0x48] sm:$0xff] %vm2531, %v2524
      %2542 = vst.msk [vmem:[%s240 + $0x50] sm:$0xff] %vm2531, %v2525
      %2543 = vst.msk [vmem:[%s240 + $0x58] sm:$0xff] %vm2531, %v2526
      %2544 = vst.msk [vmem:[%s240 + $0x60] sm:$0xff] %vm2531, %v2527
      %2545 = vst.msk [vmem:[%s240 + $0x68] sm:$0xff] %vm2531, %v2528
      %2546 = vst.msk [vmem:[%s240 + $0x70] sm:$0xff] %vm2531, %v2529
      %2547 = vst.msk [vmem:[%s240 + $0x78] sm:$0xff] %vm2531, %v2530
      %s2548 = smul.u32 16, %s19
      %p2549 = scmp.lt.s32.totalorder %s18, 1
      %s2550 = scalar_select %p2549, %s18, 1
      %p2551 = scmp.lt.s32.totalorder %s2548, 31
      %s2552 = scalar_select %p2551, %s2548, 31
      %s2553 = smul.addr %s2550, 32
      %s2554 = sadd.s32 %s2552, %s2553
      %s2555 = smul.addr %s2554, 8
      %s2556 = scalar_lea.vmem %s3, %s2555
      // Predicated region
      $region33: #{cic_forward.3} parent=31 // pred_check
        %p2557 = pneg %p126
      $region34: #{cic_forward.3} parent=31 // pred_check_branch
        %2559 = sbr.rel (%p2557) target = $region36
      $region35: #{cic_forward.3} parent=31 // pred_region
        %s2560 = smul.u32 16, %s19
      $region36: #{cic_forward.3} parent=31 // pred_fallthru
        _
    $region32: #{cic_forward.3} parent=5 // pred_fallthru
      _
    %p2561 = scmp.le.s32.totalorder 2, %s9
    // Predicated region
    $region37: #{cic_forward.3} parent=5 // pred_check
      %p2562 = pneg %p2561
    $region38: #{cic_forward.3} parent=5 // pred_check_branch
      %2564 = sbr.rel (%p2562) target = $region40
    $region39: #{cic_forward.3} parent=5 // pred_region
      %s2565 = ssub.s32 %s9, 2
      // Predicated region
      $region41: #{cic_forward.3} parent=39 // pred_check
        %p2566 = pneg %p132
      $region42: #{cic_forward.3} parent=39 // pred_check_branch
        %2568 = sbr.rel (%p2566) target = $region44
      $region43: #{cic_forward.3} parent=39 // pred_region
        %s2569 = smul.u32 16, %s21
        %p2570 = scmp.lt.s32.totalorder %s20, 1
        %s2571 = scalar_select %p2570, %s20, 1
        %p2572 = scmp.lt.s32.totalorder %s2569, 31
        %s2573 = scalar_select %p2572, %s2569, 31
        %s2574 = smul.addr %s2571, 32
        %s2575 = sadd.s32 %s2573, %s2574
        %s2576 = smul.addr %s2575, 8
        %s2577 = scalar_lea.vmem %s3, %s2576
      $region44: #{cic_forward.3} parent=39 // pred_fallthru
        _
    $region40: #{cic_forward.3} parent=5 // pred_fallthru
      _
  $region6: #{cic_forward.3} parent=0 // loop_footer
    %s13 = sadd.s32 1, %s9
  $region7: #{cic_forward.3} parent=0 // loop_footer_branch
    %8 = sbr.rel target = $region3
  $region8: #{cic_forward.3} parent=0 // loop_exit
    _

// kernel: cic_forward.5
$region0: #{cic_forward.5}
  #allocation0 [shape = 'u32[]', space=smem, size = 0x4, offset = 0x4, fixed_abs, tag = 'smem constant byte address 0x4 - core index']
  #allocation1 [shape = 'u32[72,128]{1,0:T(1,128)}', space=vmem, size = 0x9000, scoped, tag = 'internal scratch']
  %s0 = inlined_call_operand.vmem [shape: bf16[4,3,1024], index: 0, kind: input, shape index: {}]
  %s1 = inlined_call_operand.vmem [shape: bf16[4,8,1024], index: 1, kind: input, shape index: {}]
  %s2 = inlined_call_operand.vmem [shape: bf16[3,512], index: 2, kind: input, shape index: {}]
  %s3 = inlined_call_operand.vmem [shape: bf16[16,512], index: 3, kind: input, shape index: {}]
  %s4 = inlined_call_operand.vmem [shape: bf16[8,3], index: 4, kind: input, shape index: {}]
  %s5 = inlined_call_operand.vmem [shape: bf16[8,3], index: 5, kind: input, shape index: {}]
  %s6 = inlined_call_operand.vmem [shape: f32[8,1], index: 6, kind: input, shape index: {}]
  %s7 = inlined_call_operand.vmem [shape: bf16[8,8], index: 7, kind: input, shape index: {}]
  %s8 = inlined_call_operand.vmem [shape: f32[8,1], index: 8, kind: input, shape index: {}]
  %s9 = inlined_call_operand.vmem [shape: bf16[8,8], index: 9, kind: input, shape index: {}]
  %s10 = inlined_call_operand.vmem [shape: f32[8,1], index: 10, kind: input, shape index: {}]
  %s11 = inlined_call_operand.vmem [shape: bf16[32,8], index: 11, kind: input, shape index: {}]
  %s12 = inlined_call_operand.vmem [shape: f32[32,1], index: 12, kind: input, shape index: {}]
  %s13 = inlined_call_operand.vmem [shape: bf16[32,16], index: 13, kind: input, shape index: {}]
  %s14 = inlined_call_operand.vmem [shape: f32[32,1], index: 14, kind: input, shape index: {}]
  %s15 = inlined_call_operand.vmem [shape: f32[32,512], index: 15, kind: output, shape index: {}]
  %s16 = sld [smem:[#allocation0]]
  $region168: #{cic_forward.5} parent=0
    _
  %s18 = ssub.s32 1, %s16
  %s19 = scalar_select 0, %s18, %s16
  $region1: #{cic_forward.5} parent=0
    #allocation2 [shape = 'u8[8192]{0}', space=vmem, size = 0x2000, scoped, tag = 'input window, operand 3']
    #allocation3 [shape = 'u8[32768]{0}', space=vmem, size = 0x8000, scoped, tag = 'output window, operand 0']
    loop: start=0, step=1, limit=6
    $region2: #{cic_forward.5} parent=1 // loop_pre_header
      _
    $region3: #{cic_forward.5} parent=1 // loop_header
      %s21 = sphi 0, %s25
      %p22 = scmp.ge.s32.totalorder %s21, 6
      %s31 = sphi 0, %s33
      %s34 = sphi 0, %s31
      %s35 = sphi 0, %s34
      %s51 = sphi 0, %s35
      %s57 = sphi 0, %s59
      %s60 = sphi 0, %s57
      %s61 = sphi 0, %s60
      %s77 = sphi 0, %s61
      %s83 = sphi 0, %s85
      %s86 = sphi 0, %s83
      %s87 = sphi 0, %s86
      %s103 = sphi 0, %s87
      %s109 = sphi 0, %s111
      %s112 = sphi 0, %s109
      %s113 = sphi 0, %s112
      %s129 = sphi 0, %s113
      %s133 = sphi 0, %s133
      %s135 = sphi 0, %s133
      %s136 = sphi 0, %s135
      %s150 = sphi 0, %s136
      %s154 = sphi 0, %s154
      %s156 = sphi 0, %s154
      %s157 = sphi 0, %s156
      %s171 = sphi 0, %s157
      %s175 = sphi 0, %s175
      %s177 = sphi 0, %s175
      %s178 = sphi 0, %s177
      %s192 = sphi 0, %s178
      %s196 = sphi 0, %s196
      %s198 = sphi 0, %s196
      %s199 = sphi 0, %s198
      %s213 = sphi 0, %s199
      %s217 = sphi 0, %s217
      %s219 = sphi 0, %s217
      %s220 = sphi 0, %s219
      %s234 = sphi 0, %s220
      %s238 = sphi 0, %s238
      %s240 = sphi 0, %s238
      %s241 = sphi 0, %s240
      %s255 = sphi 0, %s241
      %s259 = sphi 0, %s259
      %s261 = sphi 0, %s259
      %s262 = sphi 0, %s261
      %s276 = sphi 0, %s262
      %s280 = sphi 0, %s280
      %s282 = sphi 0, %s280
      %s283 = sphi 0, %s282
      %s297 = sphi 0, %s283
      %s301 = sphi 0, %s301
      %s303 = sphi 0, %s301
      %s304 = sphi 0, %s303
      %s318 = sphi 0, %s304
      %s322 = sphi 0, %s322
      %s324 = sphi 0, %s322
      %s325 = sphi 0, %s324
      %s339 = sphi 0, %s325
      %s343 = sphi 0, %s343
      %s345 = sphi 0, %s343
      %s346 = sphi 0, %s345
      %s360 = sphi 0, %s346
      %s366 = sphi 0, %s368
      %s369 = sphi 0, %s366
      %s370 = sphi 0, %s369
      %s386 = sphi 0, %s370
    $region4: #{cic_forward.5} parent=1 // loop_header_branch
      %24 = sbr.rel (%p22) target = $region8
    $region5: #{cic_forward.5} parent=1 // loop_body
      %s26 = ssub.s32 %s21, 1
      %s27 = ssub.s32 %s21, 2
      %s28 = sadd.s32 %s21, 1
      %s29 = ssub.s32 %s21, %s28
      %p30 = scmp.eq.s32.totalorder %s29, 0
      %s32 = sadd.s32 %s31, 1
      %s33 = scalar_select %p30, %s31, %s32
      %p36 = pneg %p30
      %p37 = scmp.eq.s32.totalorder %s21, 3
      %p38 = por %p36, %p37
      %p39 = scmp.ne.s32.totalorder %s31, %s34
      %p40 = scmp.eq.s32.totalorder %s21, 0
      %p41 = por %p39, %p40
      %p42 = scmp.ne.s32.totalorder %s31, %s34
      %p43 = scmp.eq.s32.totalorder %s26, 3
      %p44 = por %p42, %p43
      %p45 = scmp.ne.s32.totalorder %s34, %s35
      %p46 = scmp.eq.s32.totalorder %s26, 0
      %p47 = por %p45, %p46
      %p48 = scmp.ne.s32.totalorder %s34, %s35
      %p49 = scmp.eq.s32.totalorder %s27, 3
      %p50 = por %p48, %p49
      %p52 = scmp.ne.s32.totalorder %s35, %s51
      %p53 = scmp.eq.s32.totalorder %s27, 0
      %p54 = por %p52, %p53
      %s55 = ssub.s32 %s21, %s28
      %p56 = scmp.eq.s32.totalorder %s55, 0
      %s58 = sadd.s32 %s57, 1
      %s59 = scalar_select %p56, %s57, %s58
      %p62 = pneg %p56
      %p63 = scmp.eq.s32.totalorder %s21, 3
      %p64 = por %p62, %p63
      %p65 = scmp.ne.s32.totalorder %s57, %s60
      %p66 = scmp.eq.s32.totalorder %s21, 0
      %p67 = por %p65, %p66
      %p68 = scmp.ne.s32.totalorder %s57, %s60
      %p69 = scmp.eq.s32.totalorder %s26, 3
      %p70 = por %p68, %p69
      %p71 = scmp.ne.s32.totalorder %s60, %s61
      %p72 = scmp.eq.s32.totalorder %s26, 0
      %p73 = por %p71, %p72
      %p74 = scmp.ne.s32.totalorder %s60, %s61
      %p75 = scmp.eq.s32.totalorder %s27, 3
      %p76 = por %p74, %p75
      %p78 = scmp.ne.s32.totalorder %s61, %s77
      %p79 = scmp.eq.s32.totalorder %s27, 0
      %p80 = por %p78, %p79
      %s81 = ssub.s32 %s21, %s28
      %p82 = scmp.eq.s32.totalorder %s81, 0
      %s84 = sadd.s32 %s83, 1
      %s85 = scalar_select %p82, %s83, %s84
      %p88 = pneg %p82
      %p89 = scmp.eq.s32.totalorder %s21, 3
      %p90 = por %p88, %p89
      %p91 = scmp.ne.s32.totalorder %s83, %s86
      %p92 = scmp.eq.s32.totalorder %s21, 0
      %p93 = por %p91, %p92
      %p94 = scmp.ne.s32.totalorder %s83, %s86
      %p95 = scmp.eq.s32.totalorder %s26, 3
      %p96 = por %p94, %p95
      %p97 = scmp.ne.s32.totalorder %s86, %s87
      %p98 = scmp.eq.s32.totalorder %s26, 0
      %p99 = por %p97, %p98
      %p100 = scmp.ne.s32.totalorder %s86, %s87
      %p101 = scmp.eq.s32.totalorder %s27, 3
      %p102 = por %p100, %p101
      %p104 = scmp.ne.s32.totalorder %s87, %s103
      %p105 = scmp.eq.s32.totalorder %s27, 0
      %p106 = por %p104, %p105
      %s107 = ssub.s32 %s21, %s28
      %p108 = scmp.eq.s32.totalorder %s107, 0
      %s110 = sadd.s32 %s109, 1
      %s111 = scalar_select %p108, %s109, %s110
      %p114 = pneg %p108
      %p115 = scmp.eq.s32.totalorder %s21, 3
      %p116 = por %p114, %p115
      %p117 = scmp.ne.s32.totalorder %s109, %s112
      %p118 = scmp.eq.s32.totalorder %s21, 0
      %p119 = por %p117, %p118
      %p120 = scmp.ne.s32.totalorder %s109, %s112
      %p121 = scmp.eq.s32.totalorder %s26, 3
      %p122 = por %p120, %p121
      %p123 = scmp.ne.s32.totalorder %s112, %s113
      %p124 = scmp.eq.s32.totalorder %s26, 0
      %p125 = por %p123, %p124
      %p126 = scmp.ne.s32.totalorder %s112, %s113
      %p127 = scmp.eq.s32.totalorder %s27, 3
      %p128 = por %p126, %p127
      %p130 = scmp.ne.s32.totalorder %s113, %s129
      %p131 = scmp.eq.s32.totalorder %s27, 0
      %p132 = por %p130, %p131
      %s134 = sadd.s32 %s133, 1
      %p137 = scmp.eq.s32.totalorder %s21, 3
      %p138 = scmp.ne.s32.totalorder %s133, %s135
      %p139 = scmp.eq.s32.totalorder %s21, 0
      %p140 = por %p138, %p139
      %p141 = scmp.ne.s32.totalorder %s133, %s135
      %p142 = scmp.eq.s32.totalorder %s26, 3
      %p143 = por %p141, %p142
      %p144 = scmp.ne.s32.totalorder %s135, %s136
      %p145 = scmp.eq.s32.totalorder %s26, 0
      %p146 = por %p144, %p145
      %p147 = scmp.ne.s32.totalorder %s135, %s136
      %p148 = scmp.eq.s32.totalorder %s27, 3
      %p149 = por %p147, %p148
      %p151 = scmp.ne.s32.totalorder %s136, %s150
      %p152 = scmp.eq.s32.totalorder %s27, 0
      %p153 = por %p151, %p152
      %s155 = sadd.s32 %s154, 1
      %p158 = scmp.eq.s32.totalorder %s21, 3
      %p159 = scmp.ne.s32.totalorder %s154, %s156
      %p160 = scmp.eq.s32.totalorder %s21, 0
      %p161 = por %p159, %p160
      %p162 = scmp.ne.s32.totalorder %s154, %s156
      %p163 = scmp.eq.s32.totalorder %s26, 3
      %p164 = por %p162, %p163
      %p165 = scmp.ne.s32.totalorder %s156, %s157
      %p166 = scmp.eq.s32.totalorder %s26, 0
      %p167 = por %p165, %p166
      %p168 = scmp.ne.s32.totalorder %s156, %s157
      %p169 = scmp.eq.s32.totalorder %s27, 3
      %p170 = por %p168, %p169
      %p172 = scmp.ne.s32.totalorder %s157, %s171
      %p173 = scmp.eq.s32.totalorder %s27, 0
      %p174 = por %p172, %p173
      %s176 = sadd.s32 %s175, 1
      %p179 = scmp.eq.s32.totalorder %s21, 3
      %p180 = scmp.ne.s32.totalorder %s175, %s177
      %p181 = scmp.eq.s32.totalorder %s21, 0
      %p182 = por %p180, %p181
      %p183 = scmp.ne.s32.totalorder %s175, %s177
      %p184 = scmp.eq.s32.totalorder %s26, 3
      %p185 = por %p183, %p184
      %p186 = scmp.ne.s32.totalorder %s177, %s178
      %p187 = scmp.eq.s32.totalorder %s26, 0
      %p188 = por %p186, %p187
      %p189 = scmp.ne.s32.totalorder %s177, %s178
      %p190 = scmp.eq.s32.totalorder %s27, 3
      %p191 = por %p189, %p190
      %p193 = scmp.ne.s32.totalorder %s178, %s192
      %p194 = scmp.eq.s32.totalorder %s27, 0
      %p195 = por %p193, %p194
      %s197 = sadd.s32 %s196, 1
      %p200 = scmp.eq.s32.totalorder %s21, 3
      %p201 = scmp.ne.s32.totalorder %s196, %s198
      %p202 = scmp.eq.s32.totalorder %s21, 0
      %p203 = por %p201, %p202
      %p204 = scmp.ne.s32.totalorder %s196, %s198
      %p205 = scmp.eq.s32.totalorder %s26, 3
      %p206 = por %p204, %p205
      %p207 = scmp.ne.s32.totalorder %s198, %s199
      %p208 = scmp.eq.s32.totalorder %s26, 0
      %p209 = por %p207, %p208
      %p210 = scmp.ne.s32.totalorder %s198, %s199
      %p211 = scmp.eq.s32.totalorder %s27, 3
      %p212 = por %p210, %p211
      %p214 = scmp.ne.s32.totalorder %s199, %s213
      %p215 = scmp.eq.s32.totalorder %s27, 0
      %p216 = por %p214, %p215
      %s218 = sadd.s32 %s217, 1
      %p221 = scmp.eq.s32.totalorder %s21, 3
      %p222 = scmp.ne.s32.totalorder %s217, %s219
      %p223 = scmp.eq.s32.totalorder %s21, 0
      %p224 = por %p222, %p223
      %p225 = scmp.ne.s32.totalorder %s217, %s219
      %p226 = scmp.eq.s32.totalorder %s26, 3
      %p227 = por %p225, %p226
      %p228 = scmp.ne.s32.totalorder %s219, %s220
      %p229 = scmp.eq.s32.totalorder %s26, 0
      %p230 = por %p228, %p229
      %p231 = scmp.ne.s32.totalorder %s219, %s220
      %p232 = scmp.eq.s32.totalorder %s27, 3
      %p233 = por %p231, %p232
      %p235 = scmp.ne.s32.totalorder %s220, %s234
      %p236 = scmp.eq.s32.totalorder %s27, 0
      %p237 = por %p235, %p236
      %s239 = sadd.s32 %s238, 1
      %p242 = scmp.eq.s32.totalorder %s21, 3
      %p243 = scmp.ne.s32.totalorder %s238, %s240
      %p244 = scmp.eq.s32.totalorder %s21, 0
      %p245 = por %p243, %p244
      %p246 = scmp.ne.s32.totalorder %s238, %s240
      %p247 = scmp.eq.s32.totalorder %s26, 3
      %p248 = por %p246, %p247
      %p249 = scmp.ne.s32.totalorder %s240, %s241
      %p250 = scmp.eq.s32.totalorder %s26, 0
      %p251 = por %p249, %p250
      %p252 = scmp.ne.s32.totalorder %s240, %s241
      %p253 = scmp.eq.s32.totalorder %s27, 3
      %p254 = por %p252, %p253
      %p256 = scmp.ne.s32.totalorder %s241, %s255
      %p257 = scmp.eq.s32.totalorder %s27, 0
      %p258 = por %p256, %p257
      %s260 = sadd.s32 %s259, 1
      %p263 = scmp.eq.s32.totalorder %s21, 3
      %p264 = scmp.ne.s32.totalorder %s259, %s261
      %p265 = scmp.eq.s32.totalorder %s21, 0
      %p266 = por %p264, %p265
      %p267 = scmp.ne.s32.totalorder %s259, %s261
      %p268 = scmp.eq.s32.totalorder %s26, 3
      %p269 = por %p267, %p268
      %p270 = scmp.ne.s32.totalorder %s261, %s262
      %p271 = scmp.eq.s32.totalorder %s26, 0
      %p272 = por %p270, %p271
      %p273 = scmp.ne.s32.totalorder %s261, %s262
      %p274 = scmp.eq.s32.totalorder %s27, 3
      %p275 = por %p273, %p274
      %p277 = scmp.ne.s32.totalorder %s262, %s276
      %p278 = scmp.eq.s32.totalorder %s27, 0
      %p279 = por %p277, %p278
      %s281 = sadd.s32 %s280, 1
      %p284 = scmp.eq.s32.totalorder %s21, 3
      %p285 = scmp.ne.s32.totalorder %s280, %s282
      %p286 = scmp.eq.s32.totalorder %s21, 0
      %p287 = por %p285, %p286
      %p288 = scmp.ne.s32.totalorder %s280, %s282
      %p289 = scmp.eq.s32.totalorder %s26, 3
      %p290 = por %p288, %p289
      %p291 = scmp.ne.s32.totalorder %s282, %s283
      %p292 = scmp.eq.s32.totalorder %s26, 0
      %p293 = por %p291, %p292
      %p294 = scmp.ne.s32.totalorder %s282, %s283
      %p295 = scmp.eq.s32.totalorder %s27, 3
      %p296 = por %p294, %p295
      %p298 = scmp.ne.s32.totalorder %s283, %s297
      %p299 = scmp.eq.s32.totalorder %s27, 0
      %p300 = por %p298, %p299
      %s302 = sadd.s32 %s301, 1
      %p305 = scmp.eq.s32.totalorder %s21, 3
      %p306 = scmp.ne.s32.totalorder %s301, %s303
      %p307 = scmp.eq.s32.totalorder %s21, 0
      %p308 = por %p306, %p307
      %p309 = scmp.ne.s32.totalorder %s301, %s303
      %p310 = scmp.eq.s32.totalorder %s26, 3
      %p311 = por %p309, %p310
      %p312 = scmp.ne.s32.totalorder %s303, %s304
      %p313 = scmp.eq.s32.totalorder %s26, 0
      %p314 = por %p312, %p313
      %p315 = scmp.ne.s32.totalorder %s303, %s304
      %p316 = scmp.eq.s32.totalorder %s27, 3
      %p317 = por %p315, %p316
      %p319 = scmp.ne.s32.totalorder %s304, %s318
      %p320 = scmp.eq.s32.totalorder %s27, 0
      %p321 = por %p319, %p320
      %s323 = sadd.s32 %s322, 1
      %p326 = scmp.eq.s32.totalorder %s21, 3
      %p327 = scmp.ne.s32.totalorder %s322, %s324
      %p328 = scmp.eq.s32.totalorder %s21, 0
      %p329 = por %p327, %p328
      %p330 = scmp.ne.s32.totalorder %s322, %s324
      %p331 = scmp.eq.s32.totalorder %s26, 3
      %p332 = por %p330, %p331
      %p333 = scmp.ne.s32.totalorder %s324, %s325
      %p334 = scmp.eq.s32.totalorder %s26, 0
      %p335 = por %p333, %p334
      %p336 = scmp.ne.s32.totalorder %s324, %s325
      %p337 = scmp.eq.s32.totalorder %s27, 3
      %p338 = por %p336, %p337
      %p340 = scmp.ne.s32.totalorder %s325, %s339
      %p341 = scmp.eq.s32.totalorder %s27, 0
      %p342 = por %p340, %p341
      %s344 = sadd.s32 %s343, 1
      %p347 = scmp.eq.s32.totalorder %s21, 3
      %p348 = scmp.ne.s32.totalorder %s343, %s345
      %p349 = scmp.eq.s32.totalorder %s21, 0
      %p350 = por %p348, %p349
      %p351 = scmp.ne.s32.totalorder %s343, %s345
      %p352 = scmp.eq.s32.totalorder %s26, 3
      %p353 = por %p351, %p352
      %p354 = scmp.ne.s32.totalorder %s345, %s346
      %p355 = scmp.eq.s32.totalorder %s26, 0
      %p356 = por %p354, %p355
      %p357 = scmp.ne.s32.totalorder %s345, %s346
      %p358 = scmp.eq.s32.totalorder %s27, 3
      %p359 = por %p357, %p358
      %p361 = scmp.ne.s32.totalorder %s346, %s360
      %p362 = scmp.eq.s32.totalorder %s27, 0
      %p363 = por %p361, %p362
      %s364 = ssub.s32 %s21, %s28
      %p365 = scmp.eq.s32.totalorder %s364, 0
      %s367 = sadd.s32 %s366, 1
      %s368 = scalar_select %p365, %s366, %s367
      %p371 = pneg %p365
      %p372 = scmp.eq.s32.totalorder %s21, 3
      %p373 = por %p371, %p372
      %p374 = scmp.ne.s32.totalorder %s366, %s369
      %p375 = scmp.eq.s32.totalorder %s21, 0
      %p376 = por %p374, %p375
      %p377 = scmp.ne.s32.totalorder %s366, %s369
      %p378 = scmp.eq.s32.totalorder %s26, 3
      %p379 = por %p377, %p378
      %p380 = scmp.ne.s32.totalorder %s369, %s370
      %p381 = scmp.eq.s32.totalorder %s26, 0
      %p382 = por %p380, %p381
      %p383 = scmp.ne.s32.totalorder %s369, %s370
      %p384 = scmp.eq.s32.totalorder %s27, 3
      %p385 = por %p383, %p384
      %p387 = scmp.ne.s32.totalorder %s370, %s386
      %p388 = scmp.eq.s32.totalorder %s27, 0
      %p389 = por %p387, %p388
      %p390 = scmp.le.s32.totalorder 1, %s21
      %p391 = scmp.lt.s32.totalorder %s21, 5
      %p392 = pnand %p390, %p391
      %p393 = pneg %p392
      // Predicated region
      $region9: #{cic_forward.5} parent=5 // pred_check
        _
      $region10: #{cic_forward.5} parent=5 // pred_check_branch
        %395 = sbr.rel (%p392) target = $region12
      $region11: #{cic_forward.5} parent=5 // pred_region
        %s396 = ssub.s32 %s21, 1
        // Predicated region
        $region13: #{cic_forward.5} parent=11 // pred_check
          %p397 = pneg %p146
        $region14: #{cic_forward.5} parent=11 // pred_check_branch
          %399 = sbr.rel (%p397) target = $region16
        $region15: #{cic_forward.5} parent=11 // pred_region
          _
        $region16: #{cic_forward.5} parent=11 // pred_fallthru
          _
        // Predicated region
        $region17: #{cic_forward.5} parent=11 // pred_check
          %p400 = pneg %p167
        $region18: #{cic_forward.5} parent=11 // pred_check_branch
          %402 = sbr.rel (%p400) target = $region20
        $region19: #{cic_forward.5} parent=11 // pred_region
          _
        $region20: #{cic_forward.5} parent=11 // pred_fallthru
          _
        // Predicated region
        $region21: #{cic_forward.5} parent=11 // pred_check
          %p403 = pneg %p188
        $region22: #{cic_forward.5} parent=11 // pred_check_branch
          %405 = sbr.rel (%p403) target = $region24
        $region23: #{cic_forward.5} parent=11 // pred_region
          _
        $region24: #{cic_forward.5} parent=11 // pred_fallthru
          _
        // Predicated region
        $region25: #{cic_forward.5} parent=11 // pred_check
          %p406 = pneg %p209
        $region26: #{cic_forward.5} parent=11 // pred_check_branch
          %408 = sbr.rel (%p406) target = $region28
        $region27: #{cic_forward.5} parent=11 // pred_region
          _
        $region28: #{cic_forward.5} parent=11 // pred_fallthru
          _
        // Predicated region
        $region29: #{cic_forward.5} parent=11 // pred_check
          %p409 = pneg %p230
        $region30: #{cic_forward.5} parent=11 // pred_check_branch
          %411 = sbr.rel (%p409) target = $region32
        $region31: #{cic_forward.5} parent=11 // pred_region
          _
        $region32: #{cic_forward.5} parent=11 // pred_fallthru
          _
        // Predicated region
        $region33: #{cic_forward.5} parent=11 // pred_check
          %p412 = pneg %p251
        $region34: #{cic_forward.5} parent=11 // pred_check_branch
          %414 = sbr.rel (%p412) target = $region36
        $region35: #{cic_forward.5} parent=11 // pred_region
          _
        $region36: #{cic_forward.5} parent=11 // pred_fallthru
          _
        // Predicated region
        $region37: #{cic_forward.5} parent=11 // pred_check
          %p415 = pneg %p272
        $region38: #{cic_forward.5} parent=11 // pred_check_branch
          %417 = sbr.rel (%p415) target = $region40
        $region39: #{cic_forward.5} parent=11 // pred_region
          _
        $region40: #{cic_forward.5} parent=11 // pred_fallthru
          _
        // Predicated region
        $region41: #{cic_forward.5} parent=11 // pred_check
          %p418 = pneg %p293
        $region42: #{cic_forward.5} parent=11 // pred_check_branch
          %420 = sbr.rel (%p418) target = $region44
        $region43: #{cic_forward.5} parent=11 // pred_region
          _
        $region44: #{cic_forward.5} parent=11 // pred_fallthru
          _
        // Predicated region
        $region45: #{cic_forward.5} parent=11 // pred_check
          %p421 = pneg %p314
        $region46: #{cic_forward.5} parent=11 // pred_check_branch
          %423 = sbr.rel (%p421) target = $region48
        $region47: #{cic_forward.5} parent=11 // pred_region
          _
        $region48: #{cic_forward.5} parent=11 // pred_fallthru
          _
        // Predicated region
        $region49: #{cic_forward.5} parent=11 // pred_check
          %p424 = pneg %p335
        $region50: #{cic_forward.5} parent=11 // pred_check_branch
          %426 = sbr.rel (%p424) target = $region52
        $region51: #{cic_forward.5} parent=11 // pred_region
          _
        $region52: #{cic_forward.5} parent=11 // pred_fallthru
          _
        // Predicated region
        $region53: #{cic_forward.5} parent=11 // pred_check
          %p427 = pneg %p356
        $region54: #{cic_forward.5} parent=11 // pred_check_branch
          %429 = sbr.rel (%p427) target = $region56
        $region55: #{cic_forward.5} parent=11 // pred_region
          _
        $region56: #{cic_forward.5} parent=11 // pred_fallthru
          _
      $region12: #{cic_forward.5} parent=5 // pred_fallthru
        _
      %p430 = scmp.lt.s32.totalorder %s21, 4
      // Predicated region
      $region57: #{cic_forward.5} parent=5 // pred_check
        %p431 = pneg %p430
      $region58: #{cic_forward.5} parent=5 // pred_check_branch
        %433 = sbr.rel (%p431) target = $region60
      $region59: #{cic_forward.5} parent=5 // pred_region
        // Predicated region
        $region61: #{cic_forward.5} parent=59 // pred_check
          %p434 = pneg %p41
        $region62: #{cic_forward.5} parent=59 // pred_check_branch
          %436 = sbr.rel (%p434) target = $region64
        $region63: #{cic_forward.5} parent=59 // pred_region
          %p437 = scmp.lt.s32.totalorder %s21, 3
          %s438 = scalar_select %p437, %s21, 3
          %s439 = smul.addr %s438, 8
          %s440 = smul.addr %s439, 2
          %s441 = scalar_lea.vmem %s0, %s440
        $region64: #{cic_forward.5} parent=59 // pred_fallthru
          _
        // Predicated region
        $region65: #{cic_forward.5} parent=59 // pred_check
          %p442 = pneg %p67
        $region66: #{cic_forward.5} parent=59 // pred_check_branch
          %444 = sbr.rel (%p442) target = $region68
        $region67: #{cic_forward.5} parent=59 // pred_region
          %p445 = scmp.lt.s32.totalorder %s21, 3
          %s446 = scalar_select %p445, %s21, 3
          %s447 = smul.addr %s446, 8
          %s448 = smul.addr %s447, 4
          %s449 = scalar_lea.vmem %s1, %s448
        $region68: #{cic_forward.5} parent=59 // pred_fallthru
          _
        // Predicated region
        $region69: #{cic_forward.5} parent=59 // pred_check
          %p450 = pneg %p93
        $region70: #{cic_forward.5} parent=59 // pred_check_branch
          %452 = sbr.rel (%p450) target = $region72
        $region71: #{cic_forward.5} parent=59 // pred_region
          %p453 = scmp.lt.s32.totalorder %s21, 3
          %s454 = scalar_select %p453, %s21, 3
          %s455 = smul.addr %s454, 2
          %s456 = scalar_lea.vmem %s2, %s455
        $region72: #{cic_forward.5} parent=59 // pred_fallthru
          _
        // Predicated region
        $region73: #{cic_forward.5} parent=59 // pred_check
          %p457 = pneg %p119
        $region74: #{cic_forward.5} parent=59 // pred_check_branch
          %459 = sbr.rel (%p457) target = $region76
        $region75: #{cic_forward.5} parent=59 // pred_region
          %s460 = sand.u32 %s109, 1
          %s461 = sand.u32 %s109, 1
          %s462 = smul.addr %s461, 8
          %s463 = scalar_lea.vmem [#allocation2], %s462
          %s464 = smul.addr %s21, 4
          %s465 = scalar_lea.vmem %s3, %s464
          // Predicated region
          $region77: #{cic_forward.5} parent=75 // pred_check
            _
          $region78: #{cic_forward.5} parent=75 // pred_check_branch
            %467 = sbr.rel (0) target = $region80
          $region79: #{cic_forward.5} parent=75 // pred_region
            // Predicated region
            $region81: #{cic_forward.5} parent=79 // pred_check
              _
            $region82: #{cic_forward.5} parent=79 // pred_check_branch
              %469 = sbr.rel target = $region84
            $region83: #{cic_forward.5} parent=79 // pred_region
              // Predicated region
              $region96: #{cic_forward.5} parent=83 // pred_check
                _
              $region97: #{cic_forward.5} parent=83 // pred_check_branch
                %487 = sbr.rel (0) target = $region99
              $region98: #{cic_forward.5} parent=83 // pred_region
                loop: start=0, step=1, limit=1
                $region100: #{cic_forward.5} parent=98 // loop_pre_header
                  _
                $region101: #{cic_forward.5} parent=98 // loop_header
                  %s489 = sphi 0, %s493
                  %p490 = scmp.ge.s32.totalorder %s489, 1
                  %s494 = sphi %s465, %s465
                  %s495 = sphi %s463, %s463
                $region102: #{cic_forward.5} parent=98 // loop_header_branch
                  %492 = sbr.rel (%p490) target = $region106
                $region103: #{cic_forward.5} parent=98 // loop_body
                  _
                $region104: #{cic_forward.5} parent=98 // loop_footer
                  %s493 = sadd.s32 1, %s489
                $region105: #{cic_forward.5} parent=98 // loop_footer_branch
                  %488 = sbr.rel target = $region101
                $region106: #{cic_forward.5} parent=98 // loop_exit
                  _
                %s497 = ssub.s32 16, 1
                loop: start=0, step=1, limit=1
                $region107: #{cic_forward.5} parent=98 // loop_pre_header
                  _
                $region108: #{cic_forward.5} parent=98 // loop_header
                  %s499 = sphi 0, %s503
                  %p500 = scmp.ge.s32.totalorder %s499, 1
                  %s504 = sphi %s465, %s465
                  %s505 = sphi %s463, %s463
                $region109: #{cic_forward.5} parent=98 // loop_header_branch
                  %502 = sbr.rel (%p500) target = $region113
                $region110: #{cic_forward.5} parent=98 // loop_body
                  %v506 = vld [vmem:[%s504] sm:%s497]
                  %507 = vst [vmem:[%s505] sm:%s497] %v506
                  %v508 = vld [vmem:[%s504 + $0x10] sm:%s497]
                  %509 = vst [vmem:[%s505 + $0x4] sm:%s497] %v508
                $region111: #{cic_forward.5} parent=98 // loop_footer
                  %s503 = sadd.s32 1, %s499
                $region112: #{cic_forward.5} parent=98 // loop_footer_branch
                  %498 = sbr.rel target = $region108
                $region113: #{cic_forward.5} parent=98 // loop_exit
                  _
              $region99: #{cic_forward.5} parent=83 // pred_fallthru
                _
            $region84: #{cic_forward.5} parent=79 // pred_fallthru
              _
            // Predicated region
            $region85: #{cic_forward.5} parent=79 // pred_check
              _
            $region86: #{cic_forward.5} parent=79 // pred_check_branch
              %471 = sbr.rel (0) target = $region88
            $region87: #{cic_forward.5} parent=79 // pred_region
              %s473 = ssub.s32 16, 1
              loop: start=0, step=1, limit=1
              $region89: #{cic_forward.5} parent=87 // loop_pre_header
                _
              $region90: #{cic_forward.5} parent=87 // loop_header
                %s475 = sphi 0, %s479
                %p476 = scmp.ge.s32.totalorder %s475, 1
                %s480 = sphi %s465, %s465
                %s481 = sphi %s463, %s463
              $region91: #{cic_forward.5} parent=87 // loop_header_branch
                %478 = sbr.rel (%p476) target = $region95
              $region92: #{cic_forward.5} parent=87 // loop_body
                %v482 = vld [vmem:[%s480] sm:%s473]
                %483 = vst [vmem:[%s481] sm:%s473] %v482
                %v484 = vld [vmem:[%s480 + $0x10] sm:%s473]
                %485 = vst [vmem:[%s481 + $0x4] sm:%s473] %v484
              $region93: #{cic_forward.5} parent=87 // loop_footer
                %s479 = sadd.s32 1, %s475
              $region94: #{cic_forward.5} parent=87 // loop_footer_branch
                %474 = sbr.rel target = $region90
              $region95: #{cic_forward.5} parent=87 // loop_exit
                _
            $region88: #{cic_forward.5} parent=79 // pred_fallthru
              _
          $region80: #{cic_forward.5} parent=75 // pred_fallthru
            _
          %510 = vnop
        $region76: #{cic_forward.5} parent=59 // pred_fallthru
          _
      $region60: #{cic_forward.5} parent=5 // pred_fallthru
        _
      %p511 = scmp.le.s32.totalorder 1, %s21
      %p512 = scmp.lt.s32.totalorder %s21, 5
      %p513 = pnand %p511, %p512
      %p514 = pneg %p513
      // Predicated region
      $region114: #{cic_forward.5} parent=5 // pred_check
        _
      $region115: #{cic_forward.5} parent=5 // pred_check_branch
        %516 = sbr.rel (%p513) target = $region117
      $region116: #{cic_forward.5} parent=5 // pred_region
        %s517 = ssub.s32 %s21, 1
        %s518 = sand.u32 %s112, 1
        %s519 = sand.u32 %s112, 1
        %s520 = smul.addr %s519, 8
        %s521 = scalar_lea.vmem [#allocation2], %s520
        // Predicated region
        $region118: #{cic_forward.5} parent=116 // pred_check
          %p522 = pneg %p125
        $region119: #{cic_forward.5} parent=116 // pred_check_branch
          %524 = sbr.rel (%p522) target = $region121
        $region120: #{cic_forward.5} parent=116 // pred_region
          _
        $region121: #{cic_forward.5} parent=116 // pred_fallthru
          _
        %p525 = scmp.lt.s32.totalorder %s26, 3
        %s526 = scalar_select %p525, %s26, 3
        %s527 = smul.addr %s526, 8
        %s528 = smul.addr %s527, 2
        %s529 = scalar_lea.vmem %s0, %s528
        %p530 = pneg %p47
        %p531 = pneg %p44
        %p532 = scmp.lt.s32.totalorder %s26, 3
        %s533 = scalar_select %p532, %s26, 3
        %s534 = smul.addr %s533, 8
        %s535 = smul.addr %s534, 4
        %s536 = scalar_lea.vmem %s1, %s535
        %p537 = pneg %p73
        %p538 = pneg %p70
        %p539 = scmp.lt.s32.totalorder %s26, 3
        %s540 = scalar_select %p539, %s26, 3
        %s541 = smul.addr %s540, 2
        %s542 = scalar_lea.vmem %s2, %s541
        %p543 = pneg %p99
        %p544 = pneg %p96
        %s545 = sand.u32 %s112, 1
        %s546 = sand.u32 %s112, 1
        %s547 = smul.addr %s546, 8
        %s548 = scalar_lea.vmem [#allocation2], %s547
        %p549 = pneg %p125
        %p550 = pneg %p122
        %p551 = pneg %p146
        %p552 = pneg %p143
        %p553 = pneg %p167
        %p554 = pneg %p164
        %p555 = pneg %p188
        %p556 = pneg %p185
        %p557 = pneg %p209
        %p558 = pneg %p206
        %p559 = pneg %p230
        %p560 = pneg %p227
        %p561 = pneg %p251
        %p562 = pneg %p248
        %p563 = pneg %p272
        %p564 = pneg %p269
        %p565 = pneg %p293
        %p566 = pneg %p290
        %p567 = pneg %p314
        %p568 = pneg %p311
        %p569 = pneg %p335
        %p570 = pneg %p332
        %p571 = pneg %p356
        %p572 = pneg %p353
        %p573 = pneg %p382
        %p574 = pneg %p379
        %s575 = sand.u32 %s369, 1
        %s576 = sand.u32 %s369, 1
        %s577 = smul.addr %s576, 32
        %s578 = scalar_lea.vmem [#allocation3], %s577
        %p579 = scmp.lt.s32.totalorder %s26, 3
        %s580 = scalar_select %p579, %s26, 3
        %s581 = smul.addr %s580, 8
        %s582 = smul.addr %s581, 2
        %s583 = scalar_lea.vmem %s0, %s582
        %p584 = scmp.lt.s32.totalorder %s26, 3
        %s585 = scalar_select %p584, %s26, 3
        %s586 = smul.addr %s585, 8
        %s587 = smul.addr %s586, 4
        %s588 = scalar_lea.vmem %s1, %s587
        %p589 = scmp.lt.s32.totalorder %s26, 3
        %s590 = scalar_select %p589, %s26, 3
        %s591 = smul.addr %s590, 2
        %s592 = scalar_lea.vmem %s2, %s591
        %v594 = vld [vmem:[%s583] sm:$0xff]
        %v595 = vld [vmem:[%s583 + $0x8] sm:$0xff]
        %v596 = vld [vmem:[%s588] sm:$0xff]
        %v597 = vld [vmem:[%s588 + $0x8] sm:$0xff]
        %v598 = vld [vmem:[%s588 + $0x10] sm:$0xff]
        %v599 = vld [vmem:[%s588 + $0x18] sm:$0xff]
        %v600 = vld [vmem:[%s4] sm:$0xf]
        %v601 = vld [vmem:[%s592] sm:$0x3]
        %v602 = vld [vmem:[%s6] sm:$0xff]
        %604 = vset.pattern.permute.xlu0 0
        %605 = vperm.xlu0 %604, %v602
        %v606 = vpop.permute.xlu0 %605
        %vm608 = vcmask 23552
        %v610 = vsel %vm608, %v600, 0
        %vm612 = vcmask 1040384
        %vm613 = vcmask 1041408
        %v614 = vsel %vm612, 4294967295, 65535
        %v615 = vsel %vm613, %v614, 0
        %v617 = vand.u32 %v601, %v615
        %619 = vmatpush.bf16.msra.mxu0 0
        %620 = vmatpush.bf16.msra.mxu0 0
        %621 = vmatpush.bf16.msra.mxu0 0
        %622 = vmatpush.bf16.msra.mxu0 0
        %623 = vmatpush.bf16.msra.mxu0 0
        %624 = vmatpush.bf16.msra.mxu0 0
        %625 = vmatpush.bf16.msra.mxu0 0
        %626 = vmatpush.bf16.msra.mxu0 %v617
        %627 = vmatmul.bf16.gmra.mxu0 %v610
        %v628 = vpop.f32.mrf.mxu0
        %v629 = vadd.f32 %v606, %v628
        %v630 = vpop.f32.mrf.mxu0
        %631 = vdwg.mxu0
        %v632 = vld [vmem:[%s5] sm:$0xf]
        %634 = vst [vmem:[#allocation1] ss:$4 sm:$0xff] %v594
        %s636 = scalar_lea.vmem [#allocation1], 32
        %637 = vst [vmem:[%s636] ss:$4 sm:$0xff] %v595
        %v638 = vld.sshfl [vmem:[#allocation1] sm:$0xff pattern:$0x73625140]
        %v639 = vld.sshfl [vmem:[#allocation1 + $0x8] sm:$0xff pattern:$0x73625140]
        %v640 = vld.sshfl [vmem:[#allocation1 + $0x10] sm:$0xff pattern:$0x73625140]
        %v641 = vld.sshfl [vmem:[#allocation1 + $0x18] sm:$0xff pattern:$0x73625140]
        %v642 = vld.sshfl [vmem:[#allocation1 + $0x20] sm:$0xff pattern:$0x73625140]
        %v643 = vld.sshfl [vmem:[#allocation1 + $0x28] sm:$0xff pattern:$0x73625140]
        %v644 = vld.sshfl [vmem:[#allocation1 + $0x30] sm:$0xff pattern:$0x73625140]
        %v645 = vld.sshfl [vmem:[#allocation1 + $0x38] sm:$0xff pattern:$0x73625140]
        %v647 = vsel %vm608, %v632, 0
        %v649 = vand.u32 %v638, %v615
        %v651 = vand.u32 %v639, %v615
        %v653 = vand.u32 %v640, %v615
        %v655 = vand.u32 %v641, %v615
        %v657 = vand.u32 %v642, %v615
        %v659 = vand.u32 %v643, %v615
        %v661 = vand.u32 %v644, %v615
        %v663 = vand.u32 %v645, %v615
        %665 = vmatpush.bf16.msra.mxu0 0
        %666 = vmatpush.bf16.msra.mxu0 0
        %667 = vmatpush.bf16.msra.mxu0 0
        %668 = vmatpush.bf16.msra.mxu0 0
        %669 = vmatpush.bf16.msra.mxu0 0
        %670 = vmatpush.bf16.msra.mxu0 0
        %671 = vmatpush.bf16.msra.mxu0 0
        %672 = vmatpush.bf16.msra.mxu0 %v649
        %673 = vmatmul.bf16.gmra.mxu0 %v647
        %v674 = vpop.f32.mrf.mxu0
        %v675 = vadd.f32 0.0, %v674
        %v676 = vpop.f32.mrf.mxu0
        %677 = vdwg.mxu0
        %678 = vmatpush.bf16.msra.mxu0 0
        %679 = vmatpush.bf16.msra.mxu0 0
        %680 = vmatpush.bf16.msra.mxu0 0
        %681 = vmatpush.bf16.msra.mxu0 0
        %682 = vmatpush.bf16.msra.mxu0 0
        %683 = vmatpush.bf16.msra.mxu0 0
        %684 = vmatpush.bf16.msra.mxu0 0
        %685 = vmatpush.bf16.msra.mxu0 %v651
        %686 = vmatmul.bf16.gmra.mxu0 %v647
        %v687 = vpop.f32.mrf.mxu0
        %v688 = vadd.f32 0.0, %v687
        %v689 = vpop.f32.mrf.mxu0
        %690 = vdwg.mxu0
        %691 = vmatpush.bf16.msra.mxu0 0
        %692 = vmatpush.bf16.msra.mxu0 0
        %693 = vmatpush.bf16.msra.mxu0 0
        %694 = vmatpush.bf16.msra.mxu0 0
        %695 = vmatpush.bf16.msra.mxu0 0
        %696 = vmatpush.bf16.msra.mxu0 0
        %697 = vmatpush.bf16.msra.mxu0 0
        %698 = vmatpush.bf16.msra.mxu0 %v653
        %699 = vmatmul.bf16.gmra.mxu0 %v647
        %v700 = vpop.f32.mrf.mxu0
        %v701 = vadd.f32 0.0, %v700
        %v702 = vpop.f32.mrf.mxu0
        %703 = vdwg.mxu0
        %704 = vmatpush.bf16.msra.mxu0 0
        %705 = vmatpush.bf16.msra.mxu0 0
        %706 = vmatpush.bf16.msra.mxu0 0
        %707 = vmatpush.bf16.msra.mxu0 0
        %708 = vmatpush.bf16.msra.mxu0 0
        %709 = vmatpush.bf16.msra.mxu0 0
        %710 = vmatpush.bf16.msra.mxu0 0
        %711 = vmatpush.bf16.msra.mxu0 %v655
        %712 = vmatmul.bf16.gmra.mxu0 %v647
        %v713 = vpop.f32.mrf.mxu0
        %v714 = vadd.f32 0.0, %v713
        %v715 = vpop.f32.mrf.mxu0
        %716 = vdwg.mxu0
        %717 = vmatpush.bf16.msra.mxu0 0
        %718 = vmatpush.bf16.msra.mxu0 0
        %719 = vmatpush.bf16.msra.mxu0 0
        %720 = vmatpush.bf16.msra.mxu0 0
        %721 = vmatpush.bf16.msra.mxu0 0
        %722 = vmatpush.bf16.msra.mxu0 0
        %723 = vmatpush.bf16.msra.mxu0 0
        %724 = vmatpush.bf16.msra.mxu0 %v657
        %725 = vmatmul.bf16.gmra.mxu0 %v647
        %v726 = vpop.f32.mrf.mxu0
        %v727 = vadd.f32 0.0, %v726
        %v728 = vpop.f32.mrf.mxu0
        %729 = vdwg.mxu0
        %730 = vmatpush.bf16.msra.mxu0 0
        %731 = vmatpush.bf16.msra.mxu0 0
        %732 = vmatpush.bf16.msra.mxu0 0
        %733 = vmatpush.bf16.msra.mxu0 0
        %734 = vmatpush.bf16.msra.mxu0 0
        %735 = vmatpush.bf16.msra.mxu0 0
        %736 = vmatpush.bf16.msra.mxu0 0
        %737 = vmatpush.bf16.msra.mxu0 %v659
        %738 = vmatmul.bf16.gmra.mxu0 %v647
        %v739 = vpop.f32.mrf.mxu0
        %v740 = vadd.f32 0.0, %v739
        %v741 = vpop.f32.mrf.mxu0
        %742 = vdwg.mxu0
        %743 = vmatpush.bf16.msra.mxu0 0
        %744 = vmatpush.bf16.msra.mxu0 0
        %745 = vmatpush.bf16.msra.mxu0 0
        %746 = vmatpush.bf16.msra.mxu0 0
        %747 = vmatpush.bf16.msra.mxu0 0
        %748 = vmatpush.bf16.msra.mxu0 0
        %749 = vmatpush.bf16.msra.mxu0 0
        %750 = vmatpush.bf16.msra.mxu0 %v661
        %751 = vmatmul.bf16.gmra.mxu0 %v647
        %v752 = vpop.f32.mrf.mxu0
        %v753 = vadd.f32 0.0, %v752
        %v754 = vpop.f32.mrf.mxu0
        %755 = vdwg.mxu0
        %756 = vmatpush.bf16.msra.mxu0 0
        %757 = vmatpush.bf16.msra.mxu0 0
        %758 = vmatpush.bf16.msra.mxu0 0
        %759 = vmatpush.bf16.msra.mxu0 0
        %760 = vmatpush.bf16.msra.mxu0 0
        %761 = vmatpush.bf16.msra.mxu0 0
        %762 = vmatpush.bf16.msra.mxu0 0
        %763 = vmatpush.bf16.msra.mxu0 %v663
        %764 = vmatmul.bf16.gmra.mxu0 %v647
        %v765 = vpop.f32.mrf.mxu0
        %v766 = vadd.f32 0.0, %v765
        %v767 = vpop.f32.mrf.mxu0
        %768 = vdwg.mxu0
        %v769 = vunpack.c.l.bf16 %v596
        %v770 = vunpack.c.h.bf16 %v596
        %v771 = vunpack.c.l.bf16 %v597
        %v772 = vunpack.c.h.bf16 %v597
        %v773 = vunpack.c.l.bf16 %v598
        %v774 = vunpack.c.h.bf16 %v598
        %v775 = vunpack.c.l.bf16 %v599
        %v776 = vunpack.c.h.bf16 %v599
        %v777 = vadd.f32 %v769, %v675
        %v778 = vadd.f32 %v770, %v688
        %v779 = vadd.f32 %v771, %v701
        %v780 = vadd.f32 %v772, %v714
        %v781 = vadd.f32 %v773, %v727
        %v782 = vadd.f32 %v774, %v740
        %v783 = vadd.f32 %v775, %v753
        %v784 = vadd.f32 %v776, %v766
        %v785 = vadd.f32 %v777, %v629
        %v786 = vadd.f32 %v778, %v629
        %v787 = vadd.f32 %v779, %v629
        %v788 = vadd.f32 %v780, %v629
        %v789 = vadd.f32 %v781, %v629
        %v790 = vadd.f32 %v782, %v629
        %v791 = vadd.f32 %v783, %v629
        %v792 = vadd.f32 %v784, %v629
        %vm793 = vcmp.gt.f32.partialorder %v785, 0.0
        %vm794 = vcmp.gt.f32.partialorder %v786, 0.0
        %vm795 = vcmp.gt.f32.partialorder %v787, 0.0
        %vm796 = vcmp.gt.f32.partialorder %v788, 0.0
        %vm797 = vcmp.gt.f32.partialorder %v789, 0.0
        %vm798 = vcmp.gt.f32.partialorder %v790, 0.0
        %vm799 = vcmp.gt.f32.partialorder %v791, 0.0
        %vm800 = vcmp.gt.f32.partialorder %v792, 0.0
        %v801 = vmul.f32 %v785, 0.2
        %v802 = vmul.f32 %v786, 0.2
        %v803 = vmul.f32 %v787, 0.2
        %v804 = vmul.f32 %v788, 0.2
        %v805 = vmul.f32 %v789, 0.2
        %v806 = vmul.f32 %v790, 0.2
        %v807 = vmul.f32 %v791, 0.2
        %v808 = vmul.f32 %v792, 0.2
        %v809 = vsel %vm793, %v785, %v801
        %v810 = vsel %vm794, %v786, %v802
        %v811 = vsel %vm795, %v787, %v803
        %v812 = vsel %vm796, %v788, %v804
        %v813 = vsel %vm797, %v789, %v805
        %v814 = vsel %vm798, %v790, %v806
        %v815 = vsel %vm799, %v791, %v807
        %v816 = vsel %vm800, %v792, %v808
        %v817 = vld [vmem:[%s7] sm:$0xf]
        %v818 = vpack.c.bf16 %v809, %v809
        %v819 = vpack.c.bf16 %v810, %v810
        %v820 = vpack.c.bf16 %v811, %v811
        %v821 = vpack.c.bf16 %v812, %v812
        %v822 = vpack.c.bf16 %v813, %v813
        %v823 = vpack.c.bf16 %v814, %v814
        %v824 = vpack.c.bf16 %v815, %v815
        %v825 = vpack.c.bf16 %v816, %v816
        %v826 = vld [vmem:[%s8] sm:$0xff]
        %828 = vset.pattern.permute.xlu0 0
        %829 = vperm.xlu0 %828, %v826
        %v830 = vpop.permute.xlu0 %829
        %vm832 = vcmask 64512
        %v834 = vsel %vm832, %v817, 0
        %vm836 = vcmask 1043456
        %v838 = vsel %vm836, %v818, 0
        %v841 = vsel %vm836, %v819, 0
        %v844 = vsel %vm836, %v820, 0
        %v847 = vsel %vm836, %v821, 0
        %v850 = vsel %vm836, %v822, 0
        %v853 = vsel %vm836, %v823, 0
        %v856 = vsel %vm836, %v824, 0
        %v859 = vsel %vm836, %v825, 0
        %861 = vmatpush.bf16.msra.mxu0 0
        %862 = vmatpush.bf16.msra.mxu0 0
        %863 = vmatpush.bf16.msra.mxu0 0
        %864 = vmatpush.bf16.msra.mxu0 0
        %865 = vmatpush.bf16.msra.mxu0 0
        %866 = vmatpush.bf16.msra.mxu0 0
        %867 = vmatpush.bf16.msra.mxu0 0
        %868 = vmatpush.bf16.msra.mxu0 %v838
        %869 = vmatmul.bf16.gmra.mxu0 %v834
        %v870 = vpop.f32.mrf.mxu0
        %v871 = vadd.f32 %v830, %v870
        %v872 = vpop.f32.mrf.mxu0
        %873 = vdwg.mxu0
        %874 = vmatpush.bf16.msra.mxu0 0
        %875 = vmatpush.bf16.msra.mxu0 0
        %876 = vmatpush.bf16.msra.mxu0 0
        %877 = vmatpush.bf16.msra.mxu0 0
        %878 = vmatpush.bf16.msra.mxu0 0
        %879 = vmatpush.bf16.msra.mxu0 0
        %880 = vmatpush.bf16.msra.mxu0 0
        %881 = vmatpush.bf16.msra.mxu0 %v841
        %882 = vmatmul.bf16.gmra.mxu0 %v834
        %v883 = vpop.f32.mrf.mxu0
        %v884 = vadd.f32 %v830, %v883
        %v885 = vpop.f32.mrf.mxu0
        %886 = vdwg.mxu0
        %887 = vmatpush.bf16.msra.mxu0 0
        %888 = vmatpush.bf16.msra.mxu0 0
        %889 = vmatpush.bf16.msra.mxu0 0
        %890 = vmatpush.bf16.msra.mxu0 0
        %891 = vmatpush.bf16.msra.mxu0 0
        %892 = vmatpush.bf16.msra.mxu0 0
        %893 = vmatpush.bf16.msra.mxu0 0
        %894 = vmatpush.bf16.msra.mxu0 %v844
        %895 = vmatmul.bf16.gmra.mxu0 %v834
        %v896 = vpop.f32.mrf.mxu0
        %v897 = vadd.f32 %v830, %v896
        %v898 = vpop.f32.mrf.mxu0
        %899 = vdwg.mxu0
        %900 = vmatpush.bf16.msra.mxu0 0
        %901 = vmatpush.bf16.msra.mxu0 0
        %902 = vmatpush.bf16.msra.mxu0 0
        %903 = vmatpush.bf16.msra.mxu0 0
        %904 = vmatpush.bf16.msra.mxu0 0
        %905 = vmatpush.bf16.msra.mxu0 0
        %906 = vmatpush.bf16.msra.mxu0 0
        %907 = vmatpush.bf16.msra.mxu0 %v847
        %908 = vmatmul.bf16.gmra.mxu0 %v834
        %v909 = vpop.f32.mrf.mxu0
        %v910 = vadd.f32 %v830, %v909
        %v911 = vpop.f32.mrf.mxu0
        %912 = vdwg.mxu0
        %913 = vmatpush.bf16.msra.mxu0 0
        %914 = vmatpush.bf16.msra.mxu0 0
        %915 = vmatpush.bf16.msra.mxu0 0
        %916 = vmatpush.bf16.msra.mxu0 0
        %917 = vmatpush.bf16.msra.mxu0 0
        %918 = vmatpush.bf16.msra.mxu0 0
        %919 = vmatpush.bf16.msra.mxu0 0
        %920 = vmatpush.bf16.msra.mxu0 %v850
        %921 = vmatmul.bf16.gmra.mxu0 %v834
        %v922 = vpop.f32.mrf.mxu0
        %v923 = vadd.f32 %v830, %v922
        %v924 = vpop.f32.mrf.mxu0
        %925 = vdwg.mxu0
        %926 = vmatpush.bf16.msra.mxu0 0
        %927 = vmatpush.bf16.msra.mxu0 0
        %928 = vmatpush.bf16.msra.mxu0 0
        %929 = vmatpush.bf16.msra.mxu0 0
        %930 = vmatpush.bf16.msra.mxu0 0
        %931 = vmatpush.bf16.msra.mxu0 0
        %932 = vmatpush.bf16.msra.mxu0 0
        %933 = vmatpush.bf16.msra.mxu0 %v853
        %934 = vmatmul.bf16.gmra.mxu0 %v834
        %v935 = vpop.f32.mrf.mxu0
        %v936 = vadd.f32 %v830, %v935
        %v937 = vpop.f32.mrf.mxu0
        %938 = vdwg.mxu0
        %939 = vmatpush.bf16.msra.mxu0 0
        %940 = vmatpush.bf16.msra.mxu0 0
        %941 = vmatpush.bf16.msra.mxu0 0
        %942 = vmatpush.bf16.msra.mxu0 0
        %943 = vmatpush.bf16.msra.mxu0 0
        %944 = vmatpush.bf16.msra.mxu0 0
        %945 = vmatpush.bf16.msra.mxu0 0
        %946 = vmatpush.bf16.msra.mxu0 %v856
        %947 = vmatmul.bf16.gmra.mxu0 %v834
        %v948 = vpop.f32.mrf.mxu0
        %v949 = vadd.f32 %v830, %v948
        %v950 = vpop.f32.mrf.mxu0
        %951 = vdwg.mxu0
        %952 = vmatpush.bf16.msra.mxu0 0
        %953 = vmatpush.bf16.msra.mxu0 0
        %954 = vmatpush.bf16.msra.mxu0 0
        %955 = vmatpush.bf16.msra.mxu0 0
        %956 = vmatpush.bf16.msra.mxu0 0
        %957 = vmatpush.bf16.msra.mxu0 0
        %958 = vmatpush.bf16.msra.mxu0 0
        %959 = vmatpush.bf16.msra.mxu0 %v859
        %960 = vmatmul.bf16.gmra.mxu0 %v834
        %v961 = vpop.f32.mrf.mxu0
        %v962 = vadd.f32 %v830, %v961
        %v963 = vpop.f32.mrf.mxu0
        %964 = vdwg.mxu0
        %vm965 = vcmp.gt.f32.partialorder %v871, 0.0
        %vm966 = vcmp.gt.f32.partialorder %v884, 0.0
        %vm967 = vcmp.gt.f32.partialorder %v897, 0.0
        %vm968 = vcmp.gt.f32.partialorder %v910, 0.0
        %vm969 = vcmp.gt.f32.partialorder %v923, 0.0
        %vm970 = vcmp.gt.f32.partialorder %v936, 0.0
        %vm971 = vcmp.gt.f32.partialorder %v949, 0.0
        %vm972 = vcmp.gt.f32.partialorder %v962, 0.0
        %v973 = vmul.f32 %v871, 0.2
        %v974 = vmul.f32 %v884, 0.2
        %v975 = vmul.f32 %v897, 0.2
        %v976 = vmul.f32 %v910, 0.2
        %v977 = vmul.f32 %v923, 0.2
        %v978 = vmul.f32 %v936, 0.2
        %v979 = vmul.f32 %v949, 0.2
        %v980 = vmul.f32 %v962, 0.2
        %v981 = vsel %vm965, %v871, %v973
        %v982 = vsel %vm966, %v884, %v974
        %v983 = vsel %vm967, %v897, %v975
        %v984 = vsel %vm968, %v910, %v976
        %v985 = vsel %vm969, %v923, %v977
        %v986 = vsel %vm970, %v936, %v978
        %v987 = vsel %vm971, %v949, %v979
        %v988 = vsel %vm972, %v962, %v980
        %v989 = vld [vmem:[%s9] sm:$0xf]
        %v990 = vpack.c.bf16 %v981, %v981
        %v991 = vpack.c.bf16 %v982, %v982
        %v992 = vpack.c.bf16 %v983, %v983
        %v993 = vpack.c.bf16 %v984, %v984
        %v994 = vpack.c.bf16 %v985, %v985
        %v995 = vpack.c.bf16 %v986, %v986
        %v996 = vpack.c.bf16 %v987, %v987
        %v997 = vpack.c.bf16 %v988, %v988
        %v998 = vld [vmem:[%s10] sm:$0xff]
        %1000 = vset.pattern.permute.xlu0 0
        %1001 = vperm.xlu0 %1000, %v998
        %v1002 = vpop.permute.xlu0 %1001
        %v1005 = vsel %vm832, %v989, 0
        %v1008 = vsel %vm836, %v990, 0
        %v1011 = vsel %vm836, %v991, 0
        %v1014 = vsel %vm836, %v992, 0
        %v1017 = vsel %vm836, %v993, 0
        %v1020 = vsel %vm836, %v994, 0
        %v1023 = vsel %vm836, %v995, 0
        %v1026 = vsel %vm836, %v996, 0
        %v1029 = vsel %vm836, %v997, 0
        %1031 = vmatpush.bf16.msra.mxu0 0
        %1032 = vmatpush.bf16.msra.mxu0 0
        %1033 = vmatpush.bf16.msra.mxu0 0
        %1034 = vmatpush.bf16.msra.mxu0 0
        %1035 = vmatpush.bf16.msra.mxu0 0
        %1036 = vmatpush.bf16.msra.mxu0 0
        %1037 = vmatpush.bf16.msra.mxu0 0
        %1038 = vmatpush.bf16.msra.mxu0 %v1008
        %1039 = vmatmul.bf16.gmra.mxu0 %v1005
        %v1040 = vpop.f32.mrf.mxu0
        %v1041 = vadd.f32 %v1002, %v1040
        %v1042 = vpop.f32.mrf.mxu0
        %1043 = vdwg.mxu0
        %1044 = vmatpush.bf16.msra.mxu0 0
        %1045 = vmatpush.bf16.msra.mxu0 0
        %1046 = vmatpush.bf16.msra.mxu0 0
        %1047 = vmatpush.bf16.msra.mxu0 0
        %1048 = vmatpush.bf16.msra.mxu0 0
        %1049 = vmatpush.bf16.msra.mxu0 0
        %1050 = vmatpush.bf16.msra.mxu0 0
        %1051 = vmatpush.bf16.msra.mxu0 %v1011
        %1052 = vmatmul.bf16.gmra.mxu0 %v1005
        %v1053 = vpop.f32.mrf.mxu0
        %v1054 = vadd.f32 %v1002, %v1053
        %v1055 = vpop.f32.mrf.mxu0
        %1056 = vdwg.mxu0
        %1057 = vmatpush.bf16.msra.mxu0 0
        %1058 = vmatpush.bf16.msra.mxu0 0
        %1059 = vmatpush.bf16.msra.mxu0 0
        %1060 = vmatpush.bf16.msra.mxu0 0
        %1061 = vmatpush.bf16.msra.mxu0 0
        %1062 = vmatpush.bf16.msra.mxu0 0
        %1063 = vmatpush.bf16.msra.mxu0 0
        %1064 = vmatpush.bf16.msra.mxu0 %v1014
        %1065 = vmatmul.bf16.gmra.mxu0 %v1005
        %v1066 = vpop.f32.mrf.mxu0
        %v1067 = vadd.f32 %v1002, %v1066
        %v1068 = vpop.f32.mrf.mxu0
        %1069 = vdwg.mxu0
        %1070 = vmatpush.bf16.msra.mxu0 0
        %1071 = vmatpush.bf16.msra.mxu0 0
        %1072 = vmatpush.bf16.msra.mxu0 0
        %1073 = vmatpush.bf16.msra.mxu0 0
        %1074 = vmatpush.bf16.msra.mxu0 0
        %1075 = vmatpush.bf16.msra.mxu0 0
        %1076 = vmatpush.bf16.msra.mxu0 0
        %1077 = vmatpush.bf16.msra.mxu0 %v1017
        %1078 = vmatmul.bf16.gmra.mxu0 %v1005
        %v1079 = vpop.f32.mrf.mxu0
        %v1080 = vadd.f32 %v1002, %v1079
        %v1081 = vpop.f32.mrf.mxu0
        %1082 = vdwg.mxu0
        %1083 = vmatpush.bf16.msra.mxu0 0
        %1084 = vmatpush.bf16.msra.mxu0 0
        %1085 = vmatpush.bf16.msra.mxu0 0
        %1086 = vmatpush.bf16.msra.mxu0 0
        %1087 = vmatpush.bf16.msra.mxu0 0
        %1088 = vmatpush.bf16.msra.mxu0 0
        %1089 = vmatpush.bf16.msra.mxu0 0
        %1090 = vmatpush.bf16.msra.mxu0 %v1020
        %1091 = vmatmul.bf16.gmra.mxu0 %v1005
        %v1092 = vpop.f32.mrf.mxu0
        %v1093 = vadd.f32 %v1002, %v1092
        %v1094 = vpop.f32.mrf.mxu0
        %1095 = vdwg.mxu0
        %1096 = vmatpush.bf16.msra.mxu0 0
        %1097 = vmatpush.bf16.msra.mxu0 0
        %1098 = vmatpush.bf16.msra.mxu0 0
        %1099 = vmatpush.bf16.msra.mxu0 0
        %1100 = vmatpush.bf16.msra.mxu0 0
        %1101 = vmatpush.bf16.msra.mxu0 0
        %1102 = vmatpush.bf16.msra.mxu0 0
        %1103 = vmatpush.bf16.msra.mxu0 %v1023
        %1104 = vmatmul.bf16.gmra.mxu0 %v1005
        %v1105 = vpop.f32.mrf.mxu0
        %v1106 = vadd.f32 %v1002, %v1105
        %v1107 = vpop.f32.mrf.mxu0
        %1108 = vdwg.mxu0
        %1109 = vmatpush.bf16.msra.mxu0 0
        %1110 = vmatpush.bf16.msra.mxu0 0
        %1111 = vmatpush.bf16.msra.mxu0 0
        %1112 = vmatpush.bf16.msra.mxu0 0
        %1113 = vmatpush.bf16.msra.mxu0 0
        %1114 = vmatpush.bf16.msra.mxu0 0
        %1115 = vmatpush.bf16.msra.mxu0 0
        %1116 = vmatpush.bf16.msra.mxu0 %v1026
        %1117 = vmatmul.bf16.gmra.mxu0 %v1005
        %v1118 = vpop.f32.mrf.mxu0
        %v1119 = vadd.f32 %v1002, %v1118
        %v1120 = vpop.f32.mrf.mxu0
        %1121 = vdwg.mxu0
        %1122 = vmatpush.bf16.msra.mxu0 0
        %1123 = vmatpush.bf16.msra.mxu0 0
        %1124 = vmatpush.bf16.msra.mxu0 0
        %1125 = vmatpush.bf16.msra.mxu0 0
        %1126 = vmatpush.bf16.msra.mxu0 0
        %1127 = vmatpush.bf16.msra.mxu0 0
        %1128 = vmatpush.bf16.msra.mxu0 0
        %1129 = vmatpush.bf16.msra.mxu0 %v1029
        %1130 = vmatmul.bf16.gmra.mxu0 %v1005
        %v1131 = vpop.f32.mrf.mxu0
        %v1132 = vadd.f32 %v1002, %v1131
        %v1133 = vpop.f32.mrf.mxu0
        %1134 = vdwg.mxu0
        %vm1135 = vcmp.gt.f32.partialorder %v1041, 0.0
        %vm1136 = vcmp.gt.f32.partialorder %v1054, 0.0
        %vm1137 = vcmp.gt.f32.partialorder %v1067, 0.0
        %vm1138 = vcmp.gt.f32.partialorder %v1080, 0.0
        %vm1139 = vcmp.gt.f32.partialorder %v1093, 0.0
        %vm1140 = vcmp.gt.f32.partialorder %v1106, 0.0
        %vm1141 = vcmp.gt.f32.partialorder %v1119, 0.0
        %vm1142 = vcmp.gt.f32.partialorder %v1132, 0.0
        %v1143 = vmul.f32 %v1041, 0.2
        %v1144 = vmul.f32 %v1054, 0.2
        %v1145 = vmul.f32 %v1067, 0.2
        %v1146 = vmul.f32 %v1080, 0.2
        %v1147 = vmul.f32 %v1093, 0.2
        %v1148 = vmul.f32 %v1106, 0.2
        %v1149 = vmul.f32 %v1119, 0.2
        %v1150 = vmul.f32 %v1132, 0.2
        %v1151 = vsel %vm1135, %v1041, %v1143
        %v1152 = vsel %vm1136, %v1054, %v1144
        %v1153 = vsel %vm1137, %v1067, %v1145
        %v1154 = vsel %vm1138, %v1080, %v1146
        %v1155 = vsel %vm1139, %v1093, %v1147
        %v1156 = vsel %vm1140, %v1106, %v1148
        %v1157 = vsel %vm1141, %v1119, %v1149
        %v1158 = vsel %vm1142, %v1132, %v1150
        %v1159 = vadd.f32 %v1151, %v1152
        %v1160 = vadd.f32 %v1159, %v1153
        %v1161 = vadd.f32 %v1160, %v1154
        %v1162 = vadd.f32 %v1161, %v1155
        %v1163 = vadd.f32 %v1162, %v1156
        %v1164 = vadd.f32 %v1163, %v1157
        %v1165 = vadd.f32 %v1164, %v1158
        %v1166 = vmul.f32 %v1165, 0.125
        %v1167 = vpack.c.bf16 %v1166, %v1166
        %v1168 = vld [vmem:[%s11] sm:$0xf]
        %v1169 = vld [vmem:[%s11 + $0x4] sm:$0xf]
        %v1170 = vld [vmem:[%s11 + $0x8] sm:$0xf]
        %v1171 = vld [vmem:[%s11 + $0xc] sm:$0xf]
        %v1172 = vld [vmem:[%s12] sm:$0xff]
        %v1173 = vld [vmem:[%s12 + $0x8] sm:$0xff]
        %v1174 = vld [vmem:[%s12 + $0x10] sm:$0xff]
        %v1175 = vld [vmem:[%s12 + $0x18] sm:$0xff]
        %1177 = vset.pattern.permute.xlu0 0
        %1178 = vperm.xlu0 %1177, %v1172
        %v1179 = vpop.permute.xlu0 %1178
        %1182 = vset.pattern.permute.xlu0 0
        %1183 = vperm.xlu0 %1182, %v1173
        %v1184 = vpop.permute.xlu0 %1183
        %1187 = vset.pattern.permute.xlu0 0
        %1188 = vperm.xlu0 %1187, %v1174
        %v1189 = vpop.permute.xlu0 %1188
        %1192 = vset.pattern.permute.xlu0 0
        %1193 = vperm.xlu0 %1192, %v1175
        %v1194 = vpop.permute.xlu0 %1193
        %v1200 = vunpack.c.l.b16 %v1168
        %v1201 = vunpack.c.l.b16 %v1169
        %v1202 = vunpack.c.l.b16 %v1170
        %v1203 = vunpack.c.l.b16 %v1171
        %v1204 = vpack.c.b16 %v1201, %v1200
        %v1205 = vpack.c.b16 %v1203, %v1202
        %v1207 = vsel %vm832, %v1204, 0
        %v1210 = vsel %vm832, %v1205, 0
        %v1213 = vsel %vm836, %v1167, 0
        %1215 = vmatpush.bf16.msra.mxu0 0
        %1216 = vmatpush.bf16.msra.mxu0 0
        %1217 = vmatpush.bf16.msra.mxu0 0
        %1218 = vmatpush.bf16.msra.mxu0 0
        %1219 = vmatpush.bf16.msra.mxu0 0
        %1220 = vmatpush.bf16.msra.mxu0 0
        %1221 = vmatpush.bf16.msra.mxu0 0
        %1222 = vmatpush.bf16.msra.mxu0 %v1213
        %1223 = vmatmul.bf16.gmra.mxu0 %v1207
        %v1224 = vpop.f32.mrf.mxu0
        %v1225 = vadd.f32 %v1179, %v1224
        %v1226 = vpop.f32.mrf.mxu0
        %v1227 = vadd.f32 %v1184, %v1226
        %1228 = vmatmul.bf16.gmra.mxu0 %v1210
        %v1229 = vpop.f32.mrf.mxu0
        %v1230 = vadd.f32 %v1189, %v1229
        %v1231 = vpop.f32.mrf.mxu0
        %v1232 = vadd.f32 %v1194, %v1231
        %1233 = vdwg.mxu0
        %v1234 = vld [vmem:[%s13] sm:$0xf]
        %v1235 = vld [vmem:[%s13 + $0x4] sm:$0xf]
        %v1236 = vld [vmem:[%s13 + $0x8] sm:$0xf]
        %v1237 = vld [vmem:[%s13 + $0xc] sm:$0xf]
        %v1238 = vld [vmem:[%s521] sm:$0xf]
        %v1239 = vld [vmem:[%s521 + $0x4] sm:$0xf]
        %v1240 = vld [vmem:[%s14] sm:$0xff]
        %v1241 = vld [vmem:[%s14 + $0x8] sm:$0xff]
        %v1242 = vld [vmem:[%s14 + $0x10] sm:$0xff]
        %v1243 = vld [vmem:[%s14 + $0x18] sm:$0xff]
        %1245 = vset.pattern.permute.xlu0 0
        %1246 = vperm.xlu0 %1245, %v1240
        %v1247 = vpop.permute.xlu0 %1246
        %1250 = vset.pattern.permute.xlu0 0
        %1251 = vperm.xlu0 %1250, %v1241
        %v1252 = vpop.permute.xlu0 %1251
        %1255 = vset.pattern.permute.xlu0 0
        %1256 = vperm.xlu0 %1255, %v1242
        %v1257 = vpop.permute.xlu0 %1256
        %1260 = vset.pattern.permute.xlu0 0
        %1261 = vperm.xlu0 %1260, %v1243
        %v1262 = vpop.permute.xlu0 %1261
        %v1268 = vunpack.c.l.b16 %v1234
        %v1269 = vunpack.c.l.b16 %v1235
        %v1270 = vunpack.c.l.b16 %v1236
        %v1271 = vunpack.c.l.b16 %v1237
        %v1272 = vpack.c.b16 %v1269, %v1268
        %v1273 = vpack.c.b16 %v1271, %v1270
        %v1276 = vunpack.c.l.b16 %v1238
        %v1277 = vunpack.c.l.b16 %v1239
        %v1278 = vpack.c.b16 %v1277, %v1276
        %vm1280 = vcmask 130048
        %v1282 = vsel %vm1280, %v1272, 0
        %v1285 = vsel %vm1280, %v1273, 0
        %1287 = vmatpush.bf16.msra.mxu0 0
        %1288 = vmatpush.bf16.msra.mxu0 0
        %1289 = vmatpush.bf16.msra.mxu0 0
        %1290 = vmatpush.bf16.msra.mxu0 0
        %1291 = vmatpush.bf16.msra.mxu0 0
        %1292 = vmatpush.bf16.msra.mxu0 0
        %1293 = vmatpush.bf16.msra.mxu0 0
        %1294 = vmatpush.bf16.msra.mxu0 %v1278
        %1295 = vmatmul.bf16.gmra.mxu0 %v1282
        %v1296 = vpop.f32.mrf.mxu0
        %v1297 = vadd.f32 %v1247, %v1296
        %v1298 = vpop.f32.mrf.mxu0
        %v1299 = vadd.f32 %v1252, %v1298
        %1300 = vmatmul.bf16.gmra.mxu0 %v1285
        %v1301 = vpop.f32.mrf.mxu0
        %v1302 = vadd.f32 %v1257, %v1301
        %v1303 = vpop.f32.mrf.mxu0
        %v1304 = vadd.f32 %v1262, %v1303
        %1305 = vdwg.mxu0
        %v1306 = vadd.f32 %v1225, %v1297
        %v1307 = vadd.f32 %v1227, %v1299
        %v1308 = vadd.f32 %v1230, %v1302
        %v1309 = vadd.f32 %v1232, %v1304
        %vm1310 = vcmp.gt.f32.partialorder %v1306, 0.0
        %vm1311 = vcmp.gt.f32.partialorder %v1307, 0.0
        %vm1312 = vcmp.gt.f32.partialorder %v1308, 0.0
        %vm1313 = vcmp.gt.f32.partialorder %v1309, 0.0
        %v1314 = vmul.f32 %v1306, 0.2
        %v1315 = vmul.f32 %v1307, 0.2
        %v1316 = vmul.f32 %v1308, 0.2
        %v1317 = vmul.f32 %v1309, 0.2
        %v1318 = vsel %vm1310, %v1306, %v1314
        %v1319 = vsel %vm1311, %v1307, %v1315
        %v1320 = vsel %vm1312, %v1308, %v1316
        %v1321 = vsel %vm1313, %v1309, %v1317
        %1322 = vst [vmem:[%s578] sm:$0xff] %v1318
        %1323 = vst [vmem:[%s578 + $0x8] sm:$0xff] %v1319
        %1324 = vst [vmem:[%s578 + $0x10] sm:$0xff] %v1320
        %1325 = vst [vmem:[%s578 + $0x18] sm:$0xff] %v1321
        %s1326 = sand.u32 %s369, 1
        %s1327 = sand.u32 %s369, 1
        %s1328 = smul.addr %s1327, 32
        %s1329 = scalar_lea.vmem [#allocation3], %s1328
        // Predicated region
        $region122: #{cic_forward.5} parent=116 // pred_check
          %p1330 = pneg %p379
        $region123: #{cic_forward.5} parent=116 // pred_check_branch
          %1332 = sbr.rel (%p1330) target = $region125
        $region124: #{cic_forward.5} parent=116 // pred_region
          %s1333 = smul.addr %s26, 8
          %s1334 = scalar_lea.vmem %s15, %s1333
          // Predicated region
          $region126: #{cic_forward.5} parent=124 // pred_check
            _
          $region127: #{cic_forward.5} parent=124 // pred_check_branch
            %1336 = sbr.rel (0) target = $region129
          $region128: #{cic_forward.5} parent=124 // pred_region
            // Predicated region
            $region130: #{cic_forward.5} parent=128 // pred_check
              _
            $region131: #{cic_forward.5} parent=128 // pred_check_branch
              %1338 = sbr.rel (0) target = $region133
            $region132: #{cic_forward.5} parent=128 // pred_region
              // Predicated region
              $region145: #{cic_forward.5} parent=132 // pred_check
                _
              $region146: #{cic_forward.5} parent=132 // pred_check_branch
                %1360 = sbr.rel (0) target = $region148
              $region147: #{cic_forward.5} parent=132 // pred_region
                loop: start=0, step=1, limit=1
                $region149: #{cic_forward.5} parent=147 // loop_pre_header
                  _
                $region150: #{cic_forward.5} parent=147 // loop_header
                  %s1362 = sphi 0, %s1366
                  %p1363 = scmp.ge.s32.totalorder %s1362, 1
                  %s1367 = sphi %s1329, %s1329
                  %s1368 = sphi %s1334, %s1334
                $region151: #{cic_forward.5} parent=147 // loop_header_branch
                  %1365 = sbr.rel (%p1363) target = $region155
                $region152: #{cic_forward.5} parent=147 // loop_body
                  %v1369 = vld [vmem:[%s1367] sm:$0xff]
                  %1370 = vst [vmem:[%s1368] sm:$0xff] %v1369
                  %v1371 = vld [vmem:[%s1367 + $0x8] sm:$0xff]
                  %1372 = vst [vmem:[%s1368 + $0x20] sm:$0xff] %v1371
                  %v1373 = vld [vmem:[%s1367 + $0x10] sm:$0xff]
                  %1374 = vst [vmem:[%s1368 + $0x40] sm:$0xff] %v1373
                  %v1375 = vld [vmem:[%s1367 + $0x18] sm:$0xff]
                  %1376 = vst [vmem:[%s1368 + $0x60] sm:$0xff] %v1375
                $region153: #{cic_forward.5} parent=147 // loop_footer
                  %s1366 = sadd.s32 1, %s1362
                $region154: #{cic_forward.5} parent=147 // loop_footer_branch
                  %1361 = sbr.rel target = $region150
                $region155: #{cic_forward.5} parent=147 // loop_exit
                  _
              $region148: #{cic_forward.5} parent=132 // pred_fallthru
                _
              // Predicated region
              $region156: #{cic_forward.5} parent=132 // pred_check
                _
              $region157: #{cic_forward.5} parent=132 // pred_check_branch
                %1378 = sbr.rel target = $region159
              $region158: #{cic_forward.5} parent=132 // pred_region
                _
              $region159: #{cic_forward.5} parent=132 // pred_fallthru
                _
            $region133: #{cic_forward.5} parent=128 // pred_fallthru
              _
            // Predicated region
            $region134: #{cic_forward.5} parent=128 // pred_check
              _
            $region135: #{cic_forward.5} parent=128 // pred_check_branch
              %1340 = sbr.rel target = $region137
            $region136: #{cic_forward.5} parent=128 // pred_region
              %s1342 = ssub.s32 256, 1
              loop: start=0, step=1, limit=1
              $region138: #{cic_forward.5} parent=136 // loop_pre_header
                _
              $region139: #{cic_forward.5} parent=136 // loop_header
                %s1344 = sphi 0, %s1348
                %p1345 = scmp.ge.s32.totalorder %s1344, 1
                %s1349 = sphi %s1329, %s1329
                %s1350 = sphi %s1334, %s1334
              $region140: #{cic_forward.5} parent=136 // loop_header_branch
                %1347 = sbr.rel (%p1345) target = $region144
              $region141: #{cic_forward.5} parent=136 // loop_body
                %v1351 = vld [vmem:[%s1349] sm:%s1342]
                %1352 = vst [vmem:[%s1350] sm:%s1342] %v1351
                %v1353 = vld [vmem:[%s1349 + $0x8] sm:%s1342]
                %1354 = vst [vmem:[%s1350 + $0x20] sm:%s1342] %v1353
                %v1355 = vld [vmem:[%s1349 + $0x10] sm:%s1342]
                %1356 = vst [vmem:[%s1350 + $0x40] sm:%s1342] %v1355
                %v1357 = vld [vmem:[%s1349 + $0x18] sm:%s1342]
                %1358 = vst [vmem:[%s1350 + $0x60] sm:%s1342] %v1357
              $region142: #{cic_forward.5} parent=136 // loop_footer
                %s1348 = sadd.s32 1, %s1344
              $region143: #{cic_forward.5} parent=136 // loop_footer_branch
                %1343 = sbr.rel target = $region139
              $region144: #{cic_forward.5} parent=136 // loop_exit
                _
            $region137: #{cic_forward.5} parent=128 // pred_fallthru
              _
          $region129: #{cic_forward.5} parent=124 // pred_fallthru
            _
          %1379 = vnop
        $region125: #{cic_forward.5} parent=116 // pred_fallthru
          _
      $region117: #{cic_forward.5} parent=5 // pred_fallthru
        _
      %p1380 = scmp.le.s32.totalorder 2, %s21
      // Predicated region
      $region160: #{cic_forward.5} parent=5 // pred_check
        %p1381 = pneg %p1380
      $region161: #{cic_forward.5} parent=5 // pred_check_branch
        %1383 = sbr.rel (%p1381) target = $region163
      $region162: #{cic_forward.5} parent=5 // pred_region
        %s1384 = ssub.s32 %s21, 2
        // Predicated region
        $region164: #{cic_forward.5} parent=162 // pred_check
          %p1385 = pneg %p385
        $region165: #{cic_forward.5} parent=162 // pred_check_branch
          %1387 = sbr.rel (%p1385) target = $region167
        $region166: #{cic_forward.5} parent=162 // pred_region
          %s1388 = sand.u32 %s370, 1
          %s1389 = sand.u32 %s370, 1
          %s1390 = smul.addr %s1389, 32
          %s1391 = scalar_lea.vmem [#allocation3], %s1390
        $region167: #{cic_forward.5} parent=162 // pred_fallthru
          _
      $region163: #{cic_forward.5} parent=5 // pred_fallthru
        _
    $region6: #{cic_forward.5} parent=1 // loop_footer
      %s25 = sadd.s32 1, %s21
    $region7: #{cic_forward.5} parent=1 // loop_footer_branch
      %20 = sbr.rel target = $region3
    $region8: #{cic_forward.5} parent=1 // loop_exit
      _

</llo_original>
